<compile_context>
chip_gen: v7x
topology: tpu7x:2x2x1
jax: 0.10.0
libtpu: 0.0.40
codegen_flags: <defaults>
</compile_context>

<pallas_src>
import math

import jax
import jax.numpy as jnp
from jax import lax
from jax.experimental import pallas as pl
from jax.experimental.pallas import tpu as pltpu

# ----- small, module-consistent configuration -----
INPUT_DIM = 16
D_MODEL = 32
NUM_EXPERTS = 4
D_FF = 64
NHEAD = 4
HEAD_DIM = D_MODEL // NHEAD
NUM_LAYERS = 2
NUM_CLASSES = 8
B = 2
T = 8
BT = B * T
ED = NUM_EXPERTS * D_MODEL          # 128
QKV_PAD = 128                       # each of q/k/v in its own 128-lane block

assert B == 2  # the single cross-pair shift in attention assumes seq-len (batch dim) == 2

_VMEM = pl.BlockSpec(memory_space=pltpu.MemorySpace.VMEM)
_NT = (((1,), (1,)), ((), ()))      # A @ B.T contraction (MXU-native, no transpose op)


def _layernorm(z, g, b):
    """LayerNorm over the last dim, eps=1e-5 (PyTorch semantics)."""
    mean = jnp.mean(z, axis=-1, keepdims=True)
    var = jnp.mean(jnp.square(z - mean), axis=-1, keepdims=True)
    return (z - mean) * lax.rsqrt(var + 1e-5) * g + b


# ---------------------------------------------------------------------------
# Fused whole-model kernel
# ---------------------------------------------------------------------------
def _fused_model_kernel(
    x_ref,                                   # (B, 1, INPUT_DIM, T) raw input
    eye_t_ref,                               # (T, T) identity (MXU transpose helper)
    perm_ref,                                # (BT, BT) row permutation (b,t)->(t,b)
    emb_w_ref, emb_b_ref,                    # (IN, D), (1, D)
    w1g_ref, b1g_ref,                        # (L, D, 2*ED): experts fc1 | gate (padded)
    exp_w2_ref, exp_b2_ref,                  # (L, ED, ED) block-diag, (L, 1, ED)
    ln1_g_ref, ln1_b_ref,                    # (L, 1, D)
    wqkv_ref, bqkv_ref,                      # (L, D, 3*128), (L, 1, 3*128)
    outp_w_ref, outp_b_ref,                  # (L, 128, D), (L, 1, D)
    ln2_g_ref, ln2_b_ref,                    # (L, 1, D)
    ff_w1_ref, ff_b1_ref, ff_w2_ref, ff_b2_ref,
    ln3_g_ref, ln3_b_ref,                    # (L, 1, D)
    fc_w_ref, fc_b_ref,                      # (D, NUM_CLASSES), (1, NUM_CLASSES)
    gate_expand_ref,                         # (ED, ED)  rows<E: one-hot expert blocks
    gate_fold_ref,                           # (ED, D)   fold (sum experts)
    head_sum_ref,                            # (128, H)  per-head lane-sum, scale folded
    head_expand_ref,                         # (H, 128)  per-head scalar -> lanes
    o_ref,                                   # (BT, NUM_CLASSES) rows in (t, b) order
):
    # ---- input layout entirely in-kernel: (B,1,IN,T) -> rows (b*T+t, IN) ----
    x3 = x_ref[...].reshape(B, INPUT_DIM, T)                 # leading-dim reshape (free)
    eye_t = eye_t_ref[...]
    # x3[b].T via identity @ x3[b].T (transposed-RHS matmul; no transpose op emitted)
    xin = jnp.concatenate(
        [lax.dot_general(eye_t, x3[b], _NT, preferred_element_type=jnp.float32)
         for b in range(B)],
        axis=0)                                              # (BT, IN)
    h = jnp.dot(xin, emb_w_ref[...],
                preferred_element_type=jnp.float32) + emb_b_ref[...]      # (BT, D)

    gate_expand = gate_expand_ref[...]
    gate_fold = gate_fold_ref[...]
    head_sum = head_sum_ref[...]             # 1/sqrt(HEAD_DIM) already folded in
    head_expand = head_expand_ref[...]

    for layer in range(NUM_LAYERS):          # static unroll (NUM_LAYERS = 2)
        # ------------- MoE: experts fc1 + gate in ONE matmul, fc2 block-diag -------------
        h1g = jnp.dot(h, w1g_ref[layer],
                      preferred_element_type=jnp.float32) + b1g_ref[layer]   # (BT, 2*ED)
        h1 = jnp.maximum(h1g[:, :ED], 0.0)                                   # (BT, ED)
        eo = jnp.dot(h1, exp_w2_ref[layer],
                     preferred_element_type=jnp.float32) + exp_b2_ref[layer] # (BT, ED)
        glog = h1g[:, ED:]                   # (BT, ED); lanes >= NUM_EXPERTS are zero
        # torch softmax(dim=1) on (B, T, E): softmax over TIME within each batch.
        g3 = glog.reshape(B, T, ED)                                          # layout-free
        gm = jnp.max(g3, axis=1, keepdims=True)
        ge = jnp.exp(g3 - gm)
        gates = (ge * pl.reciprocal(jnp.sum(ge, axis=1, keepdims=True),
                                    approx=True)).reshape(BT, ED)
        # broadcast each gate over its expert's D lanes, weight, then fold experts.
        gates_b = jnp.dot(gates, gate_expand, preferred_element_type=jnp.float32)
        moe = jnp.dot(gates_b * eo, gate_fold, preferred_element_type=jnp.float32)
        h = _layernorm(h + moe, ln1_g_ref[layer], ln1_b_ref[layer])

        # ------- MHA (batch_first=False: dim0 = B is the sequence, dim1 = T batch) -------
        qkv = jnp.dot(h, wqkv_ref[layer],
                      preferred_element_type=jnp.float32) + bqkv_ref[layer]  # (BT, 384)
        q = qkv[:, 0:QKV_PAD]                # lanes 0:D real, rest zero (vreg-aligned)
        k = qkv[:, QKV_PAD:2 * QKV_PAD]
        v = qkv[:, 2 * QKV_PAD:3 * QKV_PAD]
        # cross-pair keys/values: the other batch index at the same t (B == 2)
        k_x = jnp.concatenate([k[T:], k[:T]], axis=0)
        v_x = jnp.concatenate([v[T:], v[:T]], axis=0)
        # all B*B pair scores with ONE matmul: stack same/cross products along sublanes
        prod = jnp.concatenate([q * k, q * k_x], axis=0)                     # (2*BT, 128)
        sc = jnp.dot(prod, head_sum, preferred_element_type=jnp.float32)     # (2*BT, H)
        s0 = sc[:BT]                         # pair (l=b, lp=b)
        s1 = sc[BT:]                         # pair (l=b, lp=1-b)
        m = jnp.maximum(s0, s1)
        e0 = jnp.exp(s0 - m)
        e1 = jnp.exp(s1 - m)
        inv = pl.reciprocal(e0 + e1, approx=True)
        p = jnp.concatenate([e0 * inv, e1 * inv], axis=0)                    # (2*BT, H)
        pe = jnp.dot(p, head_expand, preferred_element_type=jnp.float32)     # (2*BT, 128)
        attn = pe[:BT] * v + pe[BT:] * v_x                                   # (BT, 128)
        attn = jnp.dot(attn, outp_w_ref[layer],
                       preferred_element_type=jnp.float32) + outp_b_ref[layer]
        h = _layernorm(h + attn, ln2_g_ref[layer], ln2_b_ref[layer])

        # ---------------- feed-forward ----------------
        f = jnp.dot(h, ff_w1_ref[layer],
                    preferred_element_type=jnp.float32) + ff_b1_ref[layer]
        f = jnp.maximum(f, 0.0)
        f = jnp.dot(f, ff_w2_ref[layer],
                    preferred_element_type=jnp.float32) + ff_b2_ref[layer]
        h = _layernorm(h + f, ln3_g_ref[layer], ln3_b_ref[layer])

    # classifier + output row permutation (b,t) -> (t,b) done in-kernel, so the wrapper
    # needs only a free contiguous reshape (no extra XLA launch).
    hp = jnp.dot(perm_ref[...], h, preferred_element_type=jnp.float32)       # (BT, D)
    o_ref[...] = jnp.dot(hp, fc_w_ref[...],
                         preferred_element_type=jnp.float32) + fc_b_ref[...]


# ---------------------------------------------------------------------------
# Wrapper: ONE pallas_call, no surrounding XLA layout kernels
# ---------------------------------------------------------------------------
@jax.jit
def model_forward(x, params):
    out = pl.pallas_call(
        _fused_model_kernel,
        out_shape=jax.ShapeDtypeStruct((BT, NUM_CLASSES), jnp.float32),
        in_specs=[_VMEM] * (1 + len(params)),
        out_specs=_VMEM,
    )(x, *params)
    # rows already in (t, b) order -> contiguous (bitcast) reshape only
    return out.reshape(T, B, NUM_CLASSES)


# ---------------------------------------------------------------------------
# Deterministic parameter init in the fused layout (weights as (fan_in, fan_out))
# ---------------------------------------------------------------------------
def init_params(seed=0):
    key = jax.random.PRNGKey(seed)

    def nk():
        nonlocal key
        key, sub = jax.random.split(key)
        return sub

    def dense(fan_in, fan_out):
        w = jax.random.normal(nk(), (fan_in, fan_out), jnp.float32) * 0.05
        b = jax.random.normal(nk(), (fan_out,), jnp.float32) * 0.01
        return w, b

    emb_w, emb_b = dense(INPUT_DIM, D_MODEL)
    emb_b = emb_b.reshape(1, D_MODEL)

    w1g_l, b1g_l, exp_w2_l, exp_b2_l = [], [], [], []
    ln1_g_l, ln1_b_l, ln2_g_l, ln2_b_l, ln3_g_l, ln3_b_l = [], [], [], [], [], []
    wqkv_l, bqkv_l, outp_w_l, outp_b_l = [], [], [], []
    ff_w1_l, ff_b1_l, ff_w2_l, ff_b2_l = [], [], [], []

    for _ in range(NUM_LAYERS):
        # experts fc1 (lane-concatenated) + gate folded into one (D, 2*ED) weight
        w1s, b1s, w2s, b2s = [], [], [], []
        for _e in range(NUM_EXPERTS):
            w1, b1 = dense(D_MODEL, D_MODEL)
            w2, b2 = dense(D_MODEL, D_MODEL)
            w1s.append(w1); b1s.append(b1); w2s.append(w2); b2s.append(b2)
        gw, gb = dense(D_MODEL, NUM_EXPERTS)
        w1g = jnp.zeros((D_MODEL, 2 * ED), jnp.float32)
        w1g = w1g.at[:, :ED].set(jnp.concatenate(w1s, axis=1))
        w1g = w1g.at[:, ED:ED + NUM_EXPERTS].set(gw)
        b1g = jnp.zeros((1, 2 * ED), jnp.float32)
        b1g = b1g.at[0, :ED].set(jnp.concatenate(b1s))
        b1g = b1g.at[0, ED:ED + NUM_EXPERTS].set(gb)
        w1g_l.append(w1g); b1g_l.append(b1g)

        # expert fc2 as one block-diagonal (ED, ED) matmul
        bd = jnp.zeros((ED, ED), jnp.float32)
        for e, w2 in enumerate(w2s):
            bd = bd.at[e * D_MODEL:(e + 1) * D_MODEL,
                       e * D_MODEL:(e + 1) * D_MODEL].set(w2)
        exp_w2_l.append(bd)
        exp_b2_l.append(jnp.concatenate(b2s).reshape(1, ED))

        ln1_g_l.append(jnp.ones((1, D_MODEL), jnp.float32))
        ln1_b_l.append(jnp.zeros((1, D_MODEL), jnp.float32))

        # fused QKV: each projection in its own 128-lane block (vreg-aligned slices)
        wqkv = jnp.zeros((D_MODEL, 3 * QKV_PAD), jnp.float32)
        bqkv = jnp.zeros((1, 3 * QKV_PAD), jnp.float32)
        for j in range(3):
            w, b_ = dense(D_MODEL, D_MODEL)
            wqkv = wqkv.at[:, j * QKV_PAD:j * QKV_PAD + D_MODEL].set(w)
            bqkv = bqkv.at[0, j * QKV_PAD:j * QKV_PAD + D_MODEL].set(b_)
        wqkv_l.append(wqkv); bqkv_l.append(bqkv)

        ow, ob = dense(D_MODEL, D_MODEL)
        outp_w_l.append(jnp.zeros((QKV_PAD, D_MODEL), jnp.float32).at[:D_MODEL, :].set(ow))
        outp_b_l.append(ob.reshape(1, D_MODEL))

        ln2_g_l.append(jnp.ones((1, D_MODEL), jnp.float32))
        ln2_b_l.append(jnp.zeros((1, D_MODEL), jnp.float32))

        w1, b1 = dense(D_MODEL, D_FF)
        ff_w1_l.append(w1); ff_b1_l.append(b1.reshape(1, D_FF))
        w2, b2 = dense(D_FF, D_MODEL)
        ff_w2_l.append(w2); ff_b2_l.append(b2.reshape(1, D_MODEL))

        ln3_g_l.append(jnp.ones((1, D_MODEL), jnp.float32))
        ln3_b_l.append(jnp.zeros((1, D_MODEL), jnp.float32))

    fc_w, fc_b = dense(D_MODEL, NUM_CLASSES)
    fc_b = fc_b.reshape(1, NUM_CLASSES)

    # constant routing / layout matrices (built once on host, resident in VMEM)
    gate_expand = jnp.zeros((ED, ED), jnp.float32).at[:NUM_EXPERTS, :].set(
        jnp.repeat(jnp.eye(NUM_EXPERTS, dtype=jnp.float32), D_MODEL, axis=1))
    gate_fold = jnp.tile(jnp.eye(D_MODEL, dtype=jnp.float32), (NUM_EXPERTS, 1))
    head_sum = jnp.zeros((QKV_PAD, NHEAD), jnp.float32).at[:D_MODEL, :].set(
        jnp.repeat(jnp.eye(NHEAD, dtype=jnp.float32), HEAD_DIM, axis=0)
        * (1.0 / math.sqrt(HEAD_DIM)))                      # attention scale folded in
    head_expand = jnp.zeros((NHEAD, QKV_PAD), jnp.float32).at[:, :D_MODEL].set(
        jnp.repeat(jnp.eye(NHEAD, dtype=jnp.float32), HEAD_DIM, axis=1))
    eye_t = jnp.eye(T, dtype=jnp.float32)
    # output-row permutation: input row b*T+t -> output row t*B+b
    perm_rows = jnp.array([(i % B) * T + (i // B) for i in range(BT)], dtype=jnp.int32)
    perm_tb = jnp.eye(BT, dtype=jnp.float32)[perm_rows]

    params = (
        eye_t, perm_tb,
        emb_w, emb_b,
        jnp.stack(w1g_l), jnp.stack(b1g_l), jnp.stack(exp_w2_l), jnp.stack(exp_b2_l),
        jnp.stack(ln1_g_l), jnp.stack(ln1_b_l),
        jnp.stack(wqkv_l), jnp.stack(bqkv_l), jnp.stack(outp_w_l), jnp.stack(outp_b_l),
        jnp.stack(ln2_g_l), jnp.stack(ln2_b_l),
        jnp.stack(ff_w1_l), jnp.stack(ff_b1_l), jnp.stack(ff_w2_l), jnp.stack(ff_b2_l),
        jnp.stack(ln3_g_l), jnp.stack(ln3_b_l),
        fc_w, fc_b,
        gate_expand, gate_fold, head_sum, head_expand,
    )
    return params


if __name__ == "__main__":
    params = init_params(0)
    x = jax.random.normal(jax.random.PRNGKey(0), (B, 1, INPUT_DIM, T), jnp.float32)

    out = jax.block_until_ready(model_forward(x, params))

    assert out.shape == (T, B, NUM_CLASSES), out.shape
    assert bool(jnp.all(jnp.isfinite(out)))
    print("KERNEL_OK")
</pallas_src>

<mosaic_0001>
module attributes {stable_mosaic.version = 11 : i64} {
  func.func @_fused_model_kernel(%arg0: memref<2x1x16x8xf32, #tpu.memory_space<vmem>>, %arg1: memref<8x8xf32, #tpu.memory_space<vmem>>, %arg2: memref<16x16xf32, #tpu.memory_space<vmem>>, %arg3: memref<16x32xf32, #tpu.memory_space<vmem>>, %arg4: memref<1x32xf32, #tpu.memory_space<vmem>>, %arg5: memref<2x32x256xf32, #tpu.memory_space<vmem>>, %arg6: memref<2x1x256xf32, #tpu.memory_space<vmem>>, %arg7: memref<2x128x128xf32, #tpu.memory_space<vmem>>, %arg8: memref<2x1x128xf32, #tpu.memory_space<vmem>>, %arg9: memref<2x1x32xf32, #tpu.memory_space<vmem>>, %arg10: memref<2x1x32xf32, #tpu.memory_space<vmem>>, %arg11: memref<2x32x384xf32, #tpu.memory_space<vmem>>, %arg12: memref<2x1x384xf32, #tpu.memory_space<vmem>>, %arg13: memref<2x128x32xf32, #tpu.memory_space<vmem>>, %arg14: memref<2x1x32xf32, #tpu.memory_space<vmem>>, %arg15: memref<2x1x32xf32, #tpu.memory_space<vmem>>, %arg16: memref<2x1x32xf32, #tpu.memory_space<vmem>>, %arg17: memref<2x32x64xf32, #tpu.memory_space<vmem>>, %arg18: memref<2x1x64xf32, #tpu.memory_space<vmem>>, %arg19: memref<2x64x32xf32, #tpu.memory_space<vmem>>, %arg20: memref<2x1x32xf32, #tpu.memory_space<vmem>>, %arg21: memref<2x1x32xf32, #tpu.memory_space<vmem>>, %arg22: memref<2x1x32xf32, #tpu.memory_space<vmem>>, %arg23: memref<32x8xf32, #tpu.memory_space<vmem>>, %arg24: memref<1x8xf32, #tpu.memory_space<vmem>>, %arg25: memref<128x128xf32, #tpu.memory_space<vmem>>, %arg26: memref<128x32xf32, #tpu.memory_space<vmem>>, %arg27: memref<128x4xf32, #tpu.memory_space<vmem>>, %arg28: memref<4x128xf32, #tpu.memory_space<vmem>>, %arg29: memref<16x8xf32, #tpu.memory_space<vmem>>) attributes {dimension_semantics = [], scalar_prefetch = 0 : i64, scratch_operands = 0 : i64, tpu.core_type = #tpu.core_type<tc>} {
    %c0 = arith.constant 0 : index
    %c0_0 = arith.constant 0 : index
    %c0_1 = arith.constant 0 : index
    %c0_2 = arith.constant 0 : index
    %0 = vector.load %arg0[%c0, %c0_0, %c0_1, %c0_2] : memref<2x1x16x8xf32, #tpu.memory_space<vmem>>, vector<2x1x16x8xf32>
    %1 = vector.shape_cast %0 : vector<2x1x16x8xf32> to vector<2x16x8xf32>
    %c0_3 = arith.constant 0 : index
    %c0_4 = arith.constant 0 : index
    %2 = vector.load %arg1[%c0_3, %c0_4] : memref<8x8xf32, #tpu.memory_space<vmem>>, vector<8x8xf32>
    %3 = vector.extract_strided_slice %1 {offsets = [0, 0, 0], sizes = [1, 16, 8], strides = [1, 1, 1]} : vector<2x16x8xf32> to vector<1x16x8xf32>
    %4 = vector.shape_cast %3 : vector<1x16x8xf32> to vector<16x8xf32>
    %cst = arith.constant dense<0.000000e+00> : vector<8x16xf32>
    %5 = tpu.matmul %2, %4, %cst {dimension_numbers = #tpu.dot_dimension_numbers<[1], [1], [0], [0], [0, 0, 1, 0], [], []>} : vector<8x8xf32>, vector<16x8xf32>, vector<8x16xf32> -> vector<8x16xf32>
    %6 = vector.extract_strided_slice %1 {offsets = [1, 0, 0], sizes = [1, 16, 8], strides = [1, 1, 1]} : vector<2x16x8xf32> to vector<1x16x8xf32>
    %7 = vector.shape_cast %6 : vector<1x16x8xf32> to vector<16x8xf32>
    %cst_5 = arith.constant dense<0.000000e+00> : vector<8x16xf32>
    %8 = tpu.matmul %2, %7, %cst_5 {dimension_numbers = #tpu.dot_dimension_numbers<[1], [1], [0], [0], [0, 0, 1, 0], [], []>} : vector<8x8xf32>, vector<16x8xf32>, vector<8x16xf32> -> vector<8x16xf32>
    %9 = tpu.concatenate %5, %8 in 0 : vector<8x16xf32>, vector<8x16xf32> -> vector<16x16xf32>
    %c0_6 = arith.constant 0 : index
    %c0_7 = arith.constant 0 : index
    %10 = vector.load %arg3[%c0_6, %c0_7] : memref<16x32xf32, #tpu.memory_space<vmem>>, vector<16x32xf32>
    %cst_8 = arith.constant dense<0.000000e+00> : vector<16x32xf32>
    %11 = tpu.matmul %9, %10, %cst_8 {dimension_numbers = #tpu.dot_dimension_numbers<[1], [0], [0], [1], [0, 0, 1, 1], [], []>} : vector<16x16xf32>, vector<16x32xf32>, vector<16x32xf32> -> vector<16x32xf32>
    %c0_9 = arith.constant 0 : index
    %c0_10 = arith.constant 0 : index
    %12 = vector.load %arg4[%c0_9, %c0_10] : memref<1x32xf32, #tpu.memory_space<vmem>>, vector<1x32xf32>
    %13 = vector.broadcast %12 : vector<1x32xf32> to vector<16x32xf32>
    %14 = arith.addf %11, %13 : vector<16x32xf32>
    %c0_11 = arith.constant 0 : index
    %c0_12 = arith.constant 0 : index
    %15 = vector.load %arg25[%c0_11, %c0_12] : memref<128x128xf32, #tpu.memory_space<vmem>>, vector<128x128xf32>
    %c0_13 = arith.constant 0 : index
    %c0_14 = arith.constant 0 : index
    %16 = vector.load %arg26[%c0_13, %c0_14] : memref<128x32xf32, #tpu.memory_space<vmem>>, vector<128x32xf32>
    %c0_15 = arith.constant 0 : index
    %c0_16 = arith.constant 0 : index
    %17 = vector.load %arg27[%c0_15, %c0_16] : memref<128x4xf32, #tpu.memory_space<vmem>>, vector<128x4xf32>
    %c0_17 = arith.constant 0 : index
    %c0_18 = arith.constant 0 : index
    %18 = vector.load %arg28[%c0_17, %c0_18] : memref<4x128xf32, #tpu.memory_space<vmem>>, vector<4x128xf32>
    %c0_19 = arith.constant 0 : index
    %c0_20 = arith.constant 0 : index
    %c0_21 = arith.constant 0 : index
    %19 = vector.load %arg5[%c0_19, %c0_20, %c0_21] : memref<2x32x256xf32, #tpu.memory_space<vmem>>, vector<1x32x256xf32>
    %20 = vector.shape_cast %19 : vector<1x32x256xf32> to vector<32x256xf32>
    %cst_22 = arith.constant dense<0.000000e+00> : vector<16x256xf32>
    %21 = tpu.matmul %14, %20, %cst_22 {dimension_numbers = #tpu.dot_dimension_numbers<[1], [0], [0], [1], [0, 0, 1, 1], [], []>} : vector<16x32xf32>, vector<32x256xf32>, vector<16x256xf32> -> vector<16x256xf32>
    %c0_23 = arith.constant 0 : index
    %c0_24 = arith.constant 0 : index
    %c0_25 = arith.constant 0 : index
    %22 = vector.load %arg6[%c0_23, %c0_24, %c0_25] : memref<2x1x256xf32, #tpu.memory_space<vmem>>, vector<1x1x256xf32>
    %23 = vector.shape_cast %22 : vector<1x1x256xf32> to vector<1x256xf32>
    %24 = vector.broadcast %23 : vector<1x256xf32> to vector<16x256xf32>
    %25 = arith.addf %21, %24 : vector<16x256xf32>
    %26 = vector.extract_strided_slice %25 {offsets = [0, 0], sizes = [16, 128], strides = [1, 1]} : vector<16x256xf32> to vector<16x128xf32>
    %cst_26 = arith.constant 0.000000e+00 : f32
    %27 = vector.broadcast %cst_26 : f32 to vector<16x128xf32>
    %28 = arith.maximumf %26, %27 : vector<16x128xf32>
    %c0_27 = arith.constant 0 : index
    %c0_28 = arith.constant 0 : index
    %c0_29 = arith.constant 0 : index
    %29 = vector.load %arg7[%c0_27, %c0_28, %c0_29] : memref<2x128x128xf32, #tpu.memory_space<vmem>>, vector<1x128x128xf32>
    %30 = vector.shape_cast %29 : vector<1x128x128xf32> to vector<128x128xf32>
    %cst_30 = arith.constant dense<0.000000e+00> : vector<16x128xf32>
    %31 = tpu.matmul %28, %30, %cst_30 {dimension_numbers = #tpu.dot_dimension_numbers<[1], [0], [0], [1], [0, 0, 1, 1], [], []>} : vector<16x128xf32>, vector<128x128xf32>, vector<16x128xf32> -> vector<16x128xf32>
    %c0_31 = arith.constant 0 : index
    %c0_32 = arith.constant 0 : index
    %c0_33 = arith.constant 0 : index
    %32 = vector.load %arg8[%c0_31, %c0_32, %c0_33] : memref<2x1x128xf32, #tpu.memory_space<vmem>>, vector<1x1x128xf32>
    %33 = vector.shape_cast %32 : vector<1x1x128xf32> to vector<1x128xf32>
    %34 = vector.broadcast %33 : vector<1x128xf32> to vector<16x128xf32>
    %35 = arith.addf %31, %34 : vector<16x128xf32>
    %36 = vector.extract_strided_slice %25 {offsets = [0, 128], sizes = [16, 128], strides = [1, 1]} : vector<16x256xf32> to vector<16x128xf32>
    %37 = vector.shape_cast %36 : vector<16x128xf32> to vector<2x8x128xf32>
    %cst_34 = arith.constant dense<0xFF800000> : vector<2x128xf32>
    %38 = vector.multi_reduction <maximumf>, %37, %cst_34 [1] : vector<2x8x128xf32> to vector<2x128xf32>
    %39 = vector.shape_cast %38 : vector<2x128xf32> to vector<2x1x128xf32>
    %40 = vector.broadcast %39 : vector<2x1x128xf32> to vector<2x8x128xf32>
    %41 = arith.subf %37, %40 : vector<2x8x128xf32>
    %42 = math.exp %41 : vector<2x8x128xf32>
    %cst_35 = arith.constant dense<0.000000e+00> : vector<2x128xf32>
    %43 = vector.multi_reduction <add>, %42, %cst_35 [1] : vector<2x8x128xf32> to vector<2x128xf32>
    %44 = vector.shape_cast %43 : vector<2x128xf32> to vector<2x1x128xf32>
    %45 = tpu.reciprocal %44 {approx = true} : vector<2x1x128xf32> -> vector<2x1x128xf32>
    %46 = vector.broadcast %45 : vector<2x1x128xf32> to vector<2x8x128xf32>
    %47 = arith.mulf %42, %46 : vector<2x8x128xf32>
    %48 = vector.shape_cast %47 : vector<2x8x128xf32> to vector<16x128xf32>
    %cst_36 = arith.constant dense<0.000000e+00> : vector<16x128xf32>
    %49 = tpu.matmul %48, %15, %cst_36 {dimension_numbers = #tpu.dot_dimension_numbers<[1], [0], [0], [1], [0, 0, 1, 1], [], []>} : vector<16x128xf32>, vector<128x128xf32>, vector<16x128xf32> -> vector<16x128xf32>
    %50 = arith.mulf %49, %35 : vector<16x128xf32>
    %cst_37 = arith.constant dense<0.000000e+00> : vector<16x32xf32>
    %51 = tpu.matmul %50, %16, %cst_37 {dimension_numbers = #tpu.dot_dimension_numbers<[1], [0], [0], [1], [0, 0, 1, 1], [], []>} : vector<16x128xf32>, vector<128x32xf32>, vector<16x32xf32> -> vector<16x32xf32>
    %52 = arith.addf %14, %51 : vector<16x32xf32>
    %c0_38 = arith.constant 0 : index
    %c0_39 = arith.constant 0 : index
    %c0_40 = arith.constant 0 : index
    %53 = vector.load %arg9[%c0_38, %c0_39, %c0_40] : memref<2x1x32xf32, #tpu.memory_space<vmem>>, vector<1x1x32xf32>
    %54 = vector.shape_cast %53 : vector<1x1x32xf32> to vector<1x32xf32>
    %c0_41 = arith.constant 0 : index
    %c0_42 = arith.constant 0 : index
    %c0_43 = arith.constant 0 : index
    %55 = vector.load %arg10[%c0_41, %c0_42, %c0_43] : memref<2x1x32xf32, #tpu.memory_space<vmem>>, vector<1x1x32xf32>
    %56 = vector.shape_cast %55 : vector<1x1x32xf32> to vector<1x32xf32>
    %cst_44 = arith.constant dense<0.000000e+00> : vector<16xf32>
    %57 = vector.multi_reduction <add>, %52, %cst_44 [1] : vector<16x32xf32> to vector<16xf32>
    %58 = vector.shape_cast %57 : vector<16xf32> to vector<16x1xf32>
    %cst_45 = arith.constant 3.200000e+01 : f32
    %59 = vector.broadcast %cst_45 : f32 to vector<16x1xf32>
    %60 = arith.divf %58, %59 : vector<16x1xf32>
    %61 = vector.broadcast %60 : vector<16x1xf32> to vector<16x32xf32>
    %62 = arith.subf %52, %61 : vector<16x32xf32>
    %63 = arith.mulf %62, %62 : vector<16x32xf32>
    %cst_46 = arith.constant dense<0.000000e+00> : vector<16xf32>
    %64 = vector.multi_reduction <add>, %63, %cst_46 [1] : vector<16x32xf32> to vector<16xf32>
    %65 = vector.shape_cast %64 : vector<16xf32> to vector<16x1xf32>
    %cst_47 = arith.constant 3.200000e+01 : f32
    %66 = vector.broadcast %cst_47 : f32 to vector<16x1xf32>
    %67 = arith.divf %65, %66 : vector<16x1xf32>
    %68 = vector.broadcast %60 : vector<16x1xf32> to vector<16x32xf32>
    %69 = arith.subf %52, %68 : vector<16x32xf32>
    %cst_48 = arith.constant 9.99999974E-6 : f32
    %70 = vector.broadcast %cst_48 : f32 to vector<16x1xf32>
    %71 = arith.addf %67, %70 : vector<16x1xf32>
    %72 = math.rsqrt %71 : vector<16x1xf32>
    %73 = vector.broadcast %72 : vector<16x1xf32> to vector<16x32xf32>
    %74 = arith.mulf %69, %73 : vector<16x32xf32>
    %75 = vector.broadcast %54 : vector<1x32xf32> to vector<16x32xf32>
    %76 = arith.mulf %74, %75 : vector<16x32xf32>
    %77 = vector.broadcast %56 : vector<1x32xf32> to vector<16x32xf32>
    %78 = arith.addf %76, %77 : vector<16x32xf32>
    %c0_49 = arith.constant 0 : index
    %c0_50 = arith.constant 0 : index
    %c0_51 = arith.constant 0 : index
    %79 = vector.load %arg11[%c0_49, %c0_50, %c0_51] : memref<2x32x384xf32, #tpu.memory_space<vmem>>, vector<1x32x384xf32>
    %80 = vector.shape_cast %79 : vector<1x32x384xf32> to vector<32x384xf32>
    %cst_52 = arith.constant dense<0.000000e+00> : vector<16x384xf32>
    %81 = tpu.matmul %78, %80, %cst_52 {dimension_numbers = #tpu.dot_dimension_numbers<[1], [0], [0], [1], [0, 0, 1, 1], [], []>} : vector<16x32xf32>, vector<32x384xf32>, vector<16x384xf32> -> vector<16x384xf32>
    %c0_53 = arith.constant 0 : index
    %c0_54 = arith.constant 0 : index
    %c0_55 = arith.constant 0 : index
    %82 = vector.load %arg12[%c0_53, %c0_54, %c0_55] : memref<2x1x384xf32, #tpu.memory_space<vmem>>, vector<1x1x384xf32>
    %83 = vector.shape_cast %82 : vector<1x1x384xf32> to vector<1x384xf32>
    %84 = vector.broadcast %83 : vector<1x384xf32> to vector<16x384xf32>
    %85 = arith.addf %81, %84 : vector<16x384xf32>
    %86 = vector.extract_strided_slice %85 {offsets = [0, 0], sizes = [16, 128], strides = [1, 1]} : vector<16x384xf32> to vector<16x128xf32>
    %87 = vector.extract_strided_slice %85 {offsets = [0, 128], sizes = [16, 128], strides = [1, 1]} : vector<16x384xf32> to vector<16x128xf32>
    %88 = vector.extract_strided_slice %85 {offsets = [0, 256], sizes = [16, 128], strides = [1, 1]} : vector<16x384xf32> to vector<16x128xf32>
    %89 = vector.extract_strided_slice %87 {offsets = [8, 0], sizes = [8, 128], strides = [1, 1]} : vector<16x128xf32> to vector<8x128xf32>
    %90 = vector.extract_strided_slice %87 {offsets = [0, 0], sizes = [8, 128], strides = [1, 1]} : vector<16x128xf32> to vector<8x128xf32>
    %91 = tpu.concatenate %89, %90 in 0 : vector<8x128xf32>, vector<8x128xf32> -> vector<16x128xf32>
    %92 = vector.extract_strided_slice %88 {offsets = [8, 0], sizes = [8, 128], strides = [1, 1]} : vector<16x128xf32> to vector<8x128xf32>
    %93 = vector.extract_strided_slice %88 {offsets = [0, 0], sizes = [8, 128], strides = [1, 1]} : vector<16x128xf32> to vector<8x128xf32>
    %94 = tpu.concatenate %92, %93 in 0 : vector<8x128xf32>, vector<8x128xf32> -> vector<16x128xf32>
    %95 = arith.mulf %86, %87 : vector<16x128xf32>
    %96 = arith.mulf %86, %91 : vector<16x128xf32>
    %97 = tpu.concatenate %95, %96 in 0 : vector<16x128xf32>, vector<16x128xf32> -> vector<32x128xf32>
    %cst_56 = arith.constant dense<0.000000e+00> : vector<32x4xf32>
    %98 = tpu.matmul %97, %17, %cst_56 {dimension_numbers = #tpu.dot_dimension_numbers<[1], [0], [0], [1], [0, 0, 1, 1], [], []>} : vector<32x128xf32>, vector<128x4xf32>, vector<32x4xf32> -> vector<32x4xf32>
    %99 = vector.extract_strided_slice %98 {offsets = [0, 0], sizes = [16, 4], strides = [1, 1]} : vector<32x4xf32> to vector<16x4xf32>
    %100 = vector.extract_strided_slice %98 {offsets = [16, 0], sizes = [16, 4], strides = [1, 1]} : vector<32x4xf32> to vector<16x4xf32>
    %101 = arith.maximumf %99, %100 : vector<16x4xf32>
    %102 = arith.subf %99, %101 : vector<16x4xf32>
    %103 = math.exp %102 : vector<16x4xf32>
    %104 = arith.subf %100, %101 : vector<16x4xf32>
    %105 = math.exp %104 : vector<16x4xf32>
    %106 = arith.addf %103, %105 : vector<16x4xf32>
    %107 = tpu.reciprocal %106 {approx = true} : vector<16x4xf32> -> vector<16x4xf32>
    %108 = arith.mulf %103, %107 : vector<16x4xf32>
    %109 = arith.mulf %105, %107 : vector<16x4xf32>
    %110 = tpu.concatenate %108, %109 in 0 : vector<16x4xf32>, vector<16x4xf32> -> vector<32x4xf32>
    %cst_57 = arith.constant dense<0.000000e+00> : vector<32x128xf32>
    %111 = tpu.matmul %110, %18, %cst_57 {dimension_numbers = #tpu.dot_dimension_numbers<[1], [0], [0], [1], [0, 0, 1, 1], [], []>} : vector<32x4xf32>, vector<4x128xf32>, vector<32x128xf32> -> vector<32x128xf32>
    %112 = vector.extract_strided_slice %111 {offsets = [0, 0], sizes = [16, 128], strides = [1, 1]} : vector<32x128xf32> to vector<16x128xf32>
    %113 = arith.mulf %112, %88 : vector<16x128xf32>
    %114 = vector.extract_strided_slice %111 {offsets = [16, 0], sizes = [16, 128], strides = [1, 1]} : vector<32x128xf32> to vector<16x128xf32>
    %115 = arith.mulf %114, %94 : vector<16x128xf32>
    %116 = arith.addf %113, %115 : vector<16x128xf32>
    %c0_58 = arith.constant 0 : index
    %c0_59 = arith.constant 0 : index
    %c0_60 = arith.constant 0 : index
    %117 = vector.load %arg13[%c0_58, %c0_59, %c0_60] : memref<2x128x32xf32, #tpu.memory_space<vmem>>, vector<1x128x32xf32>
    %118 = vector.shape_cast %117 : vector<1x128x32xf32> to vector<128x32xf32>
    %cst_61 = arith.constant dense<0.000000e+00> : vector<16x32xf32>
    %119 = tpu.matmul %116, %118, %cst_61 {dimension_numbers = #tpu.dot_dimension_numbers<[1], [0], [0], [1], [0, 0, 1, 1], [], []>} : vector<16x128xf32>, vector<128x32xf32>, vector<16x32xf32> -> vector<16x32xf32>
    %c0_62 = arith.constant 0 : index
    %c0_63 = arith.constant 0 : index
    %c0_64 = arith.constant 0 : index
    %120 = vector.load %arg14[%c0_62, %c0_63, %c0_64] : memref<2x1x32xf32, #tpu.memory_space<vmem>>, vector<1x1x32xf32>
    %121 = vector.shape_cast %120 : vector<1x1x32xf32> to vector<1x32xf32>
    %122 = vector.broadcast %121 : vector<1x32xf32> to vector<16x32xf32>
    %123 = arith.addf %119, %122 : vector<16x32xf32>
    %124 = arith.addf %78, %123 : vector<16x32xf32>
    %c0_65 = arith.constant 0 : index
    %c0_66 = arith.constant 0 : index
    %c0_67 = arith.constant 0 : index
    %125 = vector.load %arg15[%c0_65, %c0_66, %c0_67] : memref<2x1x32xf32, #tpu.memory_space<vmem>>, vector<1x1x32xf32>
    %126 = vector.shape_cast %125 : vector<1x1x32xf32> to vector<1x32xf32>
    %c0_68 = arith.constant 0 : index
    %c0_69 = arith.constant 0 : index
    %c0_70 = arith.constant 0 : index
    %127 = vector.load %arg16[%c0_68, %c0_69, %c0_70] : memref<2x1x32xf32, #tpu.memory_space<vmem>>, vector<1x1x32xf32>
    %128 = vector.shape_cast %127 : vector<1x1x32xf32> to vector<1x32xf32>
    %cst_71 = arith.constant dense<0.000000e+00> : vector<16xf32>
    %129 = vector.multi_reduction <add>, %124, %cst_71 [1] : vector<16x32xf32> to vector<16xf32>
    %130 = vector.shape_cast %129 : vector<16xf32> to vector<16x1xf32>
    %cst_72 = arith.constant 3.200000e+01 : f32
    %131 = vector.broadcast %cst_72 : f32 to vector<16x1xf32>
    %132 = arith.divf %130, %131 : vector<16x1xf32>
    %133 = vector.broadcast %132 : vector<16x1xf32> to vector<16x32xf32>
    %134 = arith.subf %124, %133 : vector<16x32xf32>
    %135 = arith.mulf %134, %134 : vector<16x32xf32>
    %cst_73 = arith.constant dense<0.000000e+00> : vector<16xf32>
    %136 = vector.multi_reduction <add>, %135, %cst_73 [1] : vector<16x32xf32> to vector<16xf32>
    %137 = vector.shape_cast %136 : vector<16xf32> to vector<16x1xf32>
    %cst_74 = arith.constant 3.200000e+01 : f32
    %138 = vector.broadcast %cst_74 : f32 to vector<16x1xf32>
    %139 = arith.divf %137, %138 : vector<16x1xf32>
    %140 = vector.broadcast %132 : vector<16x1xf32> to vector<16x32xf32>
    %141 = arith.subf %124, %140 : vector<16x32xf32>
    %cst_75 = arith.constant 9.99999974E-6 : f32
    %142 = vector.broadcast %cst_75 : f32 to vector<16x1xf32>
    %143 = arith.addf %139, %142 : vector<16x1xf32>
    %144 = math.rsqrt %143 : vector<16x1xf32>
    %145 = vector.broadcast %144 : vector<16x1xf32> to vector<16x32xf32>
    %146 = arith.mulf %141, %145 : vector<16x32xf32>
    %147 = vector.broadcast %126 : vector<1x32xf32> to vector<16x32xf32>
    %148 = arith.mulf %146, %147 : vector<16x32xf32>
    %149 = vector.broadcast %128 : vector<1x32xf32> to vector<16x32xf32>
    %150 = arith.addf %148, %149 : vector<16x32xf32>
    %c0_76 = arith.constant 0 : index
    %c0_77 = arith.constant 0 : index
    %c0_78 = arith.constant 0 : index
    %151 = vector.load %arg17[%c0_76, %c0_77, %c0_78] : memref<2x32x64xf32, #tpu.memory_space<vmem>>, vector<1x32x64xf32>
    %152 = vector.shape_cast %151 : vector<1x32x64xf32> to vector<32x64xf32>
    %cst_79 = arith.constant dense<0.000000e+00> : vector<16x64xf32>
    %153 = tpu.matmul %150, %152, %cst_79 {dimension_numbers = #tpu.dot_dimension_numbers<[1], [0], [0], [1], [0, 0, 1, 1], [], []>} : vector<16x32xf32>, vector<32x64xf32>, vector<16x64xf32> -> vector<16x64xf32>
    %c0_80 = arith.constant 0 : index
    %c0_81 = arith.constant 0 : index
    %c0_82 = arith.constant 0 : index
    %154 = vector.load %arg18[%c0_80, %c0_81, %c0_82] : memref<2x1x64xf32, #tpu.memory_space<vmem>>, vector<1x1x64xf32>
    %155 = vector.shape_cast %154 : vector<1x1x64xf32> to vector<1x64xf32>
    %156 = vector.broadcast %155 : vector<1x64xf32> to vector<16x64xf32>
    %157 = arith.addf %153, %156 : vector<16x64xf32>
    %cst_83 = arith.constant 0.000000e+00 : f32
    %158 = vector.broadcast %cst_83 : f32 to vector<16x64xf32>
    %159 = arith.maximumf %157, %158 : vector<16x64xf32>
    %c0_84 = arith.constant 0 : index
    %c0_85 = arith.constant 0 : index
    %c0_86 = arith.constant 0 : index
    %160 = vector.load %arg19[%c0_84, %c0_85, %c0_86] : memref<2x64x32xf32, #tpu.memory_space<vmem>>, vector<1x64x32xf32>
    %161 = vector.shape_cast %160 : vector<1x64x32xf32> to vector<64x32xf32>
    %cst_87 = arith.constant dense<0.000000e+00> : vector<16x32xf32>
    %162 = tpu.matmul %159, %161, %cst_87 {dimension_numbers = #tpu.dot_dimension_numbers<[1], [0], [0], [1], [0, 0, 1, 1], [], []>} : vector<16x64xf32>, vector<64x32xf32>, vector<16x32xf32> -> vector<16x32xf32>
    %c0_88 = arith.constant 0 : index
    %c0_89 = arith.constant 0 : index
    %c0_90 = arith.constant 0 : index
    %163 = vector.load %arg20[%c0_88, %c0_89, %c0_90] : memref<2x1x32xf32, #tpu.memory_space<vmem>>, vector<1x1x32xf32>
    %164 = vector.shape_cast %163 : vector<1x1x32xf32> to vector<1x32xf32>
    %165 = vector.broadcast %164 : vector<1x32xf32> to vector<16x32xf32>
    %166 = arith.addf %162, %165 : vector<16x32xf32>
    %167 = arith.addf %150, %166 : vector<16x32xf32>
    %c0_91 = arith.constant 0 : index
    %c0_92 = arith.constant 0 : index
    %c0_93 = arith.constant 0 : index
    %168 = vector.load %arg21[%c0_91, %c0_92, %c0_93] : memref<2x1x32xf32, #tpu.memory_space<vmem>>, vector<1x1x32xf32>
    %169 = vector.shape_cast %168 : vector<1x1x32xf32> to vector<1x32xf32>
    %c0_94 = arith.constant 0 : index
    %c0_95 = arith.constant 0 : index
    %c0_96 = arith.constant 0 : index
    %170 = vector.load %arg22[%c0_94, %c0_95, %c0_96] : memref<2x1x32xf32, #tpu.memory_space<vmem>>, vector<1x1x32xf32>
    %171 = vector.shape_cast %170 : vector<1x1x32xf32> to vector<1x32xf32>
    %cst_97 = arith.constant dense<0.000000e+00> : vector<16xf32>
    %172 = vector.multi_reduction <add>, %167, %cst_97 [1] : vector<16x32xf32> to vector<16xf32>
    %173 = vector.shape_cast %172 : vector<16xf32> to vector<16x1xf32>
    %cst_98 = arith.constant 3.200000e+01 : f32
    %174 = vector.broadcast %cst_98 : f32 to vector<16x1xf32>
    %175 = arith.divf %173, %174 : vector<16x1xf32>
    %176 = vector.broadcast %175 : vector<16x1xf32> to vector<16x32xf32>
    %177 = arith.subf %167, %176 : vector<16x32xf32>
    %178 = arith.mulf %177, %177 : vector<16x32xf32>
    %cst_99 = arith.constant dense<0.000000e+00> : vector<16xf32>
    %179 = vector.multi_reduction <add>, %178, %cst_99 [1] : vector<16x32xf32> to vector<16xf32>
    %180 = vector.shape_cast %179 : vector<16xf32> to vector<16x1xf32>
    %cst_100 = arith.constant 3.200000e+01 : f32
    %181 = vector.broadcast %cst_100 : f32 to vector<16x1xf32>
    %182 = arith.divf %180, %181 : vector<16x1xf32>
    %183 = vector.broadcast %175 : vector<16x1xf32> to vector<16x32xf32>
    %184 = arith.subf %167, %183 : vector<16x32xf32>
    %cst_101 = arith.constant 9.99999974E-6 : f32
    %185 = vector.broadcast %cst_101 : f32 to vector<16x1xf32>
    %186 = arith.addf %182, %185 : vector<16x1xf32>
    %187 = math.rsqrt %186 : vector<16x1xf32>
    %188 = vector.broadcast %187 : vector<16x1xf32> to vector<16x32xf32>
    %189 = arith.mulf %184, %188 : vector<16x32xf32>
    %190 = vector.broadcast %169 : vector<1x32xf32> to vector<16x32xf32>
    %191 = arith.mulf %189, %190 : vector<16x32xf32>
    %192 = vector.broadcast %171 : vector<1x32xf32> to vector<16x32xf32>
    %193 = arith.addf %191, %192 : vector<16x32xf32>
    %c1 = arith.constant 1 : index
    %c0_102 = arith.constant 0 : index
    %c0_103 = arith.constant 0 : index
    %194 = vector.load %arg5[%c1, %c0_102, %c0_103] : memref<2x32x256xf32, #tpu.memory_space<vmem>>, vector<1x32x256xf32>
    %195 = vector.shape_cast %194 : vector<1x32x256xf32> to vector<32x256xf32>
    %cst_104 = arith.constant dense<0.000000e+00> : vector<16x256xf32>
    %196 = tpu.matmul %193, %195, %cst_104 {dimension_numbers = #tpu.dot_dimension_numbers<[1], [0], [0], [1], [0, 0, 1, 1], [], []>} : vector<16x32xf32>, vector<32x256xf32>, vector<16x256xf32> -> vector<16x256xf32>
    %c1_105 = arith.constant 1 : index
    %c0_106 = arith.constant 0 : index
    %c0_107 = arith.constant 0 : index
    %197 = vector.load %arg6[%c1_105, %c0_106, %c0_107] : memref<2x1x256xf32, #tpu.memory_space<vmem>>, vector<1x1x256xf32>
    %198 = vector.shape_cast %197 : vector<1x1x256xf32> to vector<1x256xf32>
    %199 = vector.broadcast %198 : vector<1x256xf32> to vector<16x256xf32>
    %200 = arith.addf %196, %199 : vector<16x256xf32>
    %201 = vector.extract_strided_slice %200 {offsets = [0, 0], sizes = [16, 128], strides = [1, 1]} : vector<16x256xf32> to vector<16x128xf32>
    %cst_108 = arith.constant 0.000000e+00 : f32
    %202 = vector.broadcast %cst_108 : f32 to vector<16x128xf32>
    %203 = arith.maximumf %201, %202 : vector<16x128xf32>
    %c1_109 = arith.constant 1 : index
    %c0_110 = arith.constant 0 : index
    %c0_111 = arith.constant 0 : index
    %204 = vector.load %arg7[%c1_109, %c0_110, %c0_111] : memref<2x128x128xf32, #tpu.memory_space<vmem>>, vector<1x128x128xf32>
    %205 = vector.shape_cast %204 : vector<1x128x128xf32> to vector<128x128xf32>
    %cst_112 = arith.constant dense<0.000000e+00> : vector<16x128xf32>
    %206 = tpu.matmul %203, %205, %cst_112 {dimension_numbers = #tpu.dot_dimension_numbers<[1], [0], [0], [1], [0, 0, 1, 1], [], []>} : vector<16x128xf32>, vector<128x128xf32>, vector<16x128xf32> -> vector<16x128xf32>
    %c1_113 = arith.constant 1 : index
    %c0_114 = arith.constant 0 : index
    %c0_115 = arith.constant 0 : index
    %207 = vector.load %arg8[%c1_113, %c0_114, %c0_115] : memref<2x1x128xf32, #tpu.memory_space<vmem>>, vector<1x1x128xf32>
    %208 = vector.shape_cast %207 : vector<1x1x128xf32> to vector<1x128xf32>
    %209 = vector.broadcast %208 : vector<1x128xf32> to vector<16x128xf32>
    %210 = arith.addf %206, %209 : vector<16x128xf32>
    %211 = vector.extract_strided_slice %200 {offsets = [0, 128], sizes = [16, 128], strides = [1, 1]} : vector<16x256xf32> to vector<16x128xf32>
    %212 = vector.shape_cast %211 : vector<16x128xf32> to vector<2x8x128xf32>
    %cst_116 = arith.constant dense<0xFF800000> : vector<2x128xf32>
    %213 = vector.multi_reduction <maximumf>, %212, %cst_116 [1] : vector<2x8x128xf32> to vector<2x128xf32>
    %214 = vector.shape_cast %213 : vector<2x128xf32> to vector<2x1x128xf32>
    %215 = vector.broadcast %214 : vector<2x1x128xf32> to vector<2x8x128xf32>
    %216 = arith.subf %212, %215 : vector<2x8x128xf32>
    %217 = math.exp %216 : vector<2x8x128xf32>
    %cst_117 = arith.constant dense<0.000000e+00> : vector<2x128xf32>
    %218 = vector.multi_reduction <add>, %217, %cst_117 [1] : vector<2x8x128xf32> to vector<2x128xf32>
    %219 = vector.shape_cast %218 : vector<2x128xf32> to vector<2x1x128xf32>
    %220 = tpu.reciprocal %219 {approx = true} : vector<2x1x128xf32> -> vector<2x1x128xf32>
    %221 = vector.broadcast %220 : vector<2x1x128xf32> to vector<2x8x128xf32>
    %222 = arith.mulf %217, %221 : vector<2x8x128xf32>
    %223 = vector.shape_cast %222 : vector<2x8x128xf32> to vector<16x128xf32>
    %cst_118 = arith.constant dense<0.000000e+00> : vector<16x128xf32>
    %224 = tpu.matmul %223, %15, %cst_118 {dimension_numbers = #tpu.dot_dimension_numbers<[1], [0], [0], [1], [0, 0, 1, 1], [], []>} : vector<16x128xf32>, vector<128x128xf32>, vector<16x128xf32> -> vector<16x128xf32>
    %225 = arith.mulf %224, %210 : vector<16x128xf32>
    %cst_119 = arith.constant dense<0.000000e+00> : vector<16x32xf32>
    %226 = tpu.matmul %225, %16, %cst_119 {dimension_numbers = #tpu.dot_dimension_numbers<[1], [0], [0], [1], [0, 0, 1, 1], [], []>} : vector<16x128xf32>, vector<128x32xf32>, vector<16x32xf32> -> vector<16x32xf32>
    %227 = arith.addf %193, %226 : vector<16x32xf32>
    %c1_120 = arith.constant 1 : index
    %c0_121 = arith.constant 0 : index
    %c0_122 = arith.constant 0 : index
    %228 = vector.load %arg9[%c1_120, %c0_121, %c0_122] : memref<2x1x32xf32, #tpu.memory_space<vmem>>, vector<1x1x32xf32>
    %229 = vector.shape_cast %228 : vector<1x1x32xf32> to vector<1x32xf32>
    %c1_123 = arith.constant 1 : index
    %c0_124 = arith.constant 0 : index
    %c0_125 = arith.constant 0 : index
    %230 = vector.load %arg10[%c1_123, %c0_124, %c0_125] : memref<2x1x32xf32, #tpu.memory_space<vmem>>, vector<1x1x32xf32>
    %231 = vector.shape_cast %230 : vector<1x1x32xf32> to vector<1x32xf32>
    %cst_126 = arith.constant dense<0.000000e+00> : vector<16xf32>
    %232 = vector.multi_reduction <add>, %227, %cst_126 [1] : vector<16x32xf32> to vector<16xf32>
    %233 = vector.shape_cast %232 : vector<16xf32> to vector<16x1xf32>
    %cst_127 = arith.constant 3.200000e+01 : f32
    %234 = vector.broadcast %cst_127 : f32 to vector<16x1xf32>
    %235 = arith.divf %233, %234 : vector<16x1xf32>
    %236 = vector.broadcast %235 : vector<16x1xf32> to vector<16x32xf32>
    %237 = arith.subf %227, %236 : vector<16x32xf32>
    %238 = arith.mulf %237, %237 : vector<16x32xf32>
    %cst_128 = arith.constant dense<0.000000e+00> : vector<16xf32>
    %239 = vector.multi_reduction <add>, %238, %cst_128 [1] : vector<16x32xf32> to vector<16xf32>
    %240 = vector.shape_cast %239 : vector<16xf32> to vector<16x1xf32>
    %cst_129 = arith.constant 3.200000e+01 : f32
    %241 = vector.broadcast %cst_129 : f32 to vector<16x1xf32>
    %242 = arith.divf %240, %241 : vector<16x1xf32>
    %243 = vector.broadcast %235 : vector<16x1xf32> to vector<16x32xf32>
    %244 = arith.subf %227, %243 : vector<16x32xf32>
    %cst_130 = arith.constant 9.99999974E-6 : f32
    %245 = vector.broadcast %cst_130 : f32 to vector<16x1xf32>
    %246 = arith.addf %242, %245 : vector<16x1xf32>
    %247 = math.rsqrt %246 : vector<16x1xf32>
    %248 = vector.broadcast %247 : vector<16x1xf32> to vector<16x32xf32>
    %249 = arith.mulf %244, %248 : vector<16x32xf32>
    %250 = vector.broadcast %229 : vector<1x32xf32> to vector<16x32xf32>
    %251 = arith.mulf %249, %250 : vector<16x32xf32>
    %252 = vector.broadcast %231 : vector<1x32xf32> to vector<16x32xf32>
    %253 = arith.addf %251, %252 : vector<16x32xf32>
    %c1_131 = arith.constant 1 : index
    %c0_132 = arith.constant 0 : index
    %c0_133 = arith.constant 0 : index
    %254 = vector.load %arg11[%c1_131, %c0_132, %c0_133] : memref<2x32x384xf32, #tpu.memory_space<vmem>>, vector<1x32x384xf32>
    %255 = vector.shape_cast %254 : vector<1x32x384xf32> to vector<32x384xf32>
    %cst_134 = arith.constant dense<0.000000e+00> : vector<16x384xf32>
    %256 = tpu.matmul %253, %255, %cst_134 {dimension_numbers = #tpu.dot_dimension_numbers<[1], [0], [0], [1], [0, 0, 1, 1], [], []>} : vector<16x32xf32>, vector<32x384xf32>, vector<16x384xf32> -> vector<16x384xf32>
    %c1_135 = arith.constant 1 : index
    %c0_136 = arith.constant 0 : index
    %c0_137 = arith.constant 0 : index
    %257 = vector.load %arg12[%c1_135, %c0_136, %c0_137] : memref<2x1x384xf32, #tpu.memory_space<vmem>>, vector<1x1x384xf32>
    %258 = vector.shape_cast %257 : vector<1x1x384xf32> to vector<1x384xf32>
    %259 = vector.broadcast %258 : vector<1x384xf32> to vector<16x384xf32>
    %260 = arith.addf %256, %259 : vector<16x384xf32>
    %261 = vector.extract_strided_slice %260 {offsets = [0, 0], sizes = [16, 128], strides = [1, 1]} : vector<16x384xf32> to vector<16x128xf32>
    %262 = vector.extract_strided_slice %260 {offsets = [0, 128], sizes = [16, 128], strides = [1, 1]} : vector<16x384xf32> to vector<16x128xf32>
    %263 = vector.extract_strided_slice %260 {offsets = [0, 256], sizes = [16, 128], strides = [1, 1]} : vector<16x384xf32> to vector<16x128xf32>
    %264 = vector.extract_strided_slice %262 {offsets = [8, 0], sizes = [8, 128], strides = [1, 1]} : vector<16x128xf32> to vector<8x128xf32>
    %265 = vector.extract_strided_slice %262 {offsets = [0, 0], sizes = [8, 128], strides = [1, 1]} : vector<16x128xf32> to vector<8x128xf32>
    %266 = tpu.concatenate %264, %265 in 0 : vector<8x128xf32>, vector<8x128xf32> -> vector<16x128xf32>
    %267 = vector.extract_strided_slice %263 {offsets = [8, 0], sizes = [8, 128], strides = [1, 1]} : vector<16x128xf32> to vector<8x128xf32>
    %268 = vector.extract_strided_slice %263 {offsets = [0, 0], sizes = [8, 128], strides = [1, 1]} : vector<16x128xf32> to vector<8x128xf32>
    %269 = tpu.concatenate %267, %268 in 0 : vector<8x128xf32>, vector<8x128xf32> -> vector<16x128xf32>
    %270 = arith.mulf %261, %262 : vector<16x128xf32>
    %271 = arith.mulf %261, %266 : vector<16x128xf32>
    %272 = tpu.concatenate %270, %271 in 0 : vector<16x128xf32>, vector<16x128xf32> -> vector<32x128xf32>
    %cst_138 = arith.constant dense<0.000000e+00> : vector<32x4xf32>
    %273 = tpu.matmul %272, %17, %cst_138 {dimension_numbers = #tpu.dot_dimension_numbers<[1], [0], [0], [1], [0, 0, 1, 1], [], []>} : vector<32x128xf32>, vector<128x4xf32>, vector<32x4xf32> -> vector<32x4xf32>
    %274 = vector.extract_strided_slice %273 {offsets = [0, 0], sizes = [16, 4], strides = [1, 1]} : vector<32x4xf32> to vector<16x4xf32>
    %275 = vector.extract_strided_slice %273 {offsets = [16, 0], sizes = [16, 4], strides = [1, 1]} : vector<32x4xf32> to vector<16x4xf32>
    %276 = arith.maximumf %274, %275 : vector<16x4xf32>
    %277 = arith.subf %274, %276 : vector<16x4xf32>
    %278 = math.exp %277 : vector<16x4xf32>
    %279 = arith.subf %275, %276 : vector<16x4xf32>
    %280 = math.exp %279 : vector<16x4xf32>
    %281 = arith.addf %278, %280 : vector<16x4xf32>
    %282 = tpu.reciprocal %281 {approx = true} : vector<16x4xf32> -> vector<16x4xf32>
    %283 = arith.mulf %278, %282 : vector<16x4xf32>
    %284 = arith.mulf %280, %282 : vector<16x4xf32>
    %285 = tpu.concatenate %283, %284 in 0 : vector<16x4xf32>, vector<16x4xf32> -> vector<32x4xf32>
    %cst_139 = arith.constant dense<0.000000e+00> : vector<32x128xf32>
    %286 = tpu.matmul %285, %18, %cst_139 {dimension_numbers = #tpu.dot_dimension_numbers<[1], [0], [0], [1], [0, 0, 1, 1], [], []>} : vector<32x4xf32>, vector<4x128xf32>, vector<32x128xf32> -> vector<32x128xf32>
    %287 = vector.extract_strided_slice %286 {offsets = [0, 0], sizes = [16, 128], strides = [1, 1]} : vector<32x128xf32> to vector<16x128xf32>
    %288 = arith.mulf %287, %263 : vector<16x128xf32>
    %289 = vector.extract_strided_slice %286 {offsets = [16, 0], sizes = [16, 128], strides = [1, 1]} : vector<32x128xf32> to vector<16x128xf32>
    %290 = arith.mulf %289, %269 : vector<16x128xf32>
    %291 = arith.addf %288, %290 : vector<16x128xf32>
    %c1_140 = arith.constant 1 : index
    %c0_141 = arith.constant 0 : index
    %c0_142 = arith.constant 0 : index
    %292 = vector.load %arg13[%c1_140, %c0_141, %c0_142] : memref<2x128x32xf32, #tpu.memory_space<vmem>>, vector<1x128x32xf32>
    %293 = vector.shape_cast %292 : vector<1x128x32xf32> to vector<128x32xf32>
    %cst_143 = arith.constant dense<0.000000e+00> : vector<16x32xf32>
    %294 = tpu.matmul %291, %293, %cst_143 {dimension_numbers = #tpu.dot_dimension_numbers<[1], [0], [0], [1], [0, 0, 1, 1], [], []>} : vector<16x128xf32>, vector<128x32xf32>, vector<16x32xf32> -> vector<16x32xf32>
    %c1_144 = arith.constant 1 : index
    %c0_145 = arith.constant 0 : index
    %c0_146 = arith.constant 0 : index
    %295 = vector.load %arg14[%c1_144, %c0_145, %c0_146] : memref<2x1x32xf32, #tpu.memory_space<vmem>>, vector<1x1x32xf32>
    %296 = vector.shape_cast %295 : vector<1x1x32xf32> to vector<1x32xf32>
    %297 = vector.broadcast %296 : vector<1x32xf32> to vector<16x32xf32>
    %298 = arith.addf %294, %297 : vector<16x32xf32>
    %299 = arith.addf %253, %298 : vector<16x32xf32>
    %c1_147 = arith.constant 1 : index
    %c0_148 = arith.constant 0 : index
    %c0_149 = arith.constant 0 : index
    %300 = vector.load %arg15[%c1_147, %c0_148, %c0_149] : memref<2x1x32xf32, #tpu.memory_space<vmem>>, vector<1x1x32xf32>
    %301 = vector.shape_cast %300 : vector<1x1x32xf32> to vector<1x32xf32>
    %c1_150 = arith.constant 1 : index
    %c0_151 = arith.constant 0 : index
    %c0_152 = arith.constant 0 : index
    %302 = vector.load %arg16[%c1_150, %c0_151, %c0_152] : memref<2x1x32xf32, #tpu.memory_space<vmem>>, vector<1x1x32xf32>
    %303 = vector.shape_cast %302 : vector<1x1x32xf32> to vector<1x32xf32>
    %cst_153 = arith.constant dense<0.000000e+00> : vector<16xf32>
    %304 = vector.multi_reduction <add>, %299, %cst_153 [1] : vector<16x32xf32> to vector<16xf32>
    %305 = vector.shape_cast %304 : vector<16xf32> to vector<16x1xf32>
    %cst_154 = arith.constant 3.200000e+01 : f32
    %306 = vector.broadcast %cst_154 : f32 to vector<16x1xf32>
    %307 = arith.divf %305, %306 : vector<16x1xf32>
    %308 = vector.broadcast %307 : vector<16x1xf32> to vector<16x32xf32>
    %309 = arith.subf %299, %308 : vector<16x32xf32>
    %310 = arith.mulf %309, %309 : vector<16x32xf32>
    %cst_155 = arith.constant dense<0.000000e+00> : vector<16xf32>
    %311 = vector.multi_reduction <add>, %310, %cst_155 [1] : vector<16x32xf32> to vector<16xf32>
    %312 = vector.shape_cast %311 : vector<16xf32> to vector<16x1xf32>
    %cst_156 = arith.constant 3.200000e+01 : f32
    %313 = vector.broadcast %cst_156 : f32 to vector<16x1xf32>
    %314 = arith.divf %312, %313 : vector<16x1xf32>
    %315 = vector.broadcast %307 : vector<16x1xf32> to vector<16x32xf32>
    %316 = arith.subf %299, %315 : vector<16x32xf32>
    %cst_157 = arith.constant 9.99999974E-6 : f32
    %317 = vector.broadcast %cst_157 : f32 to vector<16x1xf32>
    %318 = arith.addf %314, %317 : vector<16x1xf32>
    %319 = math.rsqrt %318 : vector<16x1xf32>
    %320 = vector.broadcast %319 : vector<16x1xf32> to vector<16x32xf32>
    %321 = arith.mulf %316, %320 : vector<16x32xf32>
    %322 = vector.broadcast %301 : vector<1x32xf32> to vector<16x32xf32>
    %323 = arith.mulf %321, %322 : vector<16x32xf32>
    %324 = vector.broadcast %303 : vector<1x32xf32> to vector<16x32xf32>
    %325 = arith.addf %323, %324 : vector<16x32xf32>
    %c1_158 = arith.constant 1 : index
    %c0_159 = arith.constant 0 : index
    %c0_160 = arith.constant 0 : index
    %326 = vector.load %arg17[%c1_158, %c0_159, %c0_160] : memref<2x32x64xf32, #tpu.memory_space<vmem>>, vector<1x32x64xf32>
    %327 = vector.shape_cast %326 : vector<1x32x64xf32> to vector<32x64xf32>
    %cst_161 = arith.constant dense<0.000000e+00> : vector<16x64xf32>
    %328 = tpu.matmul %325, %327, %cst_161 {dimension_numbers = #tpu.dot_dimension_numbers<[1], [0], [0], [1], [0, 0, 1, 1], [], []>} : vector<16x32xf32>, vector<32x64xf32>, vector<16x64xf32> -> vector<16x64xf32>
    %c1_162 = arith.constant 1 : index
    %c0_163 = arith.constant 0 : index
    %c0_164 = arith.constant 0 : index
    %329 = vector.load %arg18[%c1_162, %c0_163, %c0_164] : memref<2x1x64xf32, #tpu.memory_space<vmem>>, vector<1x1x64xf32>
    %330 = vector.shape_cast %329 : vector<1x1x64xf32> to vector<1x64xf32>
    %331 = vector.broadcast %330 : vector<1x64xf32> to vector<16x64xf32>
    %332 = arith.addf %328, %331 : vector<16x64xf32>
    %cst_165 = arith.constant 0.000000e+00 : f32
    %333 = vector.broadcast %cst_165 : f32 to vector<16x64xf32>
    %334 = arith.maximumf %332, %333 : vector<16x64xf32>
    %c1_166 = arith.constant 1 : index
    %c0_167 = arith.constant 0 : index
    %c0_168 = arith.constant 0 : index
    %335 = vector.load %arg19[%c1_166, %c0_167, %c0_168] : memref<2x64x32xf32, #tpu.memory_space<vmem>>, vector<1x64x32xf32>
    %336 = vector.shape_cast %335 : vector<1x64x32xf32> to vector<64x32xf32>
    %cst_169 = arith.constant dense<0.000000e+00> : vector<16x32xf32>
    %337 = tpu.matmul %334, %336, %cst_169 {dimension_numbers = #tpu.dot_dimension_numbers<[1], [0], [0], [1], [0, 0, 1, 1], [], []>} : vector<16x64xf32>, vector<64x32xf32>, vector<16x32xf32> -> vector<16x32xf32>
    %c1_170 = arith.constant 1 : index
    %c0_171 = arith.constant 0 : index
    %c0_172 = arith.constant 0 : index
    %338 = vector.load %arg20[%c1_170, %c0_171, %c0_172] : memref<2x1x32xf32, #tpu.memory_space<vmem>>, vector<1x1x32xf32>
    %339 = vector.shape_cast %338 : vector<1x1x32xf32> to vector<1x32xf32>
    %340 = vector.broadcast %339 : vector<1x32xf32> to vector<16x32xf32>
    %341 = arith.addf %337, %340 : vector<16x32xf32>
    %342 = arith.addf %325, %341 : vector<16x32xf32>
    %c1_173 = arith.constant 1 : index
    %c0_174 = arith.constant 0 : index
    %c0_175 = arith.constant 0 : index
    %343 = vector.load %arg21[%c1_173, %c0_174, %c0_175] : memref<2x1x32xf32, #tpu.memory_space<vmem>>, vector<1x1x32xf32>
    %344 = vector.shape_cast %343 : vector<1x1x32xf32> to vector<1x32xf32>
    %c1_176 = arith.constant 1 : index
    %c0_177 = arith.constant 0 : index
    %c0_178 = arith.constant 0 : index
    %345 = vector.load %arg22[%c1_176, %c0_177, %c0_178] : memref<2x1x32xf32, #tpu.memory_space<vmem>>, vector<1x1x32xf32>
    %346 = vector.shape_cast %345 : vector<1x1x32xf32> to vector<1x32xf32>
    %cst_179 = arith.constant dense<0.000000e+00> : vector<16xf32>
    %347 = vector.multi_reduction <add>, %342, %cst_179 [1] : vector<16x32xf32> to vector<16xf32>
    %348 = vector.shape_cast %347 : vector<16xf32> to vector<16x1xf32>
    %cst_180 = arith.constant 3.200000e+01 : f32
    %349 = vector.broadcast %cst_180 : f32 to vector<16x1xf32>
    %350 = arith.divf %348, %349 : vector<16x1xf32>
    %351 = vector.broadcast %350 : vector<16x1xf32> to vector<16x32xf32>
    %352 = arith.subf %342, %351 : vector<16x32xf32>
    %353 = arith.mulf %352, %352 : vector<16x32xf32>
    %cst_181 = arith.constant dense<0.000000e+00> : vector<16xf32>
    %354 = vector.multi_reduction <add>, %353, %cst_181 [1] : vector<16x32xf32> to vector<16xf32>
    %355 = vector.shape_cast %354 : vector<16xf32> to vector<16x1xf32>
    %cst_182 = arith.constant 3.200000e+01 : f32
    %356 = vector.broadcast %cst_182 : f32 to vector<16x1xf32>
    %357 = arith.divf %355, %356 : vector<16x1xf32>
    %358 = vector.broadcast %350 : vector<16x1xf32> to vector<16x32xf32>
    %359 = arith.subf %342, %358 : vector<16x32xf32>
    %cst_183 = arith.constant 9.99999974E-6 : f32
    %360 = vector.broadcast %cst_183 : f32 to vector<16x1xf32>
    %361 = arith.addf %357, %360 : vector<16x1xf32>
    %362 = math.rsqrt %361 : vector<16x1xf32>
    %363 = vector.broadcast %362 : vector<16x1xf32> to vector<16x32xf32>
    %364 = arith.mulf %359, %363 : vector<16x32xf32>
    %365 = vector.broadcast %344 : vector<1x32xf32> to vector<16x32xf32>
    %366 = arith.mulf %364, %365 : vector<16x32xf32>
    %367 = vector.broadcast %346 : vector<1x32xf32> to vector<16x32xf32>
    %368 = arith.addf %366, %367 : vector<16x32xf32>
    %c0_184 = arith.constant 0 : index
    %c0_185 = arith.constant 0 : index
    %369 = vector.load %arg2[%c0_184, %c0_185] : memref<16x16xf32, #tpu.memory_space<vmem>>, vector<16x16xf32>
    %cst_186 = arith.constant dense<0.000000e+00> : vector<16x32xf32>
    %370 = tpu.matmul %369, %368, %cst_186 {dimension_numbers = #tpu.dot_dimension_numbers<[1], [0], [0], [1], [0, 0, 1, 1], [], []>} : vector<16x16xf32>, vector<16x32xf32>, vector<16x32xf32> -> vector<16x32xf32>
    %c0_187 = arith.constant 0 : index
    %c0_188 = arith.constant 0 : index
    %371 = vector.load %arg23[%c0_187, %c0_188] : memref<32x8xf32, #tpu.memory_space<vmem>>, vector<32x8xf32>
    %cst_189 = arith.constant dense<0.000000e+00> : vector<16x8xf32>
    %372 = tpu.matmul %370, %371, %cst_189 {dimension_numbers = #tpu.dot_dimension_numbers<[1], [0], [0], [1], [0, 0, 1, 1], [], []>} : vector<16x32xf32>, vector<32x8xf32>, vector<16x8xf32> -> vector<16x8xf32>
    %c0_190 = arith.constant 0 : index
    %c0_191 = arith.constant 0 : index
    %373 = vector.load %arg24[%c0_190, %c0_191] : memref<1x8xf32, #tpu.memory_space<vmem>>, vector<1x8xf32>
    %374 = vector.broadcast %373 : vector<1x8xf32> to vector<16x8xf32>
    %375 = arith.addf %372, %374 : vector<16x8xf32>
    %c0_192 = arith.constant 0 : index
    %c0_193 = arith.constant 0 : index
    %376 = vector.load %arg29[%c0_192, %c0_193] : memref<16x8xf32, #tpu.memory_space<vmem>>, vector<16x8xf32>
    tpu.vector_store %arg29[%c0_192, %c0_193], %375 {strides = array<i32>} : memref<16x8xf32, #tpu.memory_space<vmem>>, vector<16x8xf32>,
    return
  }
}

</mosaic_0001>

<llo_original>
// kernel: model_forward.1
$region0: #{model_forward.1}
  #allocation0 [shape = 'u32[]', space=smem, size = 0x4, offset = 0x4, fixed_abs, tag = 'smem constant byte address 0x4 - core index']
  #allocation1 [shape = 'u32[144,128]{1,0:T(1,128)}', space=vmem, size = 0x12000, scoped, tag = 'internal scratch']
  %s0 = inlined_call_operand.smem [shape: u32[30], index: -1, kind: input, shape index: {}]
  %s1 = sld [smem:[%s0]]
  %s2 = scalar_lea.smem %s0, 1
  %s3 = sld [smem:[%s2]]
  %s4 = scalar_lea.smem %s0, 2
  %s5 = sld [smem:[%s4]]
  %s6 = scalar_lea.smem %s0, 3
  %s7 = sld [smem:[%s6]]
  %s8 = scalar_lea.smem %s0, 4
  %s9 = sld [smem:[%s8]]
  %s10 = scalar_lea.smem %s0, 5
  %s11 = sld [smem:[%s10]]
  %s12 = scalar_lea.smem %s0, 6
  %s13 = sld [smem:[%s12]]
  %s14 = scalar_lea.smem %s0, 7
  %s15 = sld [smem:[%s14]]
  %s16 = scalar_lea.smem %s0, 8
  %s17 = sld [smem:[%s16]]
  %s18 = scalar_lea.smem %s0, 9
  %s19 = sld [smem:[%s18]]
  %s20 = scalar_lea.smem %s0, 10
  %s21 = sld [smem:[%s20]]
  %s22 = scalar_lea.smem %s0, 11
  %s23 = sld [smem:[%s22]]
  %s24 = scalar_lea.smem %s0, 12
  %s25 = sld [smem:[%s24]]
  %s26 = scalar_lea.smem %s0, 13
  %s27 = sld [smem:[%s26]]
  %s28 = scalar_lea.smem %s0, 14
  %s29 = sld [smem:[%s28]]
  %s30 = scalar_lea.smem %s0, 15
  %s31 = sld [smem:[%s30]]
  %s32 = scalar_lea.smem %s0, 16
  %s33 = sld [smem:[%s32]]
  %s34 = scalar_lea.smem %s0, 17
  %s35 = sld [smem:[%s34]]
  %s36 = scalar_lea.smem %s0, 18
  %s37 = sld [smem:[%s36]]
  %s38 = scalar_lea.smem %s0, 19
  %s39 = sld [smem:[%s38]]
  %s40 = scalar_lea.smem %s0, 20
  %s41 = sld [smem:[%s40]]
  %s42 = scalar_lea.smem %s0, 21
  %s43 = sld [smem:[%s42]]
  %s44 = scalar_lea.smem %s0, 22
  %s45 = sld [smem:[%s44]]
  %s46 = scalar_lea.smem %s0, 23
  %s47 = sld [smem:[%s46]]
  %s48 = scalar_lea.smem %s0, 24
  %s49 = sld [smem:[%s48]]
  %s50 = scalar_lea.smem %s0, 25
  %s51 = sld [smem:[%s50]]
  %s52 = scalar_lea.smem %s0, 26
  %s53 = sld [smem:[%s52]]
  %s54 = scalar_lea.smem %s0, 27
  %s55 = sld [smem:[%s54]]
  %s56 = scalar_lea.smem %s0, 28
  %s57 = sld [smem:[%s56]]
  %s58 = scalar_lea.smem %s0, 29
  %s59 = sld [smem:[%s58]]
  %s60 = sld [smem:[#allocation0]]
  $region166: #{model_forward.1} parent=0
    _
  %s62 = ssub.s32 1, %s60
  %s63 = scalar_select 0, %s62, %s60
  $region1: #{model_forward.1} parent=0
    #allocation2 [shape = 'u8[4096]{0}', space=vmem, size = 0x1000, scoped, tag = 'input window, operand 1, single buffered']
    #allocation3 [shape = 's32[1]{0}', space=sflag, size = 0x4, scoped, tag = 'scoped memory for model_forward.1']
    #allocation4 [shape = 's32[1]{0}', space=sflag, size = 0x4, scoped, tag = 'scoped memory for model_forward.1']
    #allocation5 [shape = 'u8[8192]{0}', space=vmem, size = 0x2000, scoped, tag = 'input window, operand 2, single buffered']
    #allocation6 [shape = 's32[1]{0}', space=sflag, size = 0x4, scoped, tag = 'scoped memory for model_forward.1']
    #allocation7 [shape = 'u8[8192]{0}', space=vmem, size = 0x2000, scoped, tag = 'input window, operand 3, single buffered']
    #allocation8 [shape = 'u8[512]{0}', space=vmem, size = 0x400, scoped, tag = 'input window, operand 4, single buffered']
    #allocation9 [shape = 's32[1]{0}', space=sflag, size = 0x4, scoped, tag = 'scoped memory for model_forward.1']
    #allocation10 [shape = 'u8[2048]{0}', space=vmem, size = 0x800, scoped, tag = 'input window, operand 6, single buffered']
    #allocation11 [shape = 'u8[1024]{0}', space=vmem, size = 0x400, scoped, tag = 'input window, operand 8, single buffered']
    #allocation12 [shape = 's32[1]{0}', space=sflag, size = 0x4, scoped, tag = 'scoped memory for model_forward.1']
    #allocation13 [shape = 'u8[1024]{0}', space=vmem, size = 0x400, scoped, tag = 'input window, operand 9, single buffered']
    #allocation14 [shape = 'u8[1024]{0}', space=vmem, size = 0x400, scoped, tag = 'input window, operand 10, single buffered']
    #allocation15 [shape = 's32[1]{0}', space=sflag, size = 0x4, scoped, tag = 'scoped memory for model_forward.1']
    #allocation16 [shape = 'u8[3072]{0}', space=vmem, size = 0xc00, scoped, tag = 'input window, operand 12, single buffered']
    #allocation17 [shape = 'u8[1024]{0}', space=vmem, size = 0x400, scoped, tag = 'input window, operand 14, single buffered']
    #allocation18 [shape = 's32[1]{0}', space=sflag, size = 0x4, scoped, tag = 'scoped memory for model_forward.1']
    #allocation19 [shape = 'u8[8192]{0}', space=vmem, size = 0x2000, scoped, tag = 'output window, operand 0, single buffered']
    %64 = vsyncpa [#allocation3], 0
    %65 = vsyncpa [#allocation6], 0
    %66 = vsyncpa [#allocation9], 0
    %67 = vsyncpa [#allocation12], 0
    %68 = vsyncpa [#allocation15], 0
    %69 = vsyncpa [#allocation18], 0
    %70 = vsyncpa [#allocation4], 0
    // Predicated region
    $region2: #{model_forward.1} parent=1 // pred_check
      _
    $region3: #{model_forward.1} parent=1 // pred_check_branch
      %72 = sbr.rel (0) target = $region5
    $region4: #{model_forward.1} parent=1 // pred_region
      _
    $region5: #{model_forward.1} parent=1 // pred_fallthru
      _
    // Predicated region
    $region6: #{model_forward.1} parent=1 // pred_check
      _
    $region7: #{model_forward.1} parent=1 // pred_check_branch
      %74 = sbr.rel (0) target = $region9
    $region8: #{model_forward.1} parent=1 // pred_region
      %s76 = ssub.s32 128, 128
      %77 = vsyncadd [#allocation3], %s76
      %s79 = sshll.u32 [#allocation2], 4
      %s80 = int_to_ptr.vmem [resolvable:$true] %s79
      %82 = dma.hbm_to_vmem [thread:$0]  %s3, 128, %s80, [#allocation3]
    $region9: #{model_forward.1} parent=1 // pred_fallthru
      _
    // Predicated region
    $region10: #{model_forward.1} parent=1 // pred_check
      _
    $region11: #{model_forward.1} parent=1 // pred_check_branch
      %84 = sbr.rel (0) target = $region13
    $region12: #{model_forward.1} parent=1 // pred_region
      %s86 = ssub.s32 256, 256
      %87 = vsyncadd [#allocation6], %s86
      %s88 = sshll.u32 [#allocation5], 4
      %s89 = int_to_ptr.vmem [resolvable:$true] %s88
      %94 = dma.hbm_to_vmem [thread:$0]  %s5, 256, %s89, [#allocation6], 128, 128, 8
    $region13: #{model_forward.1} parent=1 // pred_fallthru
      _
    // Predicated region
    $region14: #{model_forward.1} parent=1 // pred_check
      _
    $region15: #{model_forward.1} parent=1 // pred_check_branch
      %96 = sbr.rel (0) target = $region17
    $region16: #{model_forward.1} parent=1 // pred_region
      %s98 = ssub.s32 256, 256
      %99 = vsyncadd [#allocation6], %s98
      %s100 = sshll.u32 [#allocation7], 4
      %s101 = int_to_ptr.vmem [resolvable:$true] %s100
      %106 = dma.hbm_to_vmem [thread:$0]  %s7, 256, %s101, [#allocation6], 128, 128, 8
    $region17: #{model_forward.1} parent=1 // pred_fallthru
      _
    // Predicated region
    $region18: #{model_forward.1} parent=1 // pred_check
      _
    $region19: #{model_forward.1} parent=1 // pred_check_branch
      %108 = sbr.rel (0) target = $region21
    $region20: #{model_forward.1} parent=1 // pred_region
      %s110 = ssub.s32 16, 16
      %111 = vsyncadd [#allocation9], %s110
      %s113 = sshll.u32 [#allocation8], 4
      %s114 = int_to_ptr.vmem [resolvable:$true] %s113
      %116 = dma.hbm_to_vmem [thread:$0]  %s9, 16, %s114, [#allocation9]
    $region21: #{model_forward.1} parent=1 // pred_fallthru
      _
    // Predicated region
    $region22: #{model_forward.1} parent=1 // pred_check
      _
    $region23: #{model_forward.1} parent=1 // pred_check_branch
      %118 = sbr.rel (0) target = $region25
    $region24: #{model_forward.1} parent=1 // pred_region
      _
    $region25: #{model_forward.1} parent=1 // pred_fallthru
      _
    // Predicated region
    $region26: #{model_forward.1} parent=1 // pred_check
      _
    $region27: #{model_forward.1} parent=1 // pred_check_branch
      %120 = sbr.rel (0) target = $region29
    $region28: #{model_forward.1} parent=1 // pred_region
      %s122 = ssub.s32 64, 64
      %123 = vsyncadd [#allocation9], %s122
      %s124 = sshll.u32 [#allocation10], 4
      %s125 = int_to_ptr.vmem [resolvable:$true] %s124
      %130 = dma.hbm_to_vmem [thread:$0]  %s13, 64, %s125, [#allocation9], 32, 32, 2
    $region29: #{model_forward.1} parent=1 // pred_fallthru
      _
    // Predicated region
    $region30: #{model_forward.1} parent=1 // pred_check
      _
    $region31: #{model_forward.1} parent=1 // pred_check_branch
      %132 = sbr.rel (0) target = $region33
    $region32: #{model_forward.1} parent=1 // pred_region
      _
    $region33: #{model_forward.1} parent=1 // pred_fallthru
      _
    // Predicated region
    $region34: #{model_forward.1} parent=1 // pred_check
      _
    $region35: #{model_forward.1} parent=1 // pred_check_branch
      %134 = sbr.rel (0) target = $region37
    $region36: #{model_forward.1} parent=1 // pred_region
      %s136 = ssub.s32 32, 32
      %137 = vsyncadd [#allocation12], %s136
      %s138 = sshll.u32 [#allocation11], 4
      %s139 = int_to_ptr.vmem [resolvable:$true] %s138
      %144 = dma.hbm_to_vmem [thread:$0]  %s17, 32, %s139, [#allocation12], 16, 16, 1
    $region37: #{model_forward.1} parent=1 // pred_fallthru
      _
    // Predicated region
    $region38: #{model_forward.1} parent=1 // pred_check
      _
    $region39: #{model_forward.1} parent=1 // pred_check_branch
      %146 = sbr.rel (0) target = $region41
    $region40: #{model_forward.1} parent=1 // pred_region
      %s148 = ssub.s32 32, 32
      %149 = vsyncadd [#allocation12], %s148
      %s150 = sshll.u32 [#allocation13], 4
      %s151 = int_to_ptr.vmem [resolvable:$true] %s150
      %156 = dma.hbm_to_vmem [thread:$0]  %s19, 32, %s151, [#allocation12], 16, 16, 1
    $region41: #{model_forward.1} parent=1 // pred_fallthru
      _
    // Predicated region
    $region42: #{model_forward.1} parent=1 // pred_check
      _
    $region43: #{model_forward.1} parent=1 // pred_check_branch
      %158 = sbr.rel (0) target = $region45
    $region44: #{model_forward.1} parent=1 // pred_region
      %s160 = ssub.s32 32, 32
      %161 = vsyncadd [#allocation15], %s160
      %s162 = sshll.u32 [#allocation14], 4
      %s163 = int_to_ptr.vmem [resolvable:$true] %s162
      %168 = dma.hbm_to_vmem [thread:$0]  %s21, 32, %s163, [#allocation15], 16, 16, 1
    $region45: #{model_forward.1} parent=1 // pred_fallthru
      _
    // Predicated region
    $region46: #{model_forward.1} parent=1 // pred_check
      _
    $region47: #{model_forward.1} parent=1 // pred_check_branch
      %170 = sbr.rel (0) target = $region49
    $region48: #{model_forward.1} parent=1 // pred_region
      _
    $region49: #{model_forward.1} parent=1 // pred_fallthru
      _
    // Predicated region
    $region50: #{model_forward.1} parent=1 // pred_check
      _
    $region51: #{model_forward.1} parent=1 // pred_check_branch
      %172 = sbr.rel (0) target = $region53
    $region52: #{model_forward.1} parent=1 // pred_region
      %s174 = ssub.s32 96, 96
      %175 = vsyncadd [#allocation15], %s174
      %s176 = sshll.u32 [#allocation16], 4
      %s177 = int_to_ptr.vmem [resolvable:$true] %s176
      %182 = dma.hbm_to_vmem [thread:$0]  %s25, 96, %s177, [#allocation15], 48, 48, 3
    $region53: #{model_forward.1} parent=1 // pred_fallthru
      _
    // Predicated region
    $region54: #{model_forward.1} parent=1 // pred_check
      _
    $region55: #{model_forward.1} parent=1 // pred_check_branch
      %184 = sbr.rel (0) target = $region57
    $region56: #{model_forward.1} parent=1 // pred_region
      _
    $region57: #{model_forward.1} parent=1 // pred_fallthru
      _
    // Predicated region
    $region58: #{model_forward.1} parent=1 // pred_check
      _
    $region59: #{model_forward.1} parent=1 // pred_check_branch
      %186 = sbr.rel (0) target = $region61
    $region60: #{model_forward.1} parent=1 // pred_region
      %s188 = ssub.s32 32, 32
      %189 = vsyncadd [#allocation18], %s188
      %s190 = sshll.u32 [#allocation17], 4
      %s191 = int_to_ptr.vmem [resolvable:$true] %s190
      %196 = dma.hbm_to_vmem [thread:$0]  %s29, 32, %s191, [#allocation18], 16, 16, 1
    $region61: #{model_forward.1} parent=1 // pred_fallthru
      _
    // Predicated region
    $region62: #{model_forward.1} parent=1 // pred_check
      _
    $region63: #{model_forward.1} parent=1 // pred_check_branch
      %198 = sbr.rel (0) target = $region65
    $region64: #{model_forward.1} parent=1 // pred_region
      _
    $region65: #{model_forward.1} parent=1 // pred_fallthru
      _
    // Predicated region
    $region66: #{model_forward.1} parent=1 // pred_check
      _
    $region67: #{model_forward.1} parent=1 // pred_check_branch
      %200 = sbr.rel (0) target = $region69
    $region68: #{model_forward.1} parent=1 // pred_region
      _
    $region69: #{model_forward.1} parent=1 // pred_fallthru
      _
    // Predicated region
    $region70: #{model_forward.1} parent=1 // pred_check
      _
    $region71: #{model_forward.1} parent=1 // pred_check_branch
      %202 = sbr.rel (0) target = $region73
    $region72: #{model_forward.1} parent=1 // pred_region
      _
    $region73: #{model_forward.1} parent=1 // pred_fallthru
      _
    // Predicated region
    $region74: #{model_forward.1} parent=1 // pred_check
      _
    $region75: #{model_forward.1} parent=1 // pred_check_branch
      %204 = sbr.rel (0) target = $region77
    $region76: #{model_forward.1} parent=1 // pred_region
      _
    $region77: #{model_forward.1} parent=1 // pred_fallthru
      _
    // Predicated region
    $region78: #{model_forward.1} parent=1 // pred_check
      _
    $region79: #{model_forward.1} parent=1 // pred_check_branch
      %206 = sbr.rel (0) target = $region81
    $region80: #{model_forward.1} parent=1 // pred_region
      _
    $region81: #{model_forward.1} parent=1 // pred_fallthru
      _
    // Predicated region
    $region82: #{model_forward.1} parent=1 // pred_check
      _
    $region83: #{model_forward.1} parent=1 // pred_check_branch
      %208 = sbr.rel (0) target = $region85
    $region84: #{model_forward.1} parent=1 // pred_region
      _
    $region85: #{model_forward.1} parent=1 // pred_fallthru
      _
    // Predicated region
    $region86: #{model_forward.1} parent=1 // pred_check
      _
    $region87: #{model_forward.1} parent=1 // pred_check_branch
      %210 = sbr.rel (0) target = $region89
    $region88: #{model_forward.1} parent=1 // pred_region
      _
    $region89: #{model_forward.1} parent=1 // pred_fallthru
      _
    // Predicated region
    $region90: #{model_forward.1} parent=1 // pred_check
      _
    $region91: #{model_forward.1} parent=1 // pred_check_branch
      %212 = sbr.rel (0) target = $region93
    $region92: #{model_forward.1} parent=1 // pred_region
      _
    $region93: #{model_forward.1} parent=1 // pred_fallthru
      _
    // Predicated region
    $region94: #{model_forward.1} parent=1 // pred_check
      _
    $region95: #{model_forward.1} parent=1 // pred_check_branch
      %214 = sbr.rel (0) target = $region97
    $region96: #{model_forward.1} parent=1 // pred_region
      _
    $region97: #{model_forward.1} parent=1 // pred_fallthru
      _
    // Predicated region
    $region98: #{model_forward.1} parent=1 // pred_check
      _
    $region99: #{model_forward.1} parent=1 // pred_check_branch
      %216 = sbr.rel (0) target = $region101
    $region100: #{model_forward.1} parent=1 // pred_region
      _
    $region101: #{model_forward.1} parent=1 // pred_fallthru
      _
    // Predicated region
    $region102: #{model_forward.1} parent=1 // pred_check
      _
    $region103: #{model_forward.1} parent=1 // pred_check_branch
      %218 = sbr.rel (0) target = $region105
    $region104: #{model_forward.1} parent=1 // pred_region
      _
    $region105: #{model_forward.1} parent=1 // pred_fallthru
      _
    // Predicated region
    $region106: #{model_forward.1} parent=1 // pred_check
      _
    $region107: #{model_forward.1} parent=1 // pred_check_branch
      %220 = sbr.rel (0) target = $region109
    $region108: #{model_forward.1} parent=1 // pred_region
      _
    $region109: #{model_forward.1} parent=1 // pred_fallthru
      _
    // Predicated region
    $region110: #{model_forward.1} parent=1 // pred_check
      _
    $region111: #{model_forward.1} parent=1 // pred_check_branch
      %222 = sbr.rel (0) target = $region113
    $region112: #{model_forward.1} parent=1 // pred_region
      _
    $region113: #{model_forward.1} parent=1 // pred_fallthru
      _
    // Predicated region
    $region114: #{model_forward.1} parent=1 // pred_check
      _
    $region115: #{model_forward.1} parent=1 // pred_check_branch
      %224 = sbr.rel (0) target = $region117
    $region116: #{model_forward.1} parent=1 // pred_region
      _
    $region117: #{model_forward.1} parent=1 // pred_fallthru
      _
    // Predicated region
    $region118: #{model_forward.1} parent=1 // pred_check
      _
    $region119: #{model_forward.1} parent=1 // pred_check_branch
      %226 = sbr.rel (0) target = $region121
    $region120: #{model_forward.1} parent=1 // pred_region
      %227 = dma.done [#allocation3], 128
    $region121: #{model_forward.1} parent=1 // pred_fallthru
      _
    // Predicated region
    $region122: #{model_forward.1} parent=1 // pred_check
      _
    $region123: #{model_forward.1} parent=1 // pred_check_branch
      %229 = sbr.rel (0) target = $region125
    $region124: #{model_forward.1} parent=1 // pred_region
      %230 = dma.done [#allocation6], 256
    $region125: #{model_forward.1} parent=1 // pred_fallthru
      _
    // Predicated region
    $region126: #{model_forward.1} parent=1 // pred_check
      _
    $region127: #{model_forward.1} parent=1 // pred_check_branch
      %232 = sbr.rel (0) target = $region129
    $region128: #{model_forward.1} parent=1 // pred_region
      %233 = dma.done [#allocation6], 256
    $region129: #{model_forward.1} parent=1 // pred_fallthru
      _
    // Predicated region
    $region130: #{model_forward.1} parent=1 // pred_check
      _
    $region131: #{model_forward.1} parent=1 // pred_check_branch
      %235 = sbr.rel (0) target = $region133
    $region132: #{model_forward.1} parent=1 // pred_region
      %236 = dma.done [#allocation9], 16
    $region133: #{model_forward.1} parent=1 // pred_fallthru
      _
    // Predicated region
    $region134: #{model_forward.1} parent=1 // pred_check
      _
    $region135: #{model_forward.1} parent=1 // pred_check_branch
      %238 = sbr.rel (0) target = $region137
    $region136: #{model_forward.1} parent=1 // pred_region
      %239 = dma.done [#allocation9], 64
    $region137: #{model_forward.1} parent=1 // pred_fallthru
      _
    // Predicated region
    $region138: #{model_forward.1} parent=1 // pred_check
      _
    $region139: #{model_forward.1} parent=1 // pred_check_branch
      %241 = sbr.rel (0) target = $region141
    $region140: #{model_forward.1} parent=1 // pred_region
      %242 = dma.done [#allocation12], 32
    $region141: #{model_forward.1} parent=1 // pred_fallthru
      _
    // Predicated region
    $region142: #{model_forward.1} parent=1 // pred_check
      _
    $region143: #{model_forward.1} parent=1 // pred_check_branch
      %244 = sbr.rel (0) target = $region145
    $region144: #{model_forward.1} parent=1 // pred_region
      %245 = dma.done [#allocation12], 32
    $region145: #{model_forward.1} parent=1 // pred_fallthru
      _
    // Predicated region
    $region146: #{model_forward.1} parent=1 // pred_check
      _
    $region147: #{model_forward.1} parent=1 // pred_check_branch
      %247 = sbr.rel (0) target = $region149
    $region148: #{model_forward.1} parent=1 // pred_region
      %248 = dma.done [#allocation15], 32
    $region149: #{model_forward.1} parent=1 // pred_fallthru
      _
    // Predicated region
    $region150: #{model_forward.1} parent=1 // pred_check
      _
    $region151: #{model_forward.1} parent=1 // pred_check_branch
      %250 = sbr.rel (0) target = $region153
    $region152: #{model_forward.1} parent=1 // pred_region
      %251 = dma.done [#allocation15], 96
    $region153: #{model_forward.1} parent=1 // pred_fallthru
      _
    // Predicated region
    $region154: #{model_forward.1} parent=1 // pred_check
      _
    $region155: #{model_forward.1} parent=1 // pred_check_branch
      %253 = sbr.rel (0) target = $region157
    $region156: #{model_forward.1} parent=1 // pred_region
      %254 = dma.done [#allocation18], 32
    $region157: #{model_forward.1} parent=1 // pred_fallthru
      _
    %v255 = vld [vmem:[%s1] sm:$0xff]
    %v256 = vld [vmem:[%s1 + $0x8] sm:$0xff]
    %v257 = vld [vmem:[%s1 + $0x10] sm:$0xff]
    %v258 = vld [vmem:[%s1 + $0x18] sm:$0xff]
    %v259 = vld [vmem:[#allocation2] sm:$0xff]
    %vm260 = vcmask 64512
    %v262 = vsel %vm260, %v259, 0
    %v265 = vsel %vm260, %v255, 0
    %v268 = vsel %vm260, %v256, 0
    %270 = vmatprep.subr.mxu0 0.0
    %271 = vmatpush1.xpose.msra.mxu0 %v265
    %272 = vmatprep.subr.mxu0 0.0
    %273 = vmatpush1.xpose.msra.mxu0 %v268
    %274 = vmatprep.subr.mxu0 0.0
    %275 = vmatpush1.xpose.msra.mxu0 0.0
    %276 = vmatprep.subr.mxu0 0.0
    %277 = vmatpush1.xpose.msra.mxu0 0.0
    %278 = vmatprep.subr.mxu0 0.0
    %279 = vmatpush1.xpose.msra.mxu0 0.0
    %280 = vmatprep.subr.mxu0 0.0
    %281 = vmatpush1.xpose.msra.mxu0 0.0
    %282 = vmatprep.subr.mxu0 0.0
    %283 = vmatpush1.xpose.msra.mxu0 0.0
    %284 = vmatprep.subr.mxu0 0.0
    %285 = vmatpush1.xpose.msra.mxu0 0.0
    %286 = vmatprep.subr.mxu0 0.0
    %287 = vmatpush1.xpose.msra.mxu0 0.0
    %288 = vmatprep.subr.mxu0 0.0
    %289 = vmatpush1.xpose.msra.mxu0 0.0
    %290 = vmatprep.subr.mxu0 0.0
    %291 = vmatpush1.xpose.msra.mxu0 0.0
    %292 = vmatprep.subr.mxu0 0.0
    %293 = vmatpush1.xpose.msra.mxu0 0.0
    %294 = vmatprep.subr.mxu0 0.0
    %295 = vmatpush1.xpose.msra.mxu0 0.0
    %296 = vmatprep.subr.mxu0 0.0
    %297 = vmatpush1.xpose.msra.mxu0 0.0
    %298 = vmatprep.subr.mxu0 0.0
    %299 = vmatpush1.xpose.msra.mxu0 0.0
    %300 = vmatprep.subr.mxu0 0.0
    %301 = vmatpush1.xpose.msra.mxu0 0.0
    %302 = vmatprep.subr.mxu0 0.0
    %303 = vmatpush1.xpose.msra.mxu0 0.0
    %304 = vmatprep.subr.mxu0 0.0
    %305 = vmatpush1.xpose.msra.mxu0 0.0
    %306 = vmatprep.subr.mxu0 0.0
    %307 = vmatpush1.xpose.msra.mxu0 0.0
    %308 = vmatprep.subr.mxu0 0.0
    %309 = vmatpush1.xpose.msra.mxu0 0.0
    %310 = vmatprep.subr.mxu0 0.0
    %311 = vmatpush1.xpose.msra.mxu0 0.0
    %312 = vmatprep.subr.mxu0 0.0
    %313 = vmatpush1.xpose.msra.mxu0 0.0
    %314 = vmatprep.subr.mxu0 0.0
    %315 = vmatpush1.xpose.msra.mxu0 0.0
    %316 = vmatprep.subr.mxu0 0.0
    %317 = vmatpush1.xpose.msra.mxu0 0.0
    %318 = vmatprep.subr.mxu0 0.0
    %319 = vmatpush1.xpose.msra.mxu0 0.0
    %320 = vmatprep.subr.mxu0 0.0
    %321 = vmatpush1.xpose.msra.mxu0 0.0
    %322 = vmatprep.subr.mxu0 0.0
    %323 = vmatpush1.xpose.msra.mxu0 0.0
    %324 = vmatprep.subr.mxu0 0.0
    %325 = vmatpush1.xpose.msra.mxu0 0.0
    %326 = vmatprep.subr.mxu0 0.0
    %327 = vmatpush1.xpose.msra.mxu0 0.0
    %328 = vmatprep.subr.mxu0 0.0
    %329 = vmatpush1.xpose.msra.mxu0 0.0
    %330 = vmatprep.subr.mxu0 0.0
    %331 = vmatpush1.xpose.msra.mxu0 0.0
    %332 = vmatprep.subr.mxu0 0.0
    %333 = vmatpush1.xpose.msra.mxu0 0.0
    %334 = vmatprep.mubr.f32.mxu0 0.0
    %335 = vmatmul.mubr.f32.gmra.mrb[0].mxu0 %v262
    %v336 = vpop.f32.mrb[0].mxu0
    %v337 = vadd.f32 0.0, %v336
    %v338 = vpop.f32.mrb[0].mxu0
    %339 = vdwg.mxu0
    %v341 = vsel %vm260, %v257, 0
    %v344 = vsel %vm260, %v258, 0
    %346 = vmatprep.subr.mxu0 0.0
    %347 = vmatpush1.xpose.msra.mxu0 %v341
    %348 = vmatprep.subr.mxu0 0.0
    %349 = vmatpush1.xpose.msra.mxu0 %v344
    %350 = vmatprep.subr.mxu0 0.0
    %351 = vmatpush1.xpose.msra.mxu0 0.0
    %352 = vmatprep.subr.mxu0 0.0
    %353 = vmatpush1.xpose.msra.mxu0 0.0
    %354 = vmatprep.subr.mxu0 0.0
    %355 = vmatpush1.xpose.msra.mxu0 0.0
    %356 = vmatprep.subr.mxu0 0.0
    %357 = vmatpush1.xpose.msra.mxu0 0.0
    %358 = vmatprep.subr.mxu0 0.0
    %359 = vmatpush1.xpose.msra.mxu0 0.0
    %360 = vmatprep.subr.mxu0 0.0
    %361 = vmatpush1.xpose.msra.mxu0 0.0
    %362 = vmatprep.subr.mxu0 0.0
    %363 = vmatpush1.xpose.msra.mxu0 0.0
    %364 = vmatprep.subr.mxu0 0.0
    %365 = vmatpush1.xpose.msra.mxu0 0.0
    %366 = vmatprep.subr.mxu0 0.0
    %367 = vmatpush1.xpose.msra.mxu0 0.0
    %368 = vmatprep.subr.mxu0 0.0
    %369 = vmatpush1.xpose.msra.mxu0 0.0
    %370 = vmatprep.subr.mxu0 0.0
    %371 = vmatpush1.xpose.msra.mxu0 0.0
    %372 = vmatprep.subr.mxu0 0.0
    %373 = vmatpush1.xpose.msra.mxu0 0.0
    %374 = vmatprep.subr.mxu0 0.0
    %375 = vmatpush1.xpose.msra.mxu0 0.0
    %376 = vmatprep.subr.mxu0 0.0
    %377 = vmatpush1.xpose.msra.mxu0 0.0
    %378 = vmatprep.subr.mxu0 0.0
    %379 = vmatpush1.xpose.msra.mxu0 0.0
    %380 = vmatprep.subr.mxu0 0.0
    %381 = vmatpush1.xpose.msra.mxu0 0.0
    %382 = vmatprep.subr.mxu0 0.0
    %383 = vmatpush1.xpose.msra.mxu0 0.0
    %384 = vmatprep.subr.mxu0 0.0
    %385 = vmatpush1.xpose.msra.mxu0 0.0
    %386 = vmatprep.subr.mxu0 0.0
    %387 = vmatpush1.xpose.msra.mxu0 0.0
    %388 = vmatprep.subr.mxu0 0.0
    %389 = vmatpush1.xpose.msra.mxu0 0.0
    %390 = vmatprep.subr.mxu0 0.0
    %391 = vmatpush1.xpose.msra.mxu0 0.0
    %392 = vmatprep.subr.mxu0 0.0
    %393 = vmatpush1.xpose.msra.mxu0 0.0
    %394 = vmatprep.subr.mxu0 0.0
    %395 = vmatpush1.xpose.msra.mxu0 0.0
    %396 = vmatprep.subr.mxu0 0.0
    %397 = vmatpush1.xpose.msra.mxu0 0.0
    %398 = vmatprep.subr.mxu0 0.0
    %399 = vmatpush1.xpose.msra.mxu0 0.0
    %400 = vmatprep.subr.mxu0 0.0
    %401 = vmatpush1.xpose.msra.mxu0 0.0
    %402 = vmatprep.subr.mxu0 0.0
    %403 = vmatpush1.xpose.msra.mxu0 0.0
    %404 = vmatprep.subr.mxu0 0.0
    %405 = vmatpush1.xpose.msra.mxu0 0.0
    %406 = vmatprep.subr.mxu0 0.0
    %407 = vmatpush1.xpose.msra.mxu0 0.0
    %408 = vmatprep.subr.mxu0 0.0
    %409 = vmatpush1.xpose.msra.mxu0 0.0
    %410 = vmatprep.mubr.f32.mxu0 0.0
    %411 = vmatmul.mubr.f32.gmra.mrb[0].mxu0 %v262
    %v412 = vpop.f32.mrb[0].mxu0
    %v413 = vadd.f32 0.0, %v412
    %v414 = vpop.f32.mrb[0].mxu0
    %415 = vdwg.mxu0
    %v416 = vld [vmem:[#allocation7] sm:$0xff]
    %v417 = vld [vmem:[#allocation7 + $0x8] sm:$0xff]
    %v418 = vld [vmem:[#allocation8] sm:$0x1]
    %v420 = vlaneseq
    %v421 = vshrl.u32 %v420, 7
    %v422 = vsub.s32 0, %v421
    %v423 = vrot.slane %v418, %v422
    %vm425 = vcmask 130048
    %v427 = vsel %vm425, %v337, 0
    %v430 = vsel %vm425, %v413, 0
    %432 = vmatprep.subr.mxu0 0.0
    %433 = vmatpush1.msra.mxu0 %v416
    %434 = vmatprep.subr.mxu0 0.0
    %435 = vmatpush1.msra.mxu0 %v417
    %436 = vmatprep.subr.mxu0 0.0
    %437 = vmatpush1.msra.mxu0 0.0
    %438 = vmatprep.subr.mxu0 0.0
    %439 = vmatpush1.msra.mxu0 0.0
    %440 = vmatprep.subr.mxu0 0.0
    %441 = vmatpush1.msra.mxu0 0.0
    %442 = vmatprep.subr.mxu0 0.0
    %443 = vmatpush1.msra.mxu0 0.0
    %444 = vmatprep.subr.mxu0 0.0
    %445 = vmatpush1.msra.mxu0 0.0
    %446 = vmatprep.subr.mxu0 0.0
    %447 = vmatpush1.msra.mxu0 0.0
    %448 = vmatprep.subr.mxu0 0.0
    %449 = vmatpush1.msra.mxu0 0.0
    %450 = vmatprep.subr.mxu0 0.0
    %451 = vmatpush1.msra.mxu0 0.0
    %452 = vmatprep.subr.mxu0 0.0
    %453 = vmatpush1.msra.mxu0 0.0
    %454 = vmatprep.subr.mxu0 0.0
    %455 = vmatpush1.msra.mxu0 0.0
    %456 = vmatprep.subr.mxu0 0.0
    %457 = vmatpush1.msra.mxu0 0.0
    %458 = vmatprep.subr.mxu0 0.0
    %459 = vmatpush1.msra.mxu0 0.0
    %460 = vmatprep.subr.mxu0 0.0
    %461 = vmatpush1.msra.mxu0 0.0
    %462 = vmatprep.subr.mxu0 0.0
    %463 = vmatpush1.msra.mxu0 0.0
    %464 = vmatprep.subr.mxu0 0.0
    %465 = vmatpush1.msra.mxu0 0.0
    %466 = vmatprep.subr.mxu0 0.0
    %467 = vmatpush1.msra.mxu0 0.0
    %468 = vmatprep.subr.mxu0 0.0
    %469 = vmatpush1.msra.mxu0 0.0
    %470 = vmatprep.subr.mxu0 0.0
    %471 = vmatpush1.msra.mxu0 0.0
    %472 = vmatprep.subr.mxu0 0.0
    %473 = vmatpush1.msra.mxu0 0.0
    %474 = vmatprep.subr.mxu0 0.0
    %475 = vmatpush1.msra.mxu0 0.0
    %476 = vmatprep.subr.mxu0 0.0
    %477 = vmatpush1.msra.mxu0 0.0
    %478 = vmatprep.subr.mxu0 0.0
    %479 = vmatpush1.msra.mxu0 0.0
    %480 = vmatprep.subr.mxu0 0.0
    %481 = vmatpush1.msra.mxu0 0.0
    %482 = vmatprep.subr.mxu0 0.0
    %483 = vmatpush1.msra.mxu0 0.0
    %484 = vmatprep.subr.mxu0 0.0
    %485 = vmatpush1.msra.mxu0 0.0
    %486 = vmatprep.subr.mxu0 0.0
    %487 = vmatpush1.msra.mxu0 0.0
    %488 = vmatprep.subr.mxu0 0.0
    %489 = vmatpush1.msra.mxu0 0.0
    %490 = vmatprep.subr.mxu0 0.0
    %491 = vmatpush1.msra.mxu0 0.0
    %492 = vmatprep.subr.mxu0 0.0
    %493 = vmatpush1.msra.mxu0 0.0
    %494 = vmatprep.subr.mxu0 0.0
    %495 = vmatpush1.msra.mxu0 0.0
    %496 = vmatprep.mubr.f32.mxu0 0.0
    %497 = vmatmul.mubr.f32.gmra.mrb[0].mxu0 %v427
    %v498 = vpop.f32.mrb[0].mxu0
    %v499 = vadd.f32 %v423, %v498
    %v500 = vpop.f32.mrb[0].mxu0
    %501 = vmatprep.mubr.f32.mxu0 0.0
    %502 = vmatmul.mubr.f32.gmra.mrb[0].mxu0 %v430
    %v503 = vpop.f32.mrb[0].mxu0
    %v504 = vadd.f32 %v423, %v503
    %v505 = vpop.f32.mrb[0].mxu0
    %506 = vdwg.mxu0
    %v507 = vld [vmem:[%s51] sm:$0xff]
    %v508 = vld [vmem:[%s51 + $0x8] sm:$0xff]
    %v509 = vld [vmem:[%s51 + $0x10] sm:$0xff]
    %v510 = vld [vmem:[%s51 + $0x18] sm:$0xff]
    %v511 = vld [vmem:[%s51 + $0x20] sm:$0xff]
    %v512 = vld [vmem:[%s51 + $0x28] sm:$0xff]
    %v513 = vld [vmem:[%s51 + $0x30] sm:$0xff]
    %v514 = vld [vmem:[%s51 + $0x38] sm:$0xff]
    %v515 = vld [vmem:[%s51 + $0x40] sm:$0xff]
    %v516 = vld [vmem:[%s51 + $0x48] sm:$0xff]
    %v517 = vld [vmem:[%s51 + $0x50] sm:$0xff]
    %v518 = vld [vmem:[%s51 + $0x58] sm:$0xff]
    %v519 = vld [vmem:[%s51 + $0x60] sm:$0xff]
    %v520 = vld [vmem:[%s51 + $0x68] sm:$0xff]
    %v521 = vld [vmem:[%s51 + $0x70] sm:$0xff]
    %v522 = vld [vmem:[%s51 + $0x78] sm:$0xff]
    %v523 = vld [vmem:[%s53] sm:$0xff]
    %v524 = vld [vmem:[%s53 + $0x8] sm:$0xff]
    %v525 = vld [vmem:[%s53 + $0x10] sm:$0xff]
    %v526 = vld [vmem:[%s53 + $0x18] sm:$0xff]
    %v527 = vld [vmem:[%s53 + $0x20] sm:$0xff]
    %v528 = vld [vmem:[%s53 + $0x28] sm:$0xff]
    %v529 = vld [vmem:[%s53 + $0x30] sm:$0xff]
    %v530 = vld [vmem:[%s53 + $0x38] sm:$0xff]
    %v531 = vld [vmem:[%s53 + $0x40] sm:$0xff]
    %v532 = vld [vmem:[%s53 + $0x48] sm:$0xff]
    %v533 = vld [vmem:[%s53 + $0x50] sm:$0xff]
    %v534 = vld [vmem:[%s53 + $0x58] sm:$0xff]
    %v535 = vld [vmem:[%s53 + $0x60] sm:$0xff]
    %v536 = vld [vmem:[%s53 + $0x68] sm:$0xff]
    %v537 = vld [vmem:[%s53 + $0x70] sm:$0xff]
    %v538 = vld [vmem:[%s53 + $0x78] sm:$0xff]
    %v539 = vld [vmem:[%s55] sm:$0xff]
    %v540 = vld [vmem:[%s55 + $0x8] sm:$0xff]
    %v541 = vld [vmem:[%s55 + $0x10] sm:$0xff]
    %v542 = vld [vmem:[%s55 + $0x18] sm:$0xff]
    %v543 = vld [vmem:[%s55 + $0x20] sm:$0xff]
    %v544 = vld [vmem:[%s55 + $0x28] sm:$0xff]
    %v545 = vld [vmem:[%s55 + $0x30] sm:$0xff]
    %v546 = vld [vmem:[%s55 + $0x38] sm:$0xff]
    %v547 = vld [vmem:[%s55 + $0x40] sm:$0xff]
    %v548 = vld [vmem:[%s55 + $0x48] sm:$0xff]
    %v549 = vld [vmem:[%s55 + $0x50] sm:$0xff]
    %v550 = vld [vmem:[%s55 + $0x58] sm:$0xff]
    %v551 = vld [vmem:[%s55 + $0x60] sm:$0xff]
    %v552 = vld [vmem:[%s55 + $0x68] sm:$0xff]
    %v553 = vld [vmem:[%s55 + $0x70] sm:$0xff]
    %v554 = vld [vmem:[%s55 + $0x78] sm:$0xff]
    %v555 = vld [vmem:[%s57] sm:$0xf]
    %v556 = vld [vmem:[%s11] sm:$0xff]
    %v557 = vld [vmem:[%s11 + $0x8] sm:$0xff]
    %v558 = vld [vmem:[%s11 + $0x10] sm:$0xff]
    %v559 = vld [vmem:[%s11 + $0x18] sm:$0xff]
    %v560 = vld [vmem:[%s11 + $0x20] sm:$0xff]
    %v561 = vld [vmem:[%s11 + $0x28] sm:$0xff]
    %v562 = vld [vmem:[%s11 + $0x30] sm:$0xff]
    %v563 = vld [vmem:[%s11 + $0x38] sm:$0xff]
    %v564 = vld [vmem:[#allocation10] sm:$0x3]
    %v566 = vlaneseq
    %v567 = vshrl.u32 %v566, 7
    %v568 = vsub.s32 0, %v567
    %v569 = vrot.slane %v564, %v568
    %v570 = vlaneseq
    %v571 = vshrl.u32 %v570, 7
    %v572 = vsub.s32 1, %v571
    %v573 = vrot.slane %v564, %v572
    %vm576 = vcmask 261120
    %v578 = vsel %vm576, %v499, 0
    %v581 = vsel %vm576, %v504, 0
    %583 = vmatprep.subr.mxu0 %v557
    %584 = vmatpush1.msra.mxu0 %v556
    %585 = vmatprep.subr.mxu0 %v559
    %586 = vmatpush1.msra.mxu0 %v558
    %587 = vmatprep.subr.mxu0 %v561
    %588 = vmatpush1.msra.mxu0 %v560
    %589 = vmatprep.subr.mxu0 %v563
    %590 = vmatpush1.msra.mxu0 %v562
    %591 = vmatprep.subr.mxu0 0.0
    %592 = vmatpush1.msra.mxu0 0.0
    %593 = vmatprep.subr.mxu0 0.0
    %594 = vmatpush1.msra.mxu0 0.0
    %595 = vmatprep.subr.mxu0 0.0
    %596 = vmatpush1.msra.mxu0 0.0
    %597 = vmatprep.subr.mxu0 0.0
    %598 = vmatpush1.msra.mxu0 0.0
    %599 = vmatprep.subr.mxu0 0.0
    %600 = vmatpush1.msra.mxu0 0.0
    %601 = vmatprep.subr.mxu0 0.0
    %602 = vmatpush1.msra.mxu0 0.0
    %603 = vmatprep.subr.mxu0 0.0
    %604 = vmatpush1.msra.mxu0 0.0
    %605 = vmatprep.subr.mxu0 0.0
    %606 = vmatpush1.msra.mxu0 0.0
    %607 = vmatprep.subr.mxu0 0.0
    %608 = vmatpush1.msra.mxu0 0.0
    %609 = vmatprep.subr.mxu0 0.0
    %610 = vmatpush1.msra.mxu0 0.0
    %611 = vmatprep.subr.mxu0 0.0
    %612 = vmatpush1.msra.mxu0 0.0
    %613 = vmatprep.subr.mxu0 0.0
    %614 = vmatpush1.msra.mxu0 0.0
    %615 = vmatprep.subr.mxu0 0.0
    %616 = vmatpush1.msra.mxu0 0.0
    %617 = vmatprep.subr.mxu0 0.0
    %618 = vmatpush1.msra.mxu0 0.0
    %619 = vmatprep.subr.mxu0 0.0
    %620 = vmatpush1.msra.mxu0 0.0
    %621 = vmatprep.subr.mxu0 0.0
    %622 = vmatpush1.msra.mxu0 0.0
    %623 = vmatprep.subr.mxu0 0.0
    %624 = vmatpush1.msra.mxu0 0.0
    %625 = vmatprep.subr.mxu0 0.0
    %626 = vmatpush1.msra.mxu0 0.0
    %627 = vmatprep.subr.mxu0 0.0
    %628 = vmatpush1.msra.mxu0 0.0
    %629 = vmatprep.subr.mxu0 0.0
    %630 = vmatpush1.msra.mxu0 0.0
    %631 = vmatprep.subr.mxu0 0.0
    %632 = vmatpush1.msra.mxu0 0.0
    %633 = vmatprep.subr.mxu0 0.0
    %634 = vmatpush1.msra.mxu0 0.0
    %635 = vmatprep.subr.mxu0 0.0
    %636 = vmatpush1.msra.mxu0 0.0
    %637 = vmatprep.subr.mxu0 0.0
    %638 = vmatpush1.msra.mxu0 0.0
    %639 = vmatprep.subr.mxu0 0.0
    %640 = vmatpush1.msra.mxu0 0.0
    %641 = vmatprep.subr.mxu0 0.0
    %642 = vmatpush1.msra.mxu0 0.0
    %643 = vmatprep.subr.mxu0 0.0
    %644 = vmatpush1.msra.mxu0 0.0
    %645 = vmatprep.subr.mxu0 0.0
    %646 = vmatpush1.msra.mxu0 0.0
    %647 = vmatprep.mubr.f32.mxu0 0.0
    %648 = vmatmul.mubr.f32.gmra.mrb[0].mxu0 %v578
    %v649 = vpop.f32.mrb[0].mxu0
    %v650 = vadd.f32 %v569, %v649
    %v651 = vpop.f32.mrb[0].mxu0
    %v652 = vadd.f32 %v573, %v651
    %653 = vmatprep.mubr.f32.mxu0 0.0
    %654 = vmatmul.mubr.f32.gmra.mrb[0].mxu0 %v581
    %v655 = vpop.f32.mrb[0].mxu0
    %v656 = vadd.f32 %v569, %v655
    %v657 = vpop.f32.mrb[0].mxu0
    %v658 = vadd.f32 %v573, %v657
    %659 = vdwg.mxu0
    %v660 = vmax.f32 %v650, 0.0
    %v661 = vmax.f32 %v656, 0.0
    %v662 = vld [vmem:[%s15] sm:$0xff]
    %v663 = vld [vmem:[%s15 + $0x8] sm:$0xff]
    %v664 = vld [vmem:[%s15 + $0x10] sm:$0xff]
    %v665 = vld [vmem:[%s15 + $0x18] sm:$0xff]
    %v666 = vld [vmem:[%s15 + $0x20] sm:$0xff]
    %v667 = vld [vmem:[%s15 + $0x28] sm:$0xff]
    %v668 = vld [vmem:[%s15 + $0x30] sm:$0xff]
    %v669 = vld [vmem:[%s15 + $0x38] sm:$0xff]
    %v670 = vld [vmem:[%s15 + $0x40] sm:$0xff]
    %v671 = vld [vmem:[%s15 + $0x48] sm:$0xff]
    %v672 = vld [vmem:[%s15 + $0x50] sm:$0xff]
    %v673 = vld [vmem:[%s15 + $0x58] sm:$0xff]
    %v674 = vld [vmem:[%s15 + $0x60] sm:$0xff]
    %v675 = vld [vmem:[%s15 + $0x68] sm:$0xff]
    %v676 = vld [vmem:[%s15 + $0x70] sm:$0xff]
    %v677 = vld [vmem:[%s15 + $0x78] sm:$0xff]
    %v678 = vld [vmem:[#allocation11] sm:$0x1]
    %v680 = vlaneseq
    %v681 = vshrl.u32 %v680, 7
    %v682 = vsub.s32 0, %v681
    %v683 = vrot.slane %v678, %v682
    %685 = vmatprep.subr.mxu0 0.0
    %686 = vmatpush1.msra.mxu0 %v662
    %687 = vmatprep.subr.mxu0 0.0
    %688 = vmatpush1.msra.mxu0 %v663
    %689 = vmatprep.subr.mxu0 0.0
    %690 = vmatpush1.msra.mxu0 %v664
    %691 = vmatprep.subr.mxu0 0.0
    %692 = vmatpush1.msra.mxu0 %v665
    %693 = vmatprep.subr.mxu0 0.0
    %694 = vmatpush1.msra.mxu0 %v666
    %695 = vmatprep.subr.mxu0 0.0
    %696 = vmatpush1.msra.mxu0 %v667
    %697 = vmatprep.subr.mxu0 0.0
    %698 = vmatpush1.msra.mxu0 %v668
    %699 = vmatprep.subr.mxu0 0.0
    %700 = vmatpush1.msra.mxu0 %v669
    %701 = vmatprep.subr.mxu0 0.0
    %702 = vmatpush1.msra.mxu0 %v670
    %703 = vmatprep.subr.mxu0 0.0
    %704 = vmatpush1.msra.mxu0 %v671
    %705 = vmatprep.subr.mxu0 0.0
    %706 = vmatpush1.msra.mxu0 %v672
    %707 = vmatprep.subr.mxu0 0.0
    %708 = vmatpush1.msra.mxu0 %v673
    %709 = vmatprep.subr.mxu0 0.0
    %710 = vmatpush1.msra.mxu0 %v674
    %711 = vmatprep.subr.mxu0 0.0
    %712 = vmatpush1.msra.mxu0 %v675
    %713 = vmatprep.subr.mxu0 0.0
    %714 = vmatpush1.msra.mxu0 %v676
    %715 = vmatprep.subr.mxu0 0.0
    %716 = vmatpush1.msra.mxu0 %v677
    %717 = vmatprep.subr.mxu0 0.0
    %718 = vmatpush1.msra.mxu0 0.0
    %719 = vmatprep.subr.mxu0 0.0
    %720 = vmatpush1.msra.mxu0 0.0
    %721 = vmatprep.subr.mxu0 0.0
    %722 = vmatpush1.msra.mxu0 0.0
    %723 = vmatprep.subr.mxu0 0.0
    %724 = vmatpush1.msra.mxu0 0.0
    %725 = vmatprep.subr.mxu0 0.0
    %726 = vmatpush1.msra.mxu0 0.0
    %727 = vmatprep.subr.mxu0 0.0
    %728 = vmatpush1.msra.mxu0 0.0
    %729 = vmatprep.subr.mxu0 0.0
    %730 = vmatpush1.msra.mxu0 0.0
    %731 = vmatprep.subr.mxu0 0.0
    %732 = vmatpush1.msra.mxu0 0.0
    %733 = vmatprep.subr.mxu0 0.0
    %734 = vmatpush1.msra.mxu0 0.0
    %735 = vmatprep.subr.mxu0 0.0
    %736 = vmatpush1.msra.mxu0 0.0
    %737 = vmatprep.subr.mxu0 0.0
    %738 = vmatpush1.msra.mxu0 0.0
    %739 = vmatprep.subr.mxu0 0.0
    %740 = vmatpush1.msra.mxu0 0.0
    %741 = vmatprep.subr.mxu0 0.0
    %742 = vmatpush1.msra.mxu0 0.0
    %743 = vmatprep.subr.mxu0 0.0
    %744 = vmatpush1.msra.mxu0 0.0
    %745 = vmatprep.subr.mxu0 0.0
    %746 = vmatpush1.msra.mxu0 0.0
    %747 = vmatprep.subr.mxu0 0.0
    %748 = vmatpush1.msra.mxu0 0.0
    %749 = vmatprep.mubr.f32.mxu0 0.0
    %750 = vmatmul.mubr.f32.gmra.mrb[0].mxu0 %v660
    %v751 = vpop.f32.mrb[0].mxu0
    %v752 = vadd.f32 %v683, %v751
    %v753 = vpop.f32.mrb[0].mxu0
    %754 = vmatprep.mubr.f32.mxu0 0.0
    %755 = vmatmul.mubr.f32.gmra.mrb[0].mxu0 %v661
    %v756 = vpop.f32.mrb[0].mxu0
    %v757 = vadd.f32 %v683, %v756
    %v758 = vpop.f32.mrb[0].mxu0
    %759 = vdwg.mxu0
    %v760 = vrot.slane %v652, 4
    %v761 = vmax.f32 %v652, %v760
    %v762 = vrot.slane %v761, 2
    %v763 = vmax.f32 %v761, %v762
    %v764 = vrot.slane %v763, 1
    %v765 = vmax.f32 %v763, %v764
    %v766 = vrot.slane %v658, 4
    %v767 = vmax.f32 %v658, %v766
    %v768 = vrot.slane %v767, 2
    %v769 = vmax.f32 %v767, %v768
    %v770 = vrot.slane %v769, 1
    %v771 = vmax.f32 %v769, %v770
    %v772 = vsub.f32 %v652, %v765
    %v773 = vsub.f32 %v658, %v771
    %v774 = vmul.f32 %v772, 1.442695
    %v775 = vpow.pop %v774
    %v776 = vmul.f32 %v773, 1.442695
    %v777 = vpow.pop %v776
    %v778 = vrot.slane %v775, 4
    %v779 = vadd.f32 %v775, %v778
    %v780 = vrot.slane %v779, 2
    %v781 = vadd.f32 %v779, %v780
    %v782 = vrot.slane %v781, 1
    %v783 = vadd.f32 %v781, %v782
    %v784 = vrot.slane %v777, 4
    %v785 = vadd.f32 %v777, %v784
    %v786 = vrot.slane %v785, 2
    %v787 = vadd.f32 %v785, %v786
    %v788 = vrot.slane %v787, 1
    %v789 = vadd.f32 %v787, %v788
    %v790 = vrcp.pop %v783
    %v791 = vrcp.pop %v789
    %v792 = vmul.f32 %v775, %v790
    %v793 = vmul.f32 %v777, %v791
    %794 = vmatprep.subr.mxu0 0.0
    %795 = vmatpush1.msra.mxu0 %v507
    %796 = vmatprep.subr.mxu0 0.0
    %797 = vmatpush1.msra.mxu0 %v508
    %798 = vmatprep.subr.mxu0 0.0
    %799 = vmatpush1.msra.mxu0 %v509
    %800 = vmatprep.subr.mxu0 0.0
    %801 = vmatpush1.msra.mxu0 %v510
    %802 = vmatprep.subr.mxu0 0.0
    %803 = vmatpush1.msra.mxu0 %v511
    %804 = vmatprep.subr.mxu0 0.0
    %805 = vmatpush1.msra.mxu0 %v512
    %806 = vmatprep.subr.mxu0 0.0
    %807 = vmatpush1.msra.mxu0 %v513
    %808 = vmatprep.subr.mxu0 0.0
    %809 = vmatpush1.msra.mxu0 %v514
    %810 = vmatprep.subr.mxu0 0.0
    %811 = vmatpush1.msra.mxu0 %v515
    %812 = vmatprep.subr.mxu0 0.0
    %813 = vmatpush1.msra.mxu0 %v516
    %814 = vmatprep.subr.mxu0 0.0
    %815 = vmatpush1.msra.mxu0 %v517
    %816 = vmatprep.subr.mxu0 0.0
    %817 = vmatpush1.msra.mxu0 %v518
    %818 = vmatprep.subr.mxu0 0.0
    %819 = vmatpush1.msra.mxu0 %v519
    %820 = vmatprep.subr.mxu0 0.0
    %821 = vmatpush1.msra.mxu0 %v520
    %822 = vmatprep.subr.mxu0 0.0
    %823 = vmatpush1.msra.mxu0 %v521
    %824 = vmatprep.subr.mxu0 0.0
    %825 = vmatpush1.msra.mxu0 %v522
    %826 = vmatprep.subr.mxu0 0.0
    %827 = vmatpush1.msra.mxu0 0.0
    %828 = vmatprep.subr.mxu0 0.0
    %829 = vmatpush1.msra.mxu0 0.0
    %830 = vmatprep.subr.mxu0 0.0
    %831 = vmatpush1.msra.mxu0 0.0
    %832 = vmatprep.subr.mxu0 0.0
    %833 = vmatpush1.msra.mxu0 0.0
    %834 = vmatprep.subr.mxu0 0.0
    %835 = vmatpush1.msra.mxu0 0.0
    %836 = vmatprep.subr.mxu0 0.0
    %837 = vmatpush1.msra.mxu0 0.0
    %838 = vmatprep.subr.mxu0 0.0
    %839 = vmatpush1.msra.mxu0 0.0
    %840 = vmatprep.subr.mxu0 0.0
    %841 = vmatpush1.msra.mxu0 0.0
    %842 = vmatprep.subr.mxu0 0.0
    %843 = vmatpush1.msra.mxu0 0.0
    %844 = vmatprep.subr.mxu0 0.0
    %845 = vmatpush1.msra.mxu0 0.0
    %846 = vmatprep.subr.mxu0 0.0
    %847 = vmatpush1.msra.mxu0 0.0
    %848 = vmatprep.subr.mxu0 0.0
    %849 = vmatpush1.msra.mxu0 0.0
    %850 = vmatprep.subr.mxu0 0.0
    %851 = vmatpush1.msra.mxu0 0.0
    %852 = vmatprep.subr.mxu0 0.0
    %853 = vmatpush1.msra.mxu0 0.0
    %854 = vmatprep.subr.mxu0 0.0
    %855 = vmatpush1.msra.mxu0 0.0
    %856 = vmatprep.subr.mxu0 0.0
    %857 = vmatpush1.msra.mxu0 0.0
    %858 = vmatprep.mubr.f32.mxu0 0.0
    %859 = vmatmul.mubr.f32.gmra.mrb[0].mxu0 %v792
    %v860 = vpop.f32.mrb[0].mxu0
    %v861 = vadd.f32 0.0, %v860
    %v862 = vpop.f32.mrb[0].mxu0
    %863 = vmatprep.mubr.f32.mxu0 0.0
    %864 = vmatmul.mubr.f32.gmra.mrb[0].mxu0 %v793
    %v865 = vpop.f32.mrb[0].mxu0
    %v866 = vadd.f32 0.0, %v865
    %v867 = vpop.f32.mrb[0].mxu0
    %868 = vdwg.mxu0
    %v869 = vmul.f32 %v861, %v752
    %v870 = vmul.f32 %v866, %v757
    %871 = vmatprep.subr.mxu0 0.0
    %872 = vmatpush1.msra.mxu0 %v523
    %873 = vmatprep.subr.mxu0 0.0
    %874 = vmatpush1.msra.mxu0 %v524
    %875 = vmatprep.subr.mxu0 0.0
    %876 = vmatpush1.msra.mxu0 %v525
    %877 = vmatprep.subr.mxu0 0.0
    %878 = vmatpush1.msra.mxu0 %v526
    %879 = vmatprep.subr.mxu0 0.0
    %880 = vmatpush1.msra.mxu0 %v527
    %881 = vmatprep.subr.mxu0 0.0
    %882 = vmatpush1.msra.mxu0 %v528
    %883 = vmatprep.subr.mxu0 0.0
    %884 = vmatpush1.msra.mxu0 %v529
    %885 = vmatprep.subr.mxu0 0.0
    %886 = vmatpush1.msra.mxu0 %v530
    %887 = vmatprep.subr.mxu0 0.0
    %888 = vmatpush1.msra.mxu0 %v531
    %889 = vmatprep.subr.mxu0 0.0
    %890 = vmatpush1.msra.mxu0 %v532
    %891 = vmatprep.subr.mxu0 0.0
    %892 = vmatpush1.msra.mxu0 %v533
    %893 = vmatprep.subr.mxu0 0.0
    %894 = vmatpush1.msra.mxu0 %v534
    %895 = vmatprep.subr.mxu0 0.0
    %896 = vmatpush1.msra.mxu0 %v535
    %897 = vmatprep.subr.mxu0 0.0
    %898 = vmatpush1.msra.mxu0 %v536
    %899 = vmatprep.subr.mxu0 0.0
    %900 = vmatpush1.msra.mxu0 %v537
    %901 = vmatprep.subr.mxu0 0.0
    %902 = vmatpush1.msra.mxu0 %v538
    %903 = vmatprep.subr.mxu0 0.0
    %904 = vmatpush1.msra.mxu0 0.0
    %905 = vmatprep.subr.mxu0 0.0
    %906 = vmatpush1.msra.mxu0 0.0
    %907 = vmatprep.subr.mxu0 0.0
    %908 = vmatpush1.msra.mxu0 0.0
    %909 = vmatprep.subr.mxu0 0.0
    %910 = vmatpush1.msra.mxu0 0.0
    %911 = vmatprep.subr.mxu0 0.0
    %912 = vmatpush1.msra.mxu0 0.0
    %913 = vmatprep.subr.mxu0 0.0
    %914 = vmatpush1.msra.mxu0 0.0
    %915 = vmatprep.subr.mxu0 0.0
    %916 = vmatpush1.msra.mxu0 0.0
    %917 = vmatprep.subr.mxu0 0.0
    %918 = vmatpush1.msra.mxu0 0.0
    %919 = vmatprep.subr.mxu0 0.0
    %920 = vmatpush1.msra.mxu0 0.0
    %921 = vmatprep.subr.mxu0 0.0
    %922 = vmatpush1.msra.mxu0 0.0
    %923 = vmatprep.subr.mxu0 0.0
    %924 = vmatpush1.msra.mxu0 0.0
    %925 = vmatprep.subr.mxu0 0.0
    %926 = vmatpush1.msra.mxu0 0.0
    %927 = vmatprep.subr.mxu0 0.0
    %928 = vmatpush1.msra.mxu0 0.0
    %929 = vmatprep.subr.mxu0 0.0
    %930 = vmatpush1.msra.mxu0 0.0
    %931 = vmatprep.subr.mxu0 0.0
    %932 = vmatpush1.msra.mxu0 0.0
    %933 = vmatprep.subr.mxu0 0.0
    %934 = vmatpush1.msra.mxu0 0.0
    %935 = vmatprep.mubr.f32.mxu0 0.0
    %936 = vmatmul.mubr.f32.gmra.mrb[0].mxu0 %v869
    %v937 = vpop.f32.mrb[0].mxu0
    %v938 = vadd.f32 0.0, %v937
    %v939 = vpop.f32.mrb[0].mxu0
    %940 = vmatprep.mubr.f32.mxu0 0.0
    %941 = vmatmul.mubr.f32.gmra.mrb[0].mxu0 %v870
    %v942 = vpop.f32.mrb[0].mxu0
    %v943 = vadd.f32 0.0, %v942
    %v944 = vpop.f32.mrb[0].mxu0
    %945 = vdwg.mxu0
    %v946 = vadd.f32 %v499, %v938
    %v947 = vadd.f32 %v504, %v943
    %v948 = vld [vmem:[#allocation13] sm:$0x1]
    %v949 = vld [vmem:[#allocation14] sm:$0x1]
    %v950 = vsel %vm576, %v946, 0.0
    %951 = vadd.xlane.f32.xlu0 %v950
    %v952 = vpop.xlane.xlu0 %951
    %v953 = vsel %vm576, %v947, 0.0
    %954 = vadd.xlane.f32.xlu0 %v953
    %v955 = vpop.xlane.xlu0 %954
    %v956 = vrcp.pop 32.0
    %v957 = vmul.f32 %v952, %v956
    %v958 = vmul.f32 %v955, %v956
    %v959 = vsub.f32 %v946, %v957
    %v960 = vsub.f32 %v947, %v958
    %v961 = vmul.f32 %v959, %v959
    %v962 = vmul.f32 %v960, %v960
    %v963 = vsel %vm576, %v961, 0.0
    %964 = vadd.xlane.f32.xlu0 %v963
    %v965 = vpop.xlane.xlu0 %964
    %v966 = vsel %vm576, %v962, 0.0
    %967 = vadd.xlane.f32.xlu0 %v966
    %v968 = vpop.xlane.xlu0 %967
    %v969 = vmul.f32 %v965, %v956
    %v970 = vmul.f32 %v968, %v956
    %v971 = vadd.f32 %v969, 1e-05
    %v972 = vadd.f32 %v970, 1e-05
    %v973 = vrsqrt.pop %v971
    %v974 = vrsqrt.pop %v972
    %v975 = vmul.f32 %v959, %v973
    %v976 = vmul.f32 %v960, %v974
    %v978 = vlaneseq
    %v979 = vshrl.u32 %v978, 7
    %v980 = vsub.s32 0, %v979
    %v981 = vrot.slane %v948, %v980
    %v983 = vmul.f32 %v975, %v981
    %v984 = vmul.f32 %v976, %v981
    %v986 = vlaneseq
    %v987 = vshrl.u32 %v986, 7
    %v988 = vsub.s32 0, %v987
    %v989 = vrot.slane %v949, %v988
    %v991 = vadd.f32 %v983, %v989
    %v992 = vadd.f32 %v984, %v989
    %v993 = vld [vmem:[%s23] sm:$0xff]
    %v994 = vld [vmem:[%s23 + $0x8] sm:$0xff]
    %v995 = vld [vmem:[%s23 + $0x10] sm:$0xff]
    %v996 = vld [vmem:[%s23 + $0x18] sm:$0xff]
    %v997 = vld [vmem:[%s23 + $0x20] sm:$0xff]
    %v998 = vld [vmem:[%s23 + $0x28] sm:$0xff]
    %v999 = vld [vmem:[%s23 + $0x30] sm:$0xff]
    %v1000 = vld [vmem:[%s23 + $0x38] sm:$0xff]
    %v1001 = vld [vmem:[%s23 + $0x40] sm:$0xff]
    %v1002 = vld [vmem:[%s23 + $0x48] sm:$0xff]
    %v1003 = vld [vmem:[%s23 + $0x50] sm:$0xff]
    %v1004 = vld [vmem:[%s23 + $0x58] sm:$0xff]
    %v1005 = vld [vmem:[#allocation16] sm:$0x7]
    %v1007 = vlaneseq
    %v1008 = vshrl.u32 %v1007, 7
    %v1009 = vsub.s32 0, %v1008
    %v1010 = vrot.slane %v1005, %v1009
    %v1011 = vlaneseq
    %v1012 = vshrl.u32 %v1011, 7
    %v1013 = vsub.s32 1, %v1012
    %v1014 = vrot.slane %v1005, %v1013
    %v1015 = vlaneseq
    %v1016 = vshrl.u32 %v1015, 7
    %v1017 = vsub.s32 2, %v1016
    %v1018 = vrot.slane %v1005, %v1017
    %v1023 = vsel %vm576, %v991, 0
    %v1026 = vsel %vm576, %v992, 0
    %1028 = vmatprep.subr.mxu0 %v994
    %1029 = vmatpush1.msra.mxu0 %v993
    %1030 = vmatprep.subr.mxu0 %v997
    %1031 = vmatpush1.msra.mxu0 %v996
    %1032 = vmatprep.subr.mxu0 %v1000
    %1033 = vmatpush1.msra.mxu0 %v999
    %1034 = vmatprep.subr.mxu0 %v1003
    %1035 = vmatpush1.msra.mxu0 %v1002
    %1036 = vmatprep.subr.mxu0 0.0
    %1037 = vmatpush1.msra.mxu0 0.0
    %1038 = vmatprep.subr.mxu0 0.0
    %1039 = vmatpush1.msra.mxu0 0.0
    %1040 = vmatprep.subr.mxu0 0.0
    %1041 = vmatpush1.msra.mxu0 0.0
    %1042 = vmatprep.subr.mxu0 0.0
    %1043 = vmatpush1.msra.mxu0 0.0
    %1044 = vmatprep.subr.mxu0 0.0
    %1045 = vmatpush1.msra.mxu0 0.0
    %1046 = vmatprep.subr.mxu0 0.0
    %1047 = vmatpush1.msra.mxu0 0.0
    %1048 = vmatprep.subr.mxu0 0.0
    %1049 = vmatpush1.msra.mxu0 0.0
    %1050 = vmatprep.subr.mxu0 0.0
    %1051 = vmatpush1.msra.mxu0 0.0
    %1052 = vmatprep.subr.mxu0 0.0
    %1053 = vmatpush1.msra.mxu0 0.0
    %1054 = vmatprep.subr.mxu0 0.0
    %1055 = vmatpush1.msra.mxu0 0.0
    %1056 = vmatprep.subr.mxu0 0.0
    %1057 = vmatpush1.msra.mxu0 0.0
    %1058 = vmatprep.subr.mxu0 0.0
    %1059 = vmatpush1.msra.mxu0 0.0
    %1060 = vmatprep.subr.mxu0 0.0
    %1061 = vmatpush1.msra.mxu0 0.0
    %1062 = vmatprep.subr.mxu0 0.0
    %1063 = vmatpush1.msra.mxu0 0.0
    %1064 = vmatprep.subr.mxu0 0.0
    %1065 = vmatpush1.msra.mxu0 0.0
    %1066 = vmatprep.subr.mxu0 0.0
    %1067 = vmatpush1.msra.mxu0 0.0
    %1068 = vmatprep.subr.mxu0 0.0
    %1069 = vmatpush1.msra.mxu0 0.0
    %1070 = vmatprep.subr.mxu0 0.0
    %1071 = vmatpush1.msra.mxu0 0.0
    %1072 = vmatprep.subr.mxu0 0.0
    %1073 = vmatpush1.msra.mxu0 0.0
    %1074 = vmatprep.subr.mxu0 0.0
    %1075 = vmatpush1.msra.mxu0 0.0
    %1076 = vmatprep.subr.mxu0 0.0
    %1077 = vmatpush1.msra.mxu0 0.0
    %1078 = vmatprep.subr.mxu0 0.0
    %1079 = vmatpush1.msra.mxu0 0.0
    %1080 = vmatprep.subr.mxu0 0.0
    %1081 = vmatpush1.msra.mxu0 0.0
    %1082 = vmatprep.subr.mxu0 0.0
    %1083 = vmatpush1.msra.mxu0 0.0
    %1084 = vmatprep.subr.mxu0 0.0
    %1085 = vmatpush1.msra.mxu0 0.0
    %1086 = vmatprep.subr.mxu0 0.0
    %1087 = vmatpush1.msra.mxu0 0.0
    %1088 = vmatprep.subr.mxu0 0.0
    %1089 = vmatpush1.msra.mxu0 0.0
    %1090 = vmatprep.subr.mxu0 0.0
    %1091 = vmatpush1.msra.mxu0 0.0
    %1092 = vmatprep.mubr.f32.mxu0 0.0
    %1093 = vmatmul.mubr.f32.gmra.mrb[0].mxu0 %v1023
    %v1094 = vpop.f32.mrb[0].mxu0
    %v1095 = vadd.f32 %v1010, %v1094
    %v1096 = vpop.f32.mrb[0].mxu0
    %v1097 = vadd.f32 %v1014, %v1096
    %1098 = vmatprep.mubr.f32.mxu0 0.0
    %1099 = vmatmul.mubr.f32.gmra.mrb[0].mxu0 %v1026
    %v1100 = vpop.f32.mrb[0].mxu0
    %v1101 = vadd.f32 %v1010, %v1100
    %v1102 = vpop.f32.mrb[0].mxu0
    %v1103 = vadd.f32 %v1014, %v1102
    %1104 = vdwg.mxu0
    %1105 = vmatprep.subr.mxu0 0.0
    %1106 = vmatpush1.msra.mxu0 %v995
    %1107 = vmatprep.subr.mxu0 0.0
    %1108 = vmatpush1.msra.mxu0 %v998
    %1109 = vmatprep.subr.mxu0 0.0
    %1110 = vmatpush1.msra.mxu0 %v1001
    %1111 = vmatprep.subr.mxu0 0.0
    %1112 = vmatpush1.msra.mxu0 %v1004
    %1113 = vmatprep.subr.mxu0 0.0
    %1114 = vmatpush1.msra.mxu0 0.0
    %1115 = vmatprep.subr.mxu0 0.0
    %1116 = vmatpush1.msra.mxu0 0.0
    %1117 = vmatprep.subr.mxu0 0.0
    %1118 = vmatpush1.msra.mxu0 0.0
    %1119 = vmatprep.subr.mxu0 0.0
    %1120 = vmatpush1.msra.mxu0 0.0
    %1121 = vmatprep.subr.mxu0 0.0
    %1122 = vmatpush1.msra.mxu0 0.0
    %1123 = vmatprep.subr.mxu0 0.0
    %1124 = vmatpush1.msra.mxu0 0.0
    %1125 = vmatprep.subr.mxu0 0.0
    %1126 = vmatpush1.msra.mxu0 0.0
    %1127 = vmatprep.subr.mxu0 0.0
    %1128 = vmatpush1.msra.mxu0 0.0
    %1129 = vmatprep.subr.mxu0 0.0
    %1130 = vmatpush1.msra.mxu0 0.0
    %1131 = vmatprep.subr.mxu0 0.0
    %1132 = vmatpush1.msra.mxu0 0.0
    %1133 = vmatprep.subr.mxu0 0.0
    %1134 = vmatpush1.msra.mxu0 0.0
    %1135 = vmatprep.subr.mxu0 0.0
    %1136 = vmatpush1.msra.mxu0 0.0
    %1137 = vmatprep.subr.mxu0 0.0
    %1138 = vmatpush1.msra.mxu0 0.0
    %1139 = vmatprep.subr.mxu0 0.0
    %1140 = vmatpush1.msra.mxu0 0.0
    %1141 = vmatprep.subr.mxu0 0.0
    %1142 = vmatpush1.msra.mxu0 0.0
    %1143 = vmatprep.subr.mxu0 0.0
    %1144 = vmatpush1.msra.mxu0 0.0
    %1145 = vmatprep.subr.mxu0 0.0
    %1146 = vmatpush1.msra.mxu0 0.0
    %1147 = vmatprep.subr.mxu0 0.0
    %1148 = vmatpush1.msra.mxu0 0.0
    %1149 = vmatprep.subr.mxu0 0.0
    %1150 = vmatpush1.msra.mxu0 0.0
    %1151 = vmatprep.subr.mxu0 0.0
    %1152 = vmatpush1.msra.mxu0 0.0
    %1153 = vmatprep.subr.mxu0 0.0
    %1154 = vmatpush1.msra.mxu0 0.0
    %1155 = vmatprep.subr.mxu0 0.0
    %1156 = vmatpush1.msra.mxu0 0.0
    %1157 = vmatprep.subr.mxu0 0.0
    %1158 = vmatpush1.msra.mxu0 0.0
    %1159 = vmatprep.subr.mxu0 0.0
    %1160 = vmatpush1.msra.mxu0 0.0
    %1161 = vmatprep.subr.mxu0 0.0
    %1162 = vmatpush1.msra.mxu0 0.0
    %1163 = vmatprep.subr.mxu0 0.0
    %1164 = vmatpush1.msra.mxu0 0.0
    %1165 = vmatprep.subr.mxu0 0.0
    %1166 = vmatpush1.msra.mxu0 0.0
    %1167 = vmatprep.subr.mxu0 0.0
    %1168 = vmatpush1.msra.mxu0 0.0
    %1169 = vmatprep.mubr.f32.mxu0 0.0
    %1170 = vmatmul.mubr.f32.gmra.mrb[0].mxu0 %v1023
    %v1171 = vpop.f32.mrb[0].mxu0
    %v1172 = vadd.f32 %v1018, %v1171
    %v1173 = vpop.f32.mrb[0].mxu0
    %1174 = vmatprep.mubr.f32.mxu0 0.0
    %1175 = vmatmul.mubr.f32.gmra.mrb[0].mxu0 %v1026
    %v1176 = vpop.f32.mrb[0].mxu0
    %v1177 = vadd.f32 %v1018, %v1176
    %v1178 = vpop.f32.mrb[0].mxu0
    %1179 = vdwg.mxu0
    %v1180 = vmul.f32 %v1095, %v1097
    %v1181 = vmul.f32 %v1101, %v1103
    %v1182 = vmul.f32 %v1095, %v1103
    %v1183 = vmul.f32 %v1101, %v1097
    %1184 = vmatprep.subr.mxu0 0.0
    %1185 = vmatpush1.msra.mxu0 %v539
    %1186 = vmatprep.subr.mxu0 0.0
    %1187 = vmatpush1.msra.mxu0 %v540
    %1188 = vmatprep.subr.mxu0 0.0
    %1189 = vmatpush1.msra.mxu0 %v541
    %1190 = vmatprep.subr.mxu0 0.0
    %1191 = vmatpush1.msra.mxu0 %v542
    %1192 = vmatprep.subr.mxu0 0.0
    %1193 = vmatpush1.msra.mxu0 %v543
    %1194 = vmatprep.subr.mxu0 0.0
    %1195 = vmatpush1.msra.mxu0 %v544
    %1196 = vmatprep.subr.mxu0 0.0
    %1197 = vmatpush1.msra.mxu0 %v545
    %1198 = vmatprep.subr.mxu0 0.0
    %1199 = vmatpush1.msra.mxu0 %v546
    %1200 = vmatprep.subr.mxu0 0.0
    %1201 = vmatpush1.msra.mxu0 %v547
    %1202 = vmatprep.subr.mxu0 0.0
    %1203 = vmatpush1.msra.mxu0 %v548
    %1204 = vmatprep.subr.mxu0 0.0
    %1205 = vmatpush1.msra.mxu0 %v549
    %1206 = vmatprep.subr.mxu0 0.0
    %1207 = vmatpush1.msra.mxu0 %v550
    %1208 = vmatprep.subr.mxu0 0.0
    %1209 = vmatpush1.msra.mxu0 %v551
    %1210 = vmatprep.subr.mxu0 0.0
    %1211 = vmatpush1.msra.mxu0 %v552
    %1212 = vmatprep.subr.mxu0 0.0
    %1213 = vmatpush1.msra.mxu0 %v553
    %1214 = vmatprep.subr.mxu0 0.0
    %1215 = vmatpush1.msra.mxu0 %v554
    %1216 = vmatprep.subr.mxu0 0.0
    %1217 = vmatpush1.msra.mxu0 0.0
    %1218 = vmatprep.subr.mxu0 0.0
    %1219 = vmatpush1.msra.mxu0 0.0
    %1220 = vmatprep.subr.mxu0 0.0
    %1221 = vmatpush1.msra.mxu0 0.0
    %1222 = vmatprep.subr.mxu0 0.0
    %1223 = vmatpush1.msra.mxu0 0.0
    %1224 = vmatprep.subr.mxu0 0.0
    %1225 = vmatpush1.msra.mxu0 0.0
    %1226 = vmatprep.subr.mxu0 0.0
    %1227 = vmatpush1.msra.mxu0 0.0
    %1228 = vmatprep.subr.mxu0 0.0
    %1229 = vmatpush1.msra.mxu0 0.0
    %1230 = vmatprep.subr.mxu0 0.0
    %1231 = vmatpush1.msra.mxu0 0.0
    %1232 = vmatprep.subr.mxu0 0.0
    %1233 = vmatpush1.msra.mxu0 0.0
    %1234 = vmatprep.subr.mxu0 0.0
    %1235 = vmatpush1.msra.mxu0 0.0
    %1236 = vmatprep.subr.mxu0 0.0
    %1237 = vmatpush1.msra.mxu0 0.0
    %1238 = vmatprep.subr.mxu0 0.0
    %1239 = vmatpush1.msra.mxu0 0.0
    %1240 = vmatprep.subr.mxu0 0.0
    %1241 = vmatpush1.msra.mxu0 0.0
    %1242 = vmatprep.subr.mxu0 0.0
    %1243 = vmatpush1.msra.mxu0 0.0
    %1244 = vmatprep.subr.mxu0 0.0
    %1245 = vmatpush1.msra.mxu0 0.0
    %1246 = vmatprep.subr.mxu0 0.0
    %1247 = vmatpush1.msra.mxu0 0.0
    %1248 = vmatprep.mubr.f32.mxu0 0.0
    %1249 = vmatmul.mubr.f32.gmra.mrb[0].mxu0 %v1180
    %v1250 = vpop.f32.mrb[0].mxu0
    %v1251 = vadd.f32 0.0, %v1250
    %v1252 = vpop.f32.mrb[0].mxu0
    %1253 = vmatprep.mubr.f32.mxu0 0.0
    %1254 = vmatmul.mubr.f32.gmra.mrb[0].mxu0 %v1181
    %v1255 = vpop.f32.mrb[0].mxu0
    %v1256 = vadd.f32 0.0, %v1255
    %v1257 = vpop.f32.mrb[0].mxu0
    %1258 = vmatprep.mubr.f32.mxu0 0.0
    %1259 = vmatmul.mubr.f32.gmra.mrb[0].mxu0 %v1182
    %v1260 = vpop.f32.mrb[0].mxu0
    %v1261 = vadd.f32 0.0, %v1260
    %v1262 = vpop.f32.mrb[0].mxu0
    %1263 = vmatprep.mubr.f32.mxu0 0.0
    %1264 = vmatmul.mubr.f32.gmra.mrb[0].mxu0 %v1183
    %v1265 = vpop.f32.mrb[0].mxu0
    %v1266 = vadd.f32 0.0, %v1265
    %v1267 = vpop.f32.mrb[0].mxu0
    %1268 = vdwg.mxu0
    %v1269 = vmax.f32 %v1251, %v1261
    %v1270 = vmax.f32 %v1256, %v1266
    %v1271 = vsub.f32 %v1251, %v1269
    %v1272 = vsub.f32 %v1256, %v1270
    %v1273 = vmul.f32 %v1271, 1.442695
    %v1274 = vpow.pop %v1273
    %v1275 = vmul.f32 %v1272, 1.442695
    %v1276 = vpow.pop %v1275
    %v1277 = vsub.f32 %v1261, %v1269
    %v1278 = vsub.f32 %v1266, %v1270
    %v1279 = vmul.f32 %v1277, 1.442695
    %v1280 = vpow.pop %v1279
    %v1281 = vmul.f32 %v1278, 1.442695
    %v1282 = vpow.pop %v1281
    %v1283 = vadd.f32 %v1274, %v1280
    %v1284 = vadd.f32 %v1276, %v1282
    %v1285 = vrcp.pop %v1283
    %v1286 = vrcp.pop %v1284
    %v1287 = vmul.f32 %v1274, %v1285
    %v1288 = vmul.f32 %v1276, %v1286
    %v1289 = vmul.f32 %v1280, %v1285
    %v1290 = vmul.f32 %v1282, %v1286
    %vm1291 = vcmask 31744
    %v1293 = vsel %vm1291, %v1287, 0
    %v1296 = vsel %vm1291, %v1288, 0
    %v1299 = vsel %vm1291, %v1289, 0
    %v1302 = vsel %vm1291, %v1290, 0
    %vm1304 = vcmask 1043456
    %v1306 = vsel %vm1304, %v555, 0
    %1308 = vmatprep.subr.mxu0 0.0
    %1309 = vmatpush1.msra.mxu0 %v1306
    %1310 = vmatprep.subr.mxu0 0.0
    %1311 = vmatpush1.msra.mxu0 0.0
    %1312 = vmatprep.subr.mxu0 0.0
    %1313 = vmatpush1.msra.mxu0 0.0
    %1314 = vmatprep.subr.mxu0 0.0
    %1315 = vmatpush1.msra.mxu0 0.0
    %1316 = vmatprep.subr.mxu0 0.0
    %1317 = vmatpush1.msra.mxu0 0.0
    %1318 = vmatprep.subr.mxu0 0.0
    %1319 = vmatpush1.msra.mxu0 0.0
    %1320 = vmatprep.subr.mxu0 0.0
    %1321 = vmatpush1.msra.mxu0 0.0
    %1322 = vmatprep.subr.mxu0 0.0
    %1323 = vmatpush1.msra.mxu0 0.0
    %1324 = vmatprep.subr.mxu0 0.0
    %1325 = vmatpush1.msra.mxu0 0.0
    %1326 = vmatprep.subr.mxu0 0.0
    %1327 = vmatpush1.msra.mxu0 0.0
    %1328 = vmatprep.subr.mxu0 0.0
    %1329 = vmatpush1.msra.mxu0 0.0
    %1330 = vmatprep.subr.mxu0 0.0
    %1331 = vmatpush1.msra.mxu0 0.0
    %1332 = vmatprep.subr.mxu0 0.0
    %1333 = vmatpush1.msra.mxu0 0.0
    %1334 = vmatprep.subr.mxu0 0.0
    %1335 = vmatpush1.msra.mxu0 0.0
    %1336 = vmatprep.subr.mxu0 0.0
    %1337 = vmatpush1.msra.mxu0 0.0
    %1338 = vmatprep.subr.mxu0 0.0
    %1339 = vmatpush1.msra.mxu0 0.0
    %1340 = vmatprep.subr.mxu0 0.0
    %1341 = vmatpush1.msra.mxu0 0.0
    %1342 = vmatprep.subr.mxu0 0.0
    %1343 = vmatpush1.msra.mxu0 0.0
    %1344 = vmatprep.subr.mxu0 0.0
    %1345 = vmatpush1.msra.mxu0 0.0
    %1346 = vmatprep.subr.mxu0 0.0
    %1347 = vmatpush1.msra.mxu0 0.0
    %1348 = vmatprep.subr.mxu0 0.0
    %1349 = vmatpush1.msra.mxu0 0.0
    %1350 = vmatprep.subr.mxu0 0.0
    %1351 = vmatpush1.msra.mxu0 0.0
    %1352 = vmatprep.subr.mxu0 0.0
    %1353 = vmatpush1.msra.mxu0 0.0
    %1354 = vmatprep.subr.mxu0 0.0
    %1355 = vmatpush1.msra.mxu0 0.0
    %1356 = vmatprep.subr.mxu0 0.0
    %1357 = vmatpush1.msra.mxu0 0.0
    %1358 = vmatprep.subr.mxu0 0.0
    %1359 = vmatpush1.msra.mxu0 0.0
    %1360 = vmatprep.subr.mxu0 0.0
    %1361 = vmatpush1.msra.mxu0 0.0
    %1362 = vmatprep.subr.mxu0 0.0
    %1363 = vmatpush1.msra.mxu0 0.0
    %1364 = vmatprep.subr.mxu0 0.0
    %1365 = vmatpush1.msra.mxu0 0.0
    %1366 = vmatprep.subr.mxu0 0.0
    %1367 = vmatpush1.msra.mxu0 0.0
    %1368 = vmatprep.subr.mxu0 0.0
    %1369 = vmatpush1.msra.mxu0 0.0
    %1370 = vmatprep.subr.mxu0 0.0
    %1371 = vmatpush1.msra.mxu0 0.0
    %1372 = vmatprep.mubr.f32.mxu0 0.0
    %1373 = vmatmul.mubr.f32.gmra.mrb[0].mxu0 %v1293
    %v1374 = vpop.f32.mrb[0].mxu0
    %v1375 = vadd.f32 0.0, %v1374
    %v1376 = vpop.f32.mrb[0].mxu0
    %1377 = vmatprep.mubr.f32.mxu0 0.0
    %1378 = vmatmul.mubr.f32.gmra.mrb[0].mxu0 %v1296
    %v1379 = vpop.f32.mrb[0].mxu0
    %v1380 = vadd.f32 0.0, %v1379
    %v1381 = vpop.f32.mrb[0].mxu0
    %1382 = vmatprep.mubr.f32.mxu0 0.0
    %1383 = vmatmul.mubr.f32.gmra.mrb[0].mxu0 %v1299
    %v1384 = vpop.f32.mrb[0].mxu0
    %v1385 = vadd.f32 0.0, %v1384
    %v1386 = vpop.f32.mrb[0].mxu0
    %1387 = vmatprep.mubr.f32.mxu0 0.0
    %1388 = vmatmul.mubr.f32.gmra.mrb[0].mxu0 %v1302
    %v1389 = vpop.f32.mrb[0].mxu0
    %v1390 = vadd.f32 0.0, %v1389
    %v1391 = vpop.f32.mrb[0].mxu0
    %1392 = vdwg.mxu0
    %v1393 = vmul.f32 %v1375, %v1172
    %v1394 = vmul.f32 %v1380, %v1177
    %v1395 = vmul.f32 %v1385, %v1177
    %v1396 = vmul.f32 %v1390, %v1172
    %v1397 = vadd.f32 %v1393, %v1395
    %v1398 = vadd.f32 %v1394, %v1396
    %v1399 = vld [vmem:[%s27] sm:$0xff]
    %v1400 = vld [vmem:[%s27 + $0x8] sm:$0xff]
    %v1401 = vld [vmem:[%s27 + $0x10] sm:$0xff]
    %v1402 = vld [vmem:[%s27 + $0x18] sm:$0xff]
    %v1403 = vld [vmem:[%s27 + $0x20] sm:$0xff]
    %v1404 = vld [vmem:[%s27 + $0x28] sm:$0xff]
    %v1405 = vld [vmem:[%s27 + $0x30] sm:$0xff]
    %v1406 = vld [vmem:[%s27 + $0x38] sm:$0xff]
    %v1407 = vld [vmem:[%s27 + $0x40] sm:$0xff]
    %v1408 = vld [vmem:[%s27 + $0x48] sm:$0xff]
    %v1409 = vld [vmem:[%s27 + $0x50] sm:$0xff]
    %v1410 = vld [vmem:[%s27 + $0x58] sm:$0xff]
    %v1411 = vld [vmem:[%s27 + $0x60] sm:$0xff]
    %v1412 = vld [vmem:[%s27 + $0x68] sm:$0xff]
    %v1413 = vld [vmem:[%s27 + $0x70] sm:$0xff]
    %v1414 = vld [vmem:[%s27 + $0x78] sm:$0xff]
    %v1415 = vld [vmem:[#allocation17] sm:$0x1]
    %v1417 = vlaneseq
    %v1418 = vshrl.u32 %v1417, 7
    %v1419 = vsub.s32 0, %v1418
    %v1420 = vrot.slane %v1415, %v1419
    %1422 = vmatprep.subr.mxu0 0.0
    %1423 = vmatpush1.msra.mxu0 %v1399
    %1424 = vmatprep.subr.mxu0 0.0
    %1425 = vmatpush1.msra.mxu0 %v1400
    %1426 = vmatprep.subr.mxu0 0.0
    %1427 = vmatpush1.msra.mxu0 %v1401
    %1428 = vmatprep.subr.mxu0 0.0
    %1429 = vmatpush1.msra.mxu0 %v1402
    %1430 = vmatprep.subr.mxu0 0.0
    %1431 = vmatpush1.msra.mxu0 %v1403
    %1432 = vmatprep.subr.mxu0 0.0
    %1433 = vmatpush1.msra.mxu0 %v1404
    %1434 = vmatprep.subr.mxu0 0.0
    %1435 = vmatpush1.msra.mxu0 %v1405
    %1436 = vmatprep.subr.mxu0 0.0
    %1437 = vmatpush1.msra.mxu0 %v1406
    %1438 = vmatprep.subr.mxu0 0.0
    %1439 = vmatpush1.msra.mxu0 %v1407
    %1440 = vmatprep.subr.mxu0 0.0
    %1441 = vmatpush1.msra.mxu0 %v1408
    %1442 = vmatprep.subr.mxu0 0.0
    %1443 = vmatpush1.msra.mxu0 %v1409
    %1444 = vmatprep.subr.mxu0 0.0
    %1445 = vmatpush1.msra.mxu0 %v1410
    %1446 = vmatprep.subr.mxu0 0.0
    %1447 = vmatpush1.msra.mxu0 %v1411
    %1448 = vmatprep.subr.mxu0 0.0
    %1449 = vmatpush1.msra.mxu0 %v1412
    %1450 = vmatprep.subr.mxu0 0.0
    %1451 = vmatpush1.msra.mxu0 %v1413
    %1452 = vmatprep.subr.mxu0 0.0
    %1453 = vmatpush1.msra.mxu0 %v1414
    %1454 = vmatprep.subr.mxu0 0.0
    %1455 = vmatpush1.msra.mxu0 0.0
    %1456 = vmatprep.subr.mxu0 0.0
    %1457 = vmatpush1.msra.mxu0 0.0
    %1458 = vmatprep.subr.mxu0 0.0
    %1459 = vmatpush1.msra.mxu0 0.0
    %1460 = vmatprep.subr.mxu0 0.0
    %1461 = vmatpush1.msra.mxu0 0.0
    %1462 = vmatprep.subr.mxu0 0.0
    %1463 = vmatpush1.msra.mxu0 0.0
    %1464 = vmatprep.subr.mxu0 0.0
    %1465 = vmatpush1.msra.mxu0 0.0
    %1466 = vmatprep.subr.mxu0 0.0
    %1467 = vmatpush1.msra.mxu0 0.0
    %1468 = vmatprep.subr.mxu0 0.0
    %1469 = vmatpush1.msra.mxu0 0.0
    %1470 = vmatprep.subr.mxu0 0.0
    %1471 = vmatpush1.msra.mxu0 0.0
    %1472 = vmatprep.subr.mxu0 0.0
    %1473 = vmatpush1.msra.mxu0 0.0
    %1474 = vmatprep.subr.mxu0 0.0
    %1475 = vmatpush1.msra.mxu0 0.0
    %1476 = vmatprep.subr.mxu0 0.0
    %1477 = vmatpush1.msra.mxu0 0.0
    %1478 = vmatprep.subr.mxu0 0.0
    %1479 = vmatpush1.msra.mxu0 0.0
    %1480 = vmatprep.subr.mxu0 0.0
    %1481 = vmatpush1.msra.mxu0 0.0
    %1482 = vmatprep.subr.mxu0 0.0
    %1483 = vmatpush1.msra.mxu0 0.0
    %1484 = vmatprep.subr.mxu0 0.0
    %1485 = vmatpush1.msra.mxu0 0.0
    %1486 = vmatprep.mubr.f32.mxu0 0.0
    %1487 = vmatmul.mubr.f32.gmra.mrb[0].mxu0 %v1397
    %v1488 = vpop.f32.mrb[0].mxu0
    %v1489 = vadd.f32 %v1420, %v1488
    %v1490 = vpop.f32.mrb[0].mxu0
    %1491 = vmatprep.mubr.f32.mxu0 0.0
    %1492 = vmatmul.mubr.f32.gmra.mrb[0].mxu0 %v1398
    %v1493 = vpop.f32.mrb[0].mxu0
    %v1494 = vadd.f32 %v1420, %v1493
    %v1495 = vpop.f32.mrb[0].mxu0
    %1496 = vdwg.mxu0
    %v1497 = vadd.f32 %v991, %v1489
    %v1498 = vadd.f32 %v992, %v1494
    %v1499 = vld [vmem:[%s31] sm:$0x1]
    %v1500 = vld [vmem:[%s33] sm:$0x1]
    %v1501 = vsel %vm576, %v1497, 0.0
    %1502 = vadd.xlane.f32.xlu0 %v1501
    %v1503 = vpop.xlane.xlu0 %1502
    %v1504 = vsel %vm576, %v1498, 0.0
    %1505 = vadd.xlane.f32.xlu0 %v1504
    %v1506 = vpop.xlane.xlu0 %1505
    %v1507 = vmul.f32 %v1503, %v956
    %v1508 = vmul.f32 %v1506, %v956
    %v1509 = vsub.f32 %v1497, %v1507
    %v1510 = vsub.f32 %v1498, %v1508
    %v1511 = vmul.f32 %v1509, %v1509
    %v1512 = vmul.f32 %v1510, %v1510
    %v1513 = vsel %vm576, %v1511, 0.0
    %1514 = vadd.xlane.f32.xlu0 %v1513
    %v1515 = vpop.xlane.xlu0 %1514
    %v1516 = vsel %vm576, %v1512, 0.0
    %1517 = vadd.xlane.f32.xlu0 %v1516
    %v1518 = vpop.xlane.xlu0 %1517
    %v1519 = vmul.f32 %v1515, %v956
    %v1520 = vmul.f32 %v1518, %v956
    %v1521 = vadd.f32 %v1519, 1e-05
    %v1522 = vadd.f32 %v1520, 1e-05
    %v1523 = vrsqrt.pop %v1521
    %v1524 = vrsqrt.pop %v1522
    %v1525 = vmul.f32 %v1509, %v1523
    %v1526 = vmul.f32 %v1510, %v1524
    %v1528 = vlaneseq
    %v1529 = vshrl.u32 %v1528, 7
    %v1530 = vsub.s32 0, %v1529
    %v1531 = vrot.slane %v1499, %v1530
    %v1533 = vmul.f32 %v1525, %v1531
    %v1534 = vmul.f32 %v1526, %v1531
    %v1536 = vlaneseq
    %v1537 = vshrl.u32 %v1536, 7
    %v1538 = vsub.s32 0, %v1537
    %v1539 = vrot.slane %v1500, %v1538
    %v1541 = vadd.f32 %v1533, %v1539
    %v1542 = vadd.f32 %v1534, %v1539
    %v1543 = vld [vmem:[%s35] sm:$0xff]
    %v1544 = vld [vmem:[%s35 + $0x8] sm:$0xff]
    %v1545 = vld [vmem:[%s35 + $0x10] sm:$0xff]
    %v1546 = vld [vmem:[%s35 + $0x18] sm:$0xff]
    %v1547 = vld [vmem:[%s37] sm:$0x1]
    %v1549 = vlaneseq
    %v1550 = vshrl.u32 %v1549, 7
    %v1551 = vsub.s32 0, %v1550
    %v1552 = vrot.slane %v1547, %v1551
    %v1555 = vsel %vm576, %v1541, 0
    %v1558 = vsel %vm576, %v1542, 0
    %1560 = vmatprep.subr.mxu0 0.0
    %1561 = vmatpush1.msra.mxu0 %v1543
    %1562 = vmatprep.subr.mxu0 0.0
    %1563 = vmatpush1.msra.mxu0 %v1544
    %1564 = vmatprep.subr.mxu0 0.0
    %1565 = vmatpush1.msra.mxu0 %v1545
    %1566 = vmatprep.subr.mxu0 0.0
    %1567 = vmatpush1.msra.mxu0 %v1546
    %1568 = vmatprep.subr.mxu0 0.0
    %1569 = vmatpush1.msra.mxu0 0.0
    %1570 = vmatprep.subr.mxu0 0.0
    %1571 = vmatpush1.msra.mxu0 0.0
    %1572 = vmatprep.subr.mxu0 0.0
    %1573 = vmatpush1.msra.mxu0 0.0
    %1574 = vmatprep.subr.mxu0 0.0
    %1575 = vmatpush1.msra.mxu0 0.0
    %1576 = vmatprep.subr.mxu0 0.0
    %1577 = vmatpush1.msra.mxu0 0.0
    %1578 = vmatprep.subr.mxu0 0.0
    %1579 = vmatpush1.msra.mxu0 0.0
    %1580 = vmatprep.subr.mxu0 0.0
    %1581 = vmatpush1.msra.mxu0 0.0
    %1582 = vmatprep.subr.mxu0 0.0
    %1583 = vmatpush1.msra.mxu0 0.0
    %1584 = vmatprep.subr.mxu0 0.0
    %1585 = vmatpush1.msra.mxu0 0.0
    %1586 = vmatprep.subr.mxu0 0.0
    %1587 = vmatpush1.msra.mxu0 0.0
    %1588 = vmatprep.subr.mxu0 0.0
    %1589 = vmatpush1.msra.mxu0 0.0
    %1590 = vmatprep.subr.mxu0 0.0
    %1591 = vmatpush1.msra.mxu0 0.0
    %1592 = vmatprep.subr.mxu0 0.0
    %1593 = vmatpush1.msra.mxu0 0.0
    %1594 = vmatprep.subr.mxu0 0.0
    %1595 = vmatpush1.msra.mxu0 0.0
    %1596 = vmatprep.subr.mxu0 0.0
    %1597 = vmatpush1.msra.mxu0 0.0
    %1598 = vmatprep.subr.mxu0 0.0
    %1599 = vmatpush1.msra.mxu0 0.0
    %1600 = vmatprep.subr.mxu0 0.0
    %1601 = vmatpush1.msra.mxu0 0.0
    %1602 = vmatprep.subr.mxu0 0.0
    %1603 = vmatpush1.msra.mxu0 0.0
    %1604 = vmatprep.subr.mxu0 0.0
    %1605 = vmatpush1.msra.mxu0 0.0
    %1606 = vmatprep.subr.mxu0 0.0
    %1607 = vmatpush1.msra.mxu0 0.0
    %1608 = vmatprep.subr.mxu0 0.0
    %1609 = vmatpush1.msra.mxu0 0.0
    %1610 = vmatprep.subr.mxu0 0.0
    %1611 = vmatpush1.msra.mxu0 0.0
    %1612 = vmatprep.subr.mxu0 0.0
    %1613 = vmatpush1.msra.mxu0 0.0
    %1614 = vmatprep.subr.mxu0 0.0
    %1615 = vmatpush1.msra.mxu0 0.0
    %1616 = vmatprep.subr.mxu0 0.0
    %1617 = vmatpush1.msra.mxu0 0.0
    %1618 = vmatprep.subr.mxu0 0.0
    %1619 = vmatpush1.msra.mxu0 0.0
    %1620 = vmatprep.subr.mxu0 0.0
    %1621 = vmatpush1.msra.mxu0 0.0
    %1622 = vmatprep.subr.mxu0 0.0
    %1623 = vmatpush1.msra.mxu0 0.0
    %1624 = vmatprep.mubr.f32.mxu0 0.0
    %1625 = vmatmul.mubr.f32.gmra.mrb[0].mxu0 %v1555
    %v1626 = vpop.f32.mrb[0].mxu0
    %v1627 = vadd.f32 %v1552, %v1626
    %v1628 = vpop.f32.mrb[0].mxu0
    %1629 = vmatprep.mubr.f32.mxu0 0.0
    %1630 = vmatmul.mubr.f32.gmra.mrb[0].mxu0 %v1558
    %v1631 = vpop.f32.mrb[0].mxu0
    %v1632 = vadd.f32 %v1552, %v1631
    %v1633 = vpop.f32.mrb[0].mxu0
    %1634 = vdwg.mxu0
    %v1635 = vmax.f32 %v1627, 0.0
    %v1636 = vmax.f32 %v1632, 0.0
    %v1637 = vld [vmem:[%s39] sm:$0xff]
    %v1638 = vld [vmem:[%s39 + $0x8] sm:$0xff]
    %v1639 = vld [vmem:[%s39 + $0x10] sm:$0xff]
    %v1640 = vld [vmem:[%s39 + $0x18] sm:$0xff]
    %v1641 = vld [vmem:[%s39 + $0x20] sm:$0xff]
    %v1642 = vld [vmem:[%s39 + $0x28] sm:$0xff]
    %v1643 = vld [vmem:[%s39 + $0x30] sm:$0xff]
    %v1644 = vld [vmem:[%s39 + $0x38] sm:$0xff]
    %v1645 = vld [vmem:[%s41] sm:$0x1]
    %v1647 = vlaneseq
    %v1648 = vshrl.u32 %v1647, 7
    %v1649 = vsub.s32 0, %v1648
    %v1650 = vrot.slane %v1645, %v1649
    %vm1652 = vcmask 523264
    %v1654 = vsel %vm1652, %v1635, 0
    %v1657 = vsel %vm1652, %v1636, 0
    %1659 = vmatprep.subr.mxu0 0.0
    %1660 = vmatpush1.msra.mxu0 %v1637
    %1661 = vmatprep.subr.mxu0 0.0
    %1662 = vmatpush1.msra.mxu0 %v1638
    %1663 = vmatprep.subr.mxu0 0.0
    %1664 = vmatpush1.msra.mxu0 %v1639
    %1665 = vmatprep.subr.mxu0 0.0
    %1666 = vmatpush1.msra.mxu0 %v1640
    %1667 = vmatprep.subr.mxu0 0.0
    %1668 = vmatpush1.msra.mxu0 %v1641
    %1669 = vmatprep.subr.mxu0 0.0
    %1670 = vmatpush1.msra.mxu0 %v1642
    %1671 = vmatprep.subr.mxu0 0.0
    %1672 = vmatpush1.msra.mxu0 %v1643
    %1673 = vmatprep.subr.mxu0 0.0
    %1674 = vmatpush1.msra.mxu0 %v1644
    %1675 = vmatprep.subr.mxu0 0.0
    %1676 = vmatpush1.msra.mxu0 0.0
    %1677 = vmatprep.subr.mxu0 0.0
    %1678 = vmatpush1.msra.mxu0 0.0
    %1679 = vmatprep.subr.mxu0 0.0
    %1680 = vmatpush1.msra.mxu0 0.0
    %1681 = vmatprep.subr.mxu0 0.0
    %1682 = vmatpush1.msra.mxu0 0.0
    %1683 = vmatprep.subr.mxu0 0.0
    %1684 = vmatpush1.msra.mxu0 0.0
    %1685 = vmatprep.subr.mxu0 0.0
    %1686 = vmatpush1.msra.mxu0 0.0
    %1687 = vmatprep.subr.mxu0 0.0
    %1688 = vmatpush1.msra.mxu0 0.0
    %1689 = vmatprep.subr.mxu0 0.0
    %1690 = vmatpush1.msra.mxu0 0.0
    %1691 = vmatprep.subr.mxu0 0.0
    %1692 = vmatpush1.msra.mxu0 0.0
    %1693 = vmatprep.subr.mxu0 0.0
    %1694 = vmatpush1.msra.mxu0 0.0
    %1695 = vmatprep.subr.mxu0 0.0
    %1696 = vmatpush1.msra.mxu0 0.0
    %1697 = vmatprep.subr.mxu0 0.0
    %1698 = vmatpush1.msra.mxu0 0.0
    %1699 = vmatprep.subr.mxu0 0.0
    %1700 = vmatpush1.msra.mxu0 0.0
    %1701 = vmatprep.subr.mxu0 0.0
    %1702 = vmatpush1.msra.mxu0 0.0
    %1703 = vmatprep.subr.mxu0 0.0
    %1704 = vmatpush1.msra.mxu0 0.0
    %1705 = vmatprep.subr.mxu0 0.0
    %1706 = vmatpush1.msra.mxu0 0.0
    %1707 = vmatprep.subr.mxu0 0.0
    %1708 = vmatpush1.msra.mxu0 0.0
    %1709 = vmatprep.subr.mxu0 0.0
    %1710 = vmatpush1.msra.mxu0 0.0
    %1711 = vmatprep.subr.mxu0 0.0
    %1712 = vmatpush1.msra.mxu0 0.0
    %1713 = vmatprep.subr.mxu0 0.0
    %1714 = vmatpush1.msra.mxu0 0.0
    %1715 = vmatprep.subr.mxu0 0.0
    %1716 = vmatpush1.msra.mxu0 0.0
    %1717 = vmatprep.subr.mxu0 0.0
    %1718 = vmatpush1.msra.mxu0 0.0
    %1719 = vmatprep.subr.mxu0 0.0
    %1720 = vmatpush1.msra.mxu0 0.0
    %1721 = vmatprep.subr.mxu0 0.0
    %1722 = vmatpush1.msra.mxu0 0.0
    %1723 = vmatprep.mubr.f32.mxu0 0.0
    %1724 = vmatmul.mubr.f32.gmra.mrb[0].mxu0 %v1654
    %v1725 = vpop.f32.mrb[0].mxu0
    %v1726 = vadd.f32 %v1650, %v1725
    %v1727 = vpop.f32.mrb[0].mxu0
    %1728 = vmatprep.mubr.f32.mxu0 0.0
    %1729 = vmatmul.mubr.f32.gmra.mrb[0].mxu0 %v1657
    %v1730 = vpop.f32.mrb[0].mxu0
    %v1731 = vadd.f32 %v1650, %v1730
    %v1732 = vpop.f32.mrb[0].mxu0
    %1733 = vdwg.mxu0
    %v1734 = vadd.f32 %v1541, %v1726
    %v1735 = vadd.f32 %v1542, %v1731
    %v1736 = vld [vmem:[%s43] sm:$0x1]
    %v1737 = vld [vmem:[%s45] sm:$0x1]
    %v1738 = vsel %vm576, %v1734, 0.0
    %1739 = vadd.xlane.f32.xlu0 %v1738
    %v1740 = vpop.xlane.xlu0 %1739
    %v1741 = vsel %vm576, %v1735, 0.0
    %1742 = vadd.xlane.f32.xlu0 %v1741
    %v1743 = vpop.xlane.xlu0 %1742
    %v1744 = vmul.f32 %v1740, %v956
    %v1745 = vmul.f32 %v1743, %v956
    %v1746 = vsub.f32 %v1734, %v1744
    %v1747 = vsub.f32 %v1735, %v1745
    %v1748 = vmul.f32 %v1746, %v1746
    %v1749 = vmul.f32 %v1747, %v1747
    %v1750 = vsel %vm576, %v1748, 0.0
    %1751 = vadd.xlane.f32.xlu0 %v1750
    %v1752 = vpop.xlane.xlu0 %1751
    %v1753 = vsel %vm576, %v1749, 0.0
    %1754 = vadd.xlane.f32.xlu0 %v1753
    %v1755 = vpop.xlane.xlu0 %1754
    %v1756 = vmul.f32 %v1752, %v956
    %v1757 = vmul.f32 %v1755, %v956
    %v1758 = vadd.f32 %v1756, 1e-05
    %v1759 = vadd.f32 %v1757, 1e-05
    %v1760 = vrsqrt.pop %v1758
    %v1761 = vrsqrt.pop %v1759
    %v1762 = vmul.f32 %v1746, %v1760
    %v1763 = vmul.f32 %v1747, %v1761
    %v1765 = vlaneseq
    %v1766 = vshrl.u32 %v1765, 7
    %v1767 = vsub.s32 0, %v1766
    %v1768 = vrot.slane %v1736, %v1767
    %v1770 = vmul.f32 %v1762, %v1768
    %v1771 = vmul.f32 %v1763, %v1768
    %v1773 = vlaneseq
    %v1774 = vshrl.u32 %v1773, 7
    %v1775 = vsub.s32 0, %v1774
    %v1776 = vrot.slane %v1737, %v1775
    %v1778 = vadd.f32 %v1770, %v1776
    %v1779 = vadd.f32 %v1771, %v1776
    %s1780 = scalar_lea.vmem %s11, 64
    %v1781 = vld [vmem:[%s1780] sm:$0xff]
    %v1782 = vld [vmem:[%s1780 + $0x8] sm:$0xff]
    %v1783 = vld [vmem:[%s1780 + $0x10] sm:$0xff]
    %v1784 = vld [vmem:[%s1780 + $0x18] sm:$0xff]
    %v1785 = vld [vmem:[%s1780 + $0x20] sm:$0xff]
    %v1786 = vld [vmem:[%s1780 + $0x28] sm:$0xff]
    %v1787 = vld [vmem:[%s1780 + $0x30] sm:$0xff]
    %v1788 = vld [vmem:[%s1780 + $0x38] sm:$0xff]
    %s1789 = scalar_lea.vmem [#allocation10], 2
    %v1790 = vld [vmem:[%s1789] sm:$0x3]
    %v1792 = vlaneseq
    %v1793 = vshrl.u32 %v1792, 7
    %v1794 = vsub.s32 0, %v1793
    %v1795 = vrot.slane %v1790, %v1794
    %v1796 = vlaneseq
    %v1797 = vshrl.u32 %v1796, 7
    %v1798 = vsub.s32 1, %v1797
    %v1799 = vrot.slane %v1790, %v1798
    %v1803 = vsel %vm576, %v1778, 0
    %v1806 = vsel %vm576, %v1779, 0
    %1808 = vmatprep.subr.mxu0 %v1782
    %1809 = vmatpush1.msra.mxu0 %v1781
    %1810 = vmatprep.subr.mxu0 %v1784
    %1811 = vmatpush1.msra.mxu0 %v1783
    %1812 = vmatprep.subr.mxu0 %v1786
    %1813 = vmatpush1.msra.mxu0 %v1785
    %1814 = vmatprep.subr.mxu0 %v1788
    %1815 = vmatpush1.msra.mxu0 %v1787
    %1816 = vmatprep.subr.mxu0 0.0
    %1817 = vmatpush1.msra.mxu0 0.0
    %1818 = vmatprep.subr.mxu0 0.0
    %1819 = vmatpush1.msra.mxu0 0.0
    %1820 = vmatprep.subr.mxu0 0.0
    %1821 = vmatpush1.msra.mxu0 0.0
    %1822 = vmatprep.subr.mxu0 0.0
    %1823 = vmatpush1.msra.mxu0 0.0
    %1824 = vmatprep.subr.mxu0 0.0
    %1825 = vmatpush1.msra.mxu0 0.0
    %1826 = vmatprep.subr.mxu0 0.0
    %1827 = vmatpush1.msra.mxu0 0.0
    %1828 = vmatprep.subr.mxu0 0.0
    %1829 = vmatpush1.msra.mxu0 0.0
    %1830 = vmatprep.subr.mxu0 0.0
    %1831 = vmatpush1.msra.mxu0 0.0
    %1832 = vmatprep.subr.mxu0 0.0
    %1833 = vmatpush1.msra.mxu0 0.0
    %1834 = vmatprep.subr.mxu0 0.0
    %1835 = vmatpush1.msra.mxu0 0.0
    %1836 = vmatprep.subr.mxu0 0.0
    %1837 = vmatpush1.msra.mxu0 0.0
    %1838 = vmatprep.subr.mxu0 0.0
    %1839 = vmatpush1.msra.mxu0 0.0
    %1840 = vmatprep.subr.mxu0 0.0
    %1841 = vmatpush1.msra.mxu0 0.0
    %1842 = vmatprep.subr.mxu0 0.0
    %1843 = vmatpush1.msra.mxu0 0.0
    %1844 = vmatprep.subr.mxu0 0.0
    %1845 = vmatpush1.msra.mxu0 0.0
    %1846 = vmatprep.subr.mxu0 0.0
    %1847 = vmatpush1.msra.mxu0 0.0
    %1848 = vmatprep.subr.mxu0 0.0
    %1849 = vmatpush1.msra.mxu0 0.0
    %1850 = vmatprep.subr.mxu0 0.0
    %1851 = vmatpush1.msra.mxu0 0.0
    %1852 = vmatprep.subr.mxu0 0.0
    %1853 = vmatpush1.msra.mxu0 0.0
    %1854 = vmatprep.subr.mxu0 0.0
    %1855 = vmatpush1.msra.mxu0 0.0
    %1856 = vmatprep.subr.mxu0 0.0
    %1857 = vmatpush1.msra.mxu0 0.0
    %1858 = vmatprep.subr.mxu0 0.0
    %1859 = vmatpush1.msra.mxu0 0.0
    %1860 = vmatprep.subr.mxu0 0.0
    %1861 = vmatpush1.msra.mxu0 0.0
    %1862 = vmatprep.subr.mxu0 0.0
    %1863 = vmatpush1.msra.mxu0 0.0
    %1864 = vmatprep.subr.mxu0 0.0
    %1865 = vmatpush1.msra.mxu0 0.0
    %1866 = vmatprep.subr.mxu0 0.0
    %1867 = vmatpush1.msra.mxu0 0.0
    %1868 = vmatprep.subr.mxu0 0.0
    %1869 = vmatpush1.msra.mxu0 0.0
    %1870 = vmatprep.subr.mxu0 0.0
    %1871 = vmatpush1.msra.mxu0 0.0
    %1872 = vmatprep.mubr.f32.mxu0 0.0
    %1873 = vmatmul.mubr.f32.gmra.mrb[0].mxu0 %v1803
    %v1874 = vpop.f32.mrb[0].mxu0
    %v1875 = vadd.f32 %v1795, %v1874
    %v1876 = vpop.f32.mrb[0].mxu0
    %v1877 = vadd.f32 %v1799, %v1876
    %1878 = vmatprep.mubr.f32.mxu0 0.0
    %1879 = vmatmul.mubr.f32.gmra.mrb[0].mxu0 %v1806
    %v1880 = vpop.f32.mrb[0].mxu0
    %v1881 = vadd.f32 %v1795, %v1880
    %v1882 = vpop.f32.mrb[0].mxu0
    %v1883 = vadd.f32 %v1799, %v1882
    %1884 = vdwg.mxu0
    %v1885 = vmax.f32 %v1875, 0.0
    %v1886 = vmax.f32 %v1881, 0.0
    %s1887 = scalar_lea.vmem %s15, 128
    %v1888 = vld [vmem:[%s1887] sm:$0xff]
    %v1889 = vld [vmem:[%s1887 + $0x8] sm:$0xff]
    %v1890 = vld [vmem:[%s1887 + $0x10] sm:$0xff]
    %v1891 = vld [vmem:[%s1887 + $0x18] sm:$0xff]
    %v1892 = vld [vmem:[%s1887 + $0x20] sm:$0xff]
    %v1893 = vld [vmem:[%s1887 + $0x28] sm:$0xff]
    %v1894 = vld [vmem:[%s1887 + $0x30] sm:$0xff]
    %v1895 = vld [vmem:[%s1887 + $0x38] sm:$0xff]
    %v1896 = vld [vmem:[%s1887 + $0x40] sm:$0xff]
    %v1897 = vld [vmem:[%s1887 + $0x48] sm:$0xff]
    %v1898 = vld [vmem:[%s1887 + $0x50] sm:$0xff]
    %v1899 = vld [vmem:[%s1887 + $0x58] sm:$0xff]
    %v1900 = vld [vmem:[%s1887 + $0x60] sm:$0xff]
    %v1901 = vld [vmem:[%s1887 + $0x68] sm:$0xff]
    %v1902 = vld [vmem:[%s1887 + $0x70] sm:$0xff]
    %v1903 = vld [vmem:[%s1887 + $0x78] sm:$0xff]
    %s1904 = scalar_lea.vmem [#allocation11], 1
    %v1905 = vld [vmem:[%s1904] sm:$0x1]
    %v1907 = vlaneseq
    %v1908 = vshrl.u32 %v1907, 7
    %v1909 = vsub.s32 0, %v1908
    %v1910 = vrot.slane %v1905, %v1909
    %1912 = vmatprep.subr.mxu0 0.0
    %1913 = vmatpush1.msra.mxu0 %v1888
    %1914 = vmatprep.subr.mxu0 0.0
    %1915 = vmatpush1.msra.mxu0 %v1889
    %1916 = vmatprep.subr.mxu0 0.0
    %1917 = vmatpush1.msra.mxu0 %v1890
    %1918 = vmatprep.subr.mxu0 0.0
    %1919 = vmatpush1.msra.mxu0 %v1891
    %1920 = vmatprep.subr.mxu0 0.0
    %1921 = vmatpush1.msra.mxu0 %v1892
    %1922 = vmatprep.subr.mxu0 0.0
    %1923 = vmatpush1.msra.mxu0 %v1893
    %1924 = vmatprep.subr.mxu0 0.0
    %1925 = vmatpush1.msra.mxu0 %v1894
    %1926 = vmatprep.subr.mxu0 0.0
    %1927 = vmatpush1.msra.mxu0 %v1895
    %1928 = vmatprep.subr.mxu0 0.0
    %1929 = vmatpush1.msra.mxu0 %v1896
    %1930 = vmatprep.subr.mxu0 0.0
    %1931 = vmatpush1.msra.mxu0 %v1897
    %1932 = vmatprep.subr.mxu0 0.0
    %1933 = vmatpush1.msra.mxu0 %v1898
    %1934 = vmatprep.subr.mxu0 0.0
    %1935 = vmatpush1.msra.mxu0 %v1899
    %1936 = vmatprep.subr.mxu0 0.0
    %1937 = vmatpush1.msra.mxu0 %v1900
    %1938 = vmatprep.subr.mxu0 0.0
    %1939 = vmatpush1.msra.mxu0 %v1901
    %1940 = vmatprep.subr.mxu0 0.0
    %1941 = vmatpush1.msra.mxu0 %v1902
    %1942 = vmatprep.subr.mxu0 0.0
    %1943 = vmatpush1.msra.mxu0 %v1903
    %1944 = vmatprep.subr.mxu0 0.0
    %1945 = vmatpush1.msra.mxu0 0.0
    %1946 = vmatprep.subr.mxu0 0.0
    %1947 = vmatpush1.msra.mxu0 0.0
    %1948 = vmatprep.subr.mxu0 0.0
    %1949 = vmatpush1.msra.mxu0 0.0
    %1950 = vmatprep.subr.mxu0 0.0
    %1951 = vmatpush1.msra.mxu0 0.0
    %1952 = vmatprep.subr.mxu0 0.0
    %1953 = vmatpush1.msra.mxu0 0.0
    %1954 = vmatprep.subr.mxu0 0.0
    %1955 = vmatpush1.msra.mxu0 0.0
    %1956 = vmatprep.subr.mxu0 0.0
    %1957 = vmatpush1.msra.mxu0 0.0
    %1958 = vmatprep.subr.mxu0 0.0
    %1959 = vmatpush1.msra.mxu0 0.0
    %1960 = vmatprep.subr.mxu0 0.0
    %1961 = vmatpush1.msra.mxu0 0.0
    %1962 = vmatprep.subr.mxu0 0.0
    %1963 = vmatpush1.msra.mxu0 0.0
    %1964 = vmatprep.subr.mxu0 0.0
    %1965 = vmatpush1.msra.mxu0 0.0
    %1966 = vmatprep.subr.mxu0 0.0
    %1967 = vmatpush1.msra.mxu0 0.0
    %1968 = vmatprep.subr.mxu0 0.0
    %1969 = vmatpush1.msra.mxu0 0.0
    %1970 = vmatprep.subr.mxu0 0.0
    %1971 = vmatpush1.msra.mxu0 0.0
    %1972 = vmatprep.subr.mxu0 0.0
    %1973 = vmatpush1.msra.mxu0 0.0
    %1974 = vmatprep.subr.mxu0 0.0
    %1975 = vmatpush1.msra.mxu0 0.0
    %1976 = vmatprep.mubr.f32.mxu0 0.0
    %1977 = vmatmul.mubr.f32.gmra.mrb[0].mxu0 %v1885
    %v1978 = vpop.f32.mrb[0].mxu0
    %v1979 = vadd.f32 %v1910, %v1978
    %v1980 = vpop.f32.mrb[0].mxu0
    %1981 = vmatprep.mubr.f32.mxu0 0.0
    %1982 = vmatmul.mubr.f32.gmra.mrb[0].mxu0 %v1886
    %v1983 = vpop.f32.mrb[0].mxu0
    %v1984 = vadd.f32 %v1910, %v1983
    %v1985 = vpop.f32.mrb[0].mxu0
    %1986 = vdwg.mxu0
    %v1987 = vrot.slane %v1877, 4
    %v1988 = vmax.f32 %v1877, %v1987
    %v1989 = vrot.slane %v1988, 2
    %v1990 = vmax.f32 %v1988, %v1989
    %v1991 = vrot.slane %v1990, 1
    %v1992 = vmax.f32 %v1990, %v1991
    %v1993 = vrot.slane %v1883, 4
    %v1994 = vmax.f32 %v1883, %v1993
    %v1995 = vrot.slane %v1994, 2
    %v1996 = vmax.f32 %v1994, %v1995
    %v1997 = vrot.slane %v1996, 1
    %v1998 = vmax.f32 %v1996, %v1997
    %v1999 = vsub.f32 %v1877, %v1992
    %v2000 = vsub.f32 %v1883, %v1998
    %v2001 = vmul.f32 %v1999, 1.442695
    %v2002 = vpow.pop %v2001
    %v2003 = vmul.f32 %v2000, 1.442695
    %v2004 = vpow.pop %v2003
    %v2005 = vrot.slane %v2002, 4
    %v2006 = vadd.f32 %v2002, %v2005
    %v2007 = vrot.slane %v2006, 2
    %v2008 = vadd.f32 %v2006, %v2007
    %v2009 = vrot.slane %v2008, 1
    %v2010 = vadd.f32 %v2008, %v2009
    %v2011 = vrot.slane %v2004, 4
    %v2012 = vadd.f32 %v2004, %v2011
    %v2013 = vrot.slane %v2012, 2
    %v2014 = vadd.f32 %v2012, %v2013
    %v2015 = vrot.slane %v2014, 1
    %v2016 = vadd.f32 %v2014, %v2015
    %v2017 = vrcp.pop %v2010
    %v2018 = vrcp.pop %v2016
    %v2019 = vmul.f32 %v2002, %v2017
    %v2020 = vmul.f32 %v2004, %v2018
    %2021 = vmatprep.subr.mxu0 0.0
    %2022 = vmatpush1.msra.mxu0 %v507
    %2023 = vmatprep.subr.mxu0 0.0
    %2024 = vmatpush1.msra.mxu0 %v508
    %2025 = vmatprep.subr.mxu0 0.0
    %2026 = vmatpush1.msra.mxu0 %v509
    %2027 = vmatprep.subr.mxu0 0.0
    %2028 = vmatpush1.msra.mxu0 %v510
    %2029 = vmatprep.subr.mxu0 0.0
    %2030 = vmatpush1.msra.mxu0 %v511
    %2031 = vmatprep.subr.mxu0 0.0
    %2032 = vmatpush1.msra.mxu0 %v512
    %2033 = vmatprep.subr.mxu0 0.0
    %2034 = vmatpush1.msra.mxu0 %v513
    %2035 = vmatprep.subr.mxu0 0.0
    %2036 = vmatpush1.msra.mxu0 %v514
    %2037 = vmatprep.subr.mxu0 0.0
    %2038 = vmatpush1.msra.mxu0 %v515
    %2039 = vmatprep.subr.mxu0 0.0
    %2040 = vmatpush1.msra.mxu0 %v516
    %2041 = vmatprep.subr.mxu0 0.0
    %2042 = vmatpush1.msra.mxu0 %v517
    %2043 = vmatprep.subr.mxu0 0.0
    %2044 = vmatpush1.msra.mxu0 %v518
    %2045 = vmatprep.subr.mxu0 0.0
    %2046 = vmatpush1.msra.mxu0 %v519
    %2047 = vmatprep.subr.mxu0 0.0
    %2048 = vmatpush1.msra.mxu0 %v520
    %2049 = vmatprep.subr.mxu0 0.0
    %2050 = vmatpush1.msra.mxu0 %v521
    %2051 = vmatprep.subr.mxu0 0.0
    %2052 = vmatpush1.msra.mxu0 %v522
    %2053 = vmatprep.subr.mxu0 0.0
    %2054 = vmatpush1.msra.mxu0 0.0
    %2055 = vmatprep.subr.mxu0 0.0
    %2056 = vmatpush1.msra.mxu0 0.0
    %2057 = vmatprep.subr.mxu0 0.0
    %2058 = vmatpush1.msra.mxu0 0.0
    %2059 = vmatprep.subr.mxu0 0.0
    %2060 = vmatpush1.msra.mxu0 0.0
    %2061 = vmatprep.subr.mxu0 0.0
    %2062 = vmatpush1.msra.mxu0 0.0
    %2063 = vmatprep.subr.mxu0 0.0
    %2064 = vmatpush1.msra.mxu0 0.0
    %2065 = vmatprep.subr.mxu0 0.0
    %2066 = vmatpush1.msra.mxu0 0.0
    %2067 = vmatprep.subr.mxu0 0.0
    %2068 = vmatpush1.msra.mxu0 0.0
    %2069 = vmatprep.subr.mxu0 0.0
    %2070 = vmatpush1.msra.mxu0 0.0
    %2071 = vmatprep.subr.mxu0 0.0
    %2072 = vmatpush1.msra.mxu0 0.0
    %2073 = vmatprep.subr.mxu0 0.0
    %2074 = vmatpush1.msra.mxu0 0.0
    %2075 = vmatprep.subr.mxu0 0.0
    %2076 = vmatpush1.msra.mxu0 0.0
    %2077 = vmatprep.subr.mxu0 0.0
    %2078 = vmatpush1.msra.mxu0 0.0
    %2079 = vmatprep.subr.mxu0 0.0
    %2080 = vmatpush1.msra.mxu0 0.0
    %2081 = vmatprep.subr.mxu0 0.0
    %2082 = vmatpush1.msra.mxu0 0.0
    %2083 = vmatprep.subr.mxu0 0.0
    %2084 = vmatpush1.msra.mxu0 0.0
    %2085 = vmatprep.mubr.f32.mxu0 0.0
    %2086 = vmatmul.mubr.f32.gmra.mrb[0].mxu0 %v2019
    %v2087 = vpop.f32.mrb[0].mxu0
    %v2088 = vadd.f32 0.0, %v2087
    %v2089 = vpop.f32.mrb[0].mxu0
    %2090 = vmatprep.mubr.f32.mxu0 0.0
    %2091 = vmatmul.mubr.f32.gmra.mrb[0].mxu0 %v2020
    %v2092 = vpop.f32.mrb[0].mxu0
    %v2093 = vadd.f32 0.0, %v2092
    %v2094 = vpop.f32.mrb[0].mxu0
    %2095 = vdwg.mxu0
    %v2096 = vmul.f32 %v2088, %v1979
    %v2097 = vmul.f32 %v2093, %v1984
    %2098 = vmatprep.subr.mxu0 0.0
    %2099 = vmatpush1.msra.mxu0 %v523
    %2100 = vmatprep.subr.mxu0 0.0
    %2101 = vmatpush1.msra.mxu0 %v524
    %2102 = vmatprep.subr.mxu0 0.0
    %2103 = vmatpush1.msra.mxu0 %v525
    %2104 = vmatprep.subr.mxu0 0.0
    %2105 = vmatpush1.msra.mxu0 %v526
    %2106 = vmatprep.subr.mxu0 0.0
    %2107 = vmatpush1.msra.mxu0 %v527
    %2108 = vmatprep.subr.mxu0 0.0
    %2109 = vmatpush1.msra.mxu0 %v528
    %2110 = vmatprep.subr.mxu0 0.0
    %2111 = vmatpush1.msra.mxu0 %v529
    %2112 = vmatprep.subr.mxu0 0.0
    %2113 = vmatpush1.msra.mxu0 %v530
    %2114 = vmatprep.subr.mxu0 0.0
    %2115 = vmatpush1.msra.mxu0 %v531
    %2116 = vmatprep.subr.mxu0 0.0
    %2117 = vmatpush1.msra.mxu0 %v532
    %2118 = vmatprep.subr.mxu0 0.0
    %2119 = vmatpush1.msra.mxu0 %v533
    %2120 = vmatprep.subr.mxu0 0.0
    %2121 = vmatpush1.msra.mxu0 %v534
    %2122 = vmatprep.subr.mxu0 0.0
    %2123 = vmatpush1.msra.mxu0 %v535
    %2124 = vmatprep.subr.mxu0 0.0
    %2125 = vmatpush1.msra.mxu0 %v536
    %2126 = vmatprep.subr.mxu0 0.0
    %2127 = vmatpush1.msra.mxu0 %v537
    %2128 = vmatprep.subr.mxu0 0.0
    %2129 = vmatpush1.msra.mxu0 %v538
    %2130 = vmatprep.subr.mxu0 0.0
    %2131 = vmatpush1.msra.mxu0 0.0
    %2132 = vmatprep.subr.mxu0 0.0
    %2133 = vmatpush1.msra.mxu0 0.0
    %2134 = vmatprep.subr.mxu0 0.0
    %2135 = vmatpush1.msra.mxu0 0.0
    %2136 = vmatprep.subr.mxu0 0.0
    %2137 = vmatpush1.msra.mxu0 0.0
    %2138 = vmatprep.subr.mxu0 0.0
    %2139 = vmatpush1.msra.mxu0 0.0
    %2140 = vmatprep.subr.mxu0 0.0
    %2141 = vmatpush1.msra.mxu0 0.0
    %2142 = vmatprep.subr.mxu0 0.0
    %2143 = vmatpush1.msra.mxu0 0.0
    %2144 = vmatprep.subr.mxu0 0.0
    %2145 = vmatpush1.msra.mxu0 0.0
    %2146 = vmatprep.subr.mxu0 0.0
    %2147 = vmatpush1.msra.mxu0 0.0
    %2148 = vmatprep.subr.mxu0 0.0
    %2149 = vmatpush1.msra.mxu0 0.0
    %2150 = vmatprep.subr.mxu0 0.0
    %2151 = vmatpush1.msra.mxu0 0.0
    %2152 = vmatprep.subr.mxu0 0.0
    %2153 = vmatpush1.msra.mxu0 0.0
    %2154 = vmatprep.subr.mxu0 0.0
    %2155 = vmatpush1.msra.mxu0 0.0
    %2156 = vmatprep.subr.mxu0 0.0
    %2157 = vmatpush1.msra.mxu0 0.0
    %2158 = vmatprep.subr.mxu0 0.0
    %2159 = vmatpush1.msra.mxu0 0.0
    %2160 = vmatprep.subr.mxu0 0.0
    %2161 = vmatpush1.msra.mxu0 0.0
    %2162 = vmatprep.mubr.f32.mxu0 0.0
    %2163 = vmatmul.mubr.f32.gmra.mrb[0].mxu0 %v2096
    %v2164 = vpop.f32.mrb[0].mxu0
    %v2165 = vadd.f32 0.0, %v2164
    %v2166 = vpop.f32.mrb[0].mxu0
    %2167 = vmatprep.mubr.f32.mxu0 0.0
    %2168 = vmatmul.mubr.f32.gmra.mrb[0].mxu0 %v2097
    %v2169 = vpop.f32.mrb[0].mxu0
    %v2170 = vadd.f32 0.0, %v2169
    %v2171 = vpop.f32.mrb[0].mxu0
    %2172 = vdwg.mxu0
    %v2173 = vadd.f32 %v1778, %v2165
    %v2174 = vadd.f32 %v1779, %v2170
    %s2175 = scalar_lea.vmem [#allocation13], 1
    %v2176 = vld [vmem:[%s2175] sm:$0x1]
    %s2177 = scalar_lea.vmem [#allocation14], 1
    %v2178 = vld [vmem:[%s2177] sm:$0x1]
    %v2179 = vsel %vm576, %v2173, 0.0
    %2180 = vadd.xlane.f32.xlu0 %v2179
    %v2181 = vpop.xlane.xlu0 %2180
    %v2182 = vsel %vm576, %v2174, 0.0
    %2183 = vadd.xlane.f32.xlu0 %v2182
    %v2184 = vpop.xlane.xlu0 %2183
    %v2185 = vmul.f32 %v2181, %v956
    %v2186 = vmul.f32 %v2184, %v956
    %v2187 = vsub.f32 %v2173, %v2185
    %v2188 = vsub.f32 %v2174, %v2186
    %v2189 = vmul.f32 %v2187, %v2187
    %v2190 = vmul.f32 %v2188, %v2188
    %v2191 = vsel %vm576, %v2189, 0.0
    %2192 = vadd.xlane.f32.xlu0 %v2191
    %v2193 = vpop.xlane.xlu0 %2192
    %v2194 = vsel %vm576, %v2190, 0.0
    %2195 = vadd.xlane.f32.xlu0 %v2194
    %v2196 = vpop.xlane.xlu0 %2195
    %v2197 = vmul.f32 %v2193, %v956
    %v2198 = vmul.f32 %v2196, %v956
    %v2199 = vadd.f32 %v2197, 1e-05
    %v2200 = vadd.f32 %v2198, 1e-05
    %v2201 = vrsqrt.pop %v2199
    %v2202 = vrsqrt.pop %v2200
    %v2203 = vmul.f32 %v2187, %v2201
    %v2204 = vmul.f32 %v2188, %v2202
    %v2206 = vlaneseq
    %v2207 = vshrl.u32 %v2206, 7
    %v2208 = vsub.s32 0, %v2207
    %v2209 = vrot.slane %v2176, %v2208
    %v2211 = vmul.f32 %v2203, %v2209
    %v2212 = vmul.f32 %v2204, %v2209
    %v2214 = vlaneseq
    %v2215 = vshrl.u32 %v2214, 7
    %v2216 = vsub.s32 0, %v2215
    %v2217 = vrot.slane %v2178, %v2216
    %v2219 = vadd.f32 %v2211, %v2217
    %v2220 = vadd.f32 %v2212, %v2217
    %s2221 = scalar_lea.vmem %s23, 96
    %v2222 = vld [vmem:[%s2221] sm:$0xff]
    %v2223 = vld [vmem:[%s2221 + $0x8] sm:$0xff]
    %v2224 = vld [vmem:[%s2221 + $0x10] sm:$0xff]
    %v2225 = vld [vmem:[%s2221 + $0x18] sm:$0xff]
    %v2226 = vld [vmem:[%s2221 + $0x20] sm:$0xff]
    %v2227 = vld [vmem:[%s2221 + $0x28] sm:$0xff]
    %v2228 = vld [vmem:[%s2221 + $0x30] sm:$0xff]
    %v2229 = vld [vmem:[%s2221 + $0x38] sm:$0xff]
    %v2230 = vld [vmem:[%s2221 + $0x40] sm:$0xff]
    %v2231 = vld [vmem:[%s2221 + $0x48] sm:$0xff]
    %v2232 = vld [vmem:[%s2221 + $0x50] sm:$0xff]
    %v2233 = vld [vmem:[%s2221 + $0x58] sm:$0xff]
    %s2234 = scalar_lea.vmem [#allocation16], 3
    %v2235 = vld [vmem:[%s2234] sm:$0x7]
    %v2237 = vlaneseq
    %v2238 = vshrl.u32 %v2237, 7
    %v2239 = vsub.s32 0, %v2238
    %v2240 = vrot.slane %v2235, %v2239
    %v2241 = vlaneseq
    %v2242 = vshrl.u32 %v2241, 7
    %v2243 = vsub.s32 1, %v2242
    %v2244 = vrot.slane %v2235, %v2243
    %v2245 = vlaneseq
    %v2246 = vshrl.u32 %v2245, 7
    %v2247 = vsub.s32 2, %v2246
    %v2248 = vrot.slane %v2235, %v2247
    %v2253 = vsel %vm576, %v2219, 0
    %v2256 = vsel %vm576, %v2220, 0
    %2258 = vmatprep.subr.mxu0 %v2223
    %2259 = vmatpush1.msra.mxu0 %v2222
    %2260 = vmatprep.subr.mxu0 %v2226
    %2261 = vmatpush1.msra.mxu0 %v2225
    %2262 = vmatprep.subr.mxu0 %v2229
    %2263 = vmatpush1.msra.mxu0 %v2228
    %2264 = vmatprep.subr.mxu0 %v2232
    %2265 = vmatpush1.msra.mxu0 %v2231
    %2266 = vmatprep.subr.mxu0 0.0
    %2267 = vmatpush1.msra.mxu0 0.0
    %2268 = vmatprep.subr.mxu0 0.0
    %2269 = vmatpush1.msra.mxu0 0.0
    %2270 = vmatprep.subr.mxu0 0.0
    %2271 = vmatpush1.msra.mxu0 0.0
    %2272 = vmatprep.subr.mxu0 0.0
    %2273 = vmatpush1.msra.mxu0 0.0
    %2274 = vmatprep.subr.mxu0 0.0
    %2275 = vmatpush1.msra.mxu0 0.0
    %2276 = vmatprep.subr.mxu0 0.0
    %2277 = vmatpush1.msra.mxu0 0.0
    %2278 = vmatprep.subr.mxu0 0.0
    %2279 = vmatpush1.msra.mxu0 0.0
    %2280 = vmatprep.subr.mxu0 0.0
    %2281 = vmatpush1.msra.mxu0 0.0
    %2282 = vmatprep.subr.mxu0 0.0
    %2283 = vmatpush1.msra.mxu0 0.0
    %2284 = vmatprep.subr.mxu0 0.0
    %2285 = vmatpush1.msra.mxu0 0.0
    %2286 = vmatprep.subr.mxu0 0.0
    %2287 = vmatpush1.msra.mxu0 0.0
    %2288 = vmatprep.subr.mxu0 0.0
    %2289 = vmatpush1.msra.mxu0 0.0
    %2290 = vmatprep.subr.mxu0 0.0
    %2291 = vmatpush1.msra.mxu0 0.0
    %2292 = vmatprep.subr.mxu0 0.0
    %2293 = vmatpush1.msra.mxu0 0.0
    %2294 = vmatprep.subr.mxu0 0.0
    %2295 = vmatpush1.msra.mxu0 0.0
    %2296 = vmatprep.subr.mxu0 0.0
    %2297 = vmatpush1.msra.mxu0 0.0
    %2298 = vmatprep.subr.mxu0 0.0
    %2299 = vmatpush1.msra.mxu0 0.0
    %2300 = vmatprep.subr.mxu0 0.0
    %2301 = vmatpush1.msra.mxu0 0.0
    %2302 = vmatprep.subr.mxu0 0.0
    %2303 = vmatpush1.msra.mxu0 0.0
    %2304 = vmatprep.subr.mxu0 0.0
    %2305 = vmatpush1.msra.mxu0 0.0
    %2306 = vmatprep.subr.mxu0 0.0
    %2307 = vmatpush1.msra.mxu0 0.0
    %2308 = vmatprep.subr.mxu0 0.0
    %2309 = vmatpush1.msra.mxu0 0.0
    %2310 = vmatprep.subr.mxu0 0.0
    %2311 = vmatpush1.msra.mxu0 0.0
    %2312 = vmatprep.subr.mxu0 0.0
    %2313 = vmatpush1.msra.mxu0 0.0
    %2314 = vmatprep.subr.mxu0 0.0
    %2315 = vmatpush1.msra.mxu0 0.0
    %2316 = vmatprep.subr.mxu0 0.0
    %2317 = vmatpush1.msra.mxu0 0.0
    %2318 = vmatprep.subr.mxu0 0.0
    %2319 = vmatpush1.msra.mxu0 0.0
    %2320 = vmatprep.subr.mxu0 0.0
    %2321 = vmatpush1.msra.mxu0 0.0
    %2322 = vmatprep.mubr.f32.mxu0 0.0
    %2323 = vmatmul.mubr.f32.gmra.mrb[0].mxu0 %v2253
    %v2324 = vpop.f32.mrb[0].mxu0
    %v2325 = vadd.f32 %v2240, %v2324
    %v2326 = vpop.f32.mrb[0].mxu0
    %v2327 = vadd.f32 %v2244, %v2326
    %2328 = vmatprep.mubr.f32.mxu0 0.0
    %2329 = vmatmul.mubr.f32.gmra.mrb[0].mxu0 %v2256
    %v2330 = vpop.f32.mrb[0].mxu0
    %v2331 = vadd.f32 %v2240, %v2330
    %v2332 = vpop.f32.mrb[0].mxu0
    %v2333 = vadd.f32 %v2244, %v2332
    %2334 = vdwg.mxu0
    %2335 = vmatprep.subr.mxu0 0.0
    %2336 = vmatpush1.msra.mxu0 %v2224
    %2337 = vmatprep.subr.mxu0 0.0
    %2338 = vmatpush1.msra.mxu0 %v2227
    %2339 = vmatprep.subr.mxu0 0.0
    %2340 = vmatpush1.msra.mxu0 %v2230
    %2341 = vmatprep.subr.mxu0 0.0
    %2342 = vmatpush1.msra.mxu0 %v2233
    %2343 = vmatprep.subr.mxu0 0.0
    %2344 = vmatpush1.msra.mxu0 0.0
    %2345 = vmatprep.subr.mxu0 0.0
    %2346 = vmatpush1.msra.mxu0 0.0
    %2347 = vmatprep.subr.mxu0 0.0
    %2348 = vmatpush1.msra.mxu0 0.0
    %2349 = vmatprep.subr.mxu0 0.0
    %2350 = vmatpush1.msra.mxu0 0.0
    %2351 = vmatprep.subr.mxu0 0.0
    %2352 = vmatpush1.msra.mxu0 0.0
    %2353 = vmatprep.subr.mxu0 0.0
    %2354 = vmatpush1.msra.mxu0 0.0
    %2355 = vmatprep.subr.mxu0 0.0
    %2356 = vmatpush1.msra.mxu0 0.0
    %2357 = vmatprep.subr.mxu0 0.0
    %2358 = vmatpush1.msra.mxu0 0.0
    %2359 = vmatprep.subr.mxu0 0.0
    %2360 = vmatpush1.msra.mxu0 0.0
    %2361 = vmatprep.subr.mxu0 0.0
    %2362 = vmatpush1.msra.mxu0 0.0
    %2363 = vmatprep.subr.mxu0 0.0
    %2364 = vmatpush1.msra.mxu0 0.0
    %2365 = vmatprep.subr.mxu0 0.0
    %2366 = vmatpush1.msra.mxu0 0.0
    %2367 = vmatprep.subr.mxu0 0.0
    %2368 = vmatpush1.msra.mxu0 0.0
    %2369 = vmatprep.subr.mxu0 0.0
    %2370 = vmatpush1.msra.mxu0 0.0
    %2371 = vmatprep.subr.mxu0 0.0
    %2372 = vmatpush1.msra.mxu0 0.0
    %2373 = vmatprep.subr.mxu0 0.0
    %2374 = vmatpush1.msra.mxu0 0.0
    %2375 = vmatprep.subr.mxu0 0.0
    %2376 = vmatpush1.msra.mxu0 0.0
    %2377 = vmatprep.subr.mxu0 0.0
    %2378 = vmatpush1.msra.mxu0 0.0
    %2379 = vmatprep.subr.mxu0 0.0
    %2380 = vmatpush1.msra.mxu0 0.0
    %2381 = vmatprep.subr.mxu0 0.0
    %2382 = vmatpush1.msra.mxu0 0.0
    %2383 = vmatprep.subr.mxu0 0.0
    %2384 = vmatpush1.msra.mxu0 0.0
    %2385 = vmatprep.subr.mxu0 0.0
    %2386 = vmatpush1.msra.mxu0 0.0
    %2387 = vmatprep.subr.mxu0 0.0
    %2388 = vmatpush1.msra.mxu0 0.0
    %2389 = vmatprep.subr.mxu0 0.0
    %2390 = vmatpush1.msra.mxu0 0.0
    %2391 = vmatprep.subr.mxu0 0.0
    %2392 = vmatpush1.msra.mxu0 0.0
    %2393 = vmatprep.subr.mxu0 0.0
    %2394 = vmatpush1.msra.mxu0 0.0
    %2395 = vmatprep.subr.mxu0 0.0
    %2396 = vmatpush1.msra.mxu0 0.0
    %2397 = vmatprep.subr.mxu0 0.0
    %2398 = vmatpush1.msra.mxu0 0.0
    %2399 = vmatprep.mubr.f32.mxu0 0.0
    %2400 = vmatmul.mubr.f32.gmra.mrb[0].mxu0 %v2253
    %v2401 = vpop.f32.mrb[0].mxu0
    %v2402 = vadd.f32 %v2248, %v2401
    %v2403 = vpop.f32.mrb[0].mxu0
    %2404 = vmatprep.mubr.f32.mxu0 0.0
    %2405 = vmatmul.mubr.f32.gmra.mrb[0].mxu0 %v2256
    %v2406 = vpop.f32.mrb[0].mxu0
    %v2407 = vadd.f32 %v2248, %v2406
    %v2408 = vpop.f32.mrb[0].mxu0
    %2409 = vdwg.mxu0
    %v2410 = vmul.f32 %v2325, %v2327
    %v2411 = vmul.f32 %v2331, %v2333
    %v2412 = vmul.f32 %v2325, %v2333
    %v2413 = vmul.f32 %v2331, %v2327
    %2414 = vmatprep.subr.mxu0 0.0
    %2415 = vmatpush1.msra.mxu0 %v539
    %2416 = vmatprep.subr.mxu0 0.0
    %2417 = vmatpush1.msra.mxu0 %v540
    %2418 = vmatprep.subr.mxu0 0.0
    %2419 = vmatpush1.msra.mxu0 %v541
    %2420 = vmatprep.subr.mxu0 0.0
    %2421 = vmatpush1.msra.mxu0 %v542
    %2422 = vmatprep.subr.mxu0 0.0
    %2423 = vmatpush1.msra.mxu0 %v543
    %2424 = vmatprep.subr.mxu0 0.0
    %2425 = vmatpush1.msra.mxu0 %v544
    %2426 = vmatprep.subr.mxu0 0.0
    %2427 = vmatpush1.msra.mxu0 %v545
    %2428 = vmatprep.subr.mxu0 0.0
    %2429 = vmatpush1.msra.mxu0 %v546
    %2430 = vmatprep.subr.mxu0 0.0
    %2431 = vmatpush1.msra.mxu0 %v547
    %2432 = vmatprep.subr.mxu0 0.0
    %2433 = vmatpush1.msra.mxu0 %v548
    %2434 = vmatprep.subr.mxu0 0.0
    %2435 = vmatpush1.msra.mxu0 %v549
    %2436 = vmatprep.subr.mxu0 0.0
    %2437 = vmatpush1.msra.mxu0 %v550
    %2438 = vmatprep.subr.mxu0 0.0
    %2439 = vmatpush1.msra.mxu0 %v551
    %2440 = vmatprep.subr.mxu0 0.0
    %2441 = vmatpush1.msra.mxu0 %v552
    %2442 = vmatprep.subr.mxu0 0.0
    %2443 = vmatpush1.msra.mxu0 %v553
    %2444 = vmatprep.subr.mxu0 0.0
    %2445 = vmatpush1.msra.mxu0 %v554
    %2446 = vmatprep.subr.mxu0 0.0
    %2447 = vmatpush1.msra.mxu0 0.0
    %2448 = vmatprep.subr.mxu0 0.0
    %2449 = vmatpush1.msra.mxu0 0.0
    %2450 = vmatprep.subr.mxu0 0.0
    %2451 = vmatpush1.msra.mxu0 0.0
    %2452 = vmatprep.subr.mxu0 0.0
    %2453 = vmatpush1.msra.mxu0 0.0
    %2454 = vmatprep.subr.mxu0 0.0
    %2455 = vmatpush1.msra.mxu0 0.0
    %2456 = vmatprep.subr.mxu0 0.0
    %2457 = vmatpush1.msra.mxu0 0.0
    %2458 = vmatprep.subr.mxu0 0.0
    %2459 = vmatpush1.msra.mxu0 0.0
    %2460 = vmatprep.subr.mxu0 0.0
    %2461 = vmatpush1.msra.mxu0 0.0
    %2462 = vmatprep.subr.mxu0 0.0
    %2463 = vmatpush1.msra.mxu0 0.0
    %2464 = vmatprep.subr.mxu0 0.0
    %2465 = vmatpush1.msra.mxu0 0.0
    %2466 = vmatprep.subr.mxu0 0.0
    %2467 = vmatpush1.msra.mxu0 0.0
    %2468 = vmatprep.subr.mxu0 0.0
    %2469 = vmatpush1.msra.mxu0 0.0
    %2470 = vmatprep.subr.mxu0 0.0
    %2471 = vmatpush1.msra.mxu0 0.0
    %2472 = vmatprep.subr.mxu0 0.0
    %2473 = vmatpush1.msra.mxu0 0.0
    %2474 = vmatprep.subr.mxu0 0.0
    %2475 = vmatpush1.msra.mxu0 0.0
    %2476 = vmatprep.subr.mxu0 0.0
    %2477 = vmatpush1.msra.mxu0 0.0
    %2478 = vmatprep.mubr.f32.mxu0 0.0
    %2479 = vmatmul.mubr.f32.gmra.mrb[0].mxu0 %v2410
    %v2480 = vpop.f32.mrb[0].mxu0
    %v2481 = vadd.f32 0.0, %v2480
    %v2482 = vpop.f32.mrb[0].mxu0
    %2483 = vmatprep.mubr.f32.mxu0 0.0
    %2484 = vmatmul.mubr.f32.gmra.mrb[0].mxu0 %v2411
    %v2485 = vpop.f32.mrb[0].mxu0
    %v2486 = vadd.f32 0.0, %v2485
    %v2487 = vpop.f32.mrb[0].mxu0
    %2488 = vmatprep.mubr.f32.mxu0 0.0
    %2489 = vmatmul.mubr.f32.gmra.mrb[0].mxu0 %v2412
    %v2490 = vpop.f32.mrb[0].mxu0
    %v2491 = vadd.f32 0.0, %v2490
    %v2492 = vpop.f32.mrb[0].mxu0
    %2493 = vmatprep.mubr.f32.mxu0 0.0
    %2494 = vmatmul.mubr.f32.gmra.mrb[0].mxu0 %v2413
    %v2495 = vpop.f32.mrb[0].mxu0
    %v2496 = vadd.f32 0.0, %v2495
    %v2497 = vpop.f32.mrb[0].mxu0
    %2498 = vdwg.mxu0
    %v2499 = vmax.f32 %v2481, %v2491
    %v2500 = vmax.f32 %v2486, %v2496
    %v2501 = vsub.f32 %v2481, %v2499
    %v2502 = vsub.f32 %v2486, %v2500
    %v2503 = vmul.f32 %v2501, 1.442695
    %v2504 = vpow.pop %v2503
    %v2505 = vmul.f32 %v2502, 1.442695
    %v2506 = vpow.pop %v2505
    %v2507 = vsub.f32 %v2491, %v2499
    %v2508 = vsub.f32 %v2496, %v2500
    %v2509 = vmul.f32 %v2507, 1.442695
    %v2510 = vpow.pop %v2509
    %v2511 = vmul.f32 %v2508, 1.442695
    %v2512 = vpow.pop %v2511
    %v2513 = vadd.f32 %v2504, %v2510
    %v2514 = vadd.f32 %v2506, %v2512
    %v2515 = vrcp.pop %v2513
    %v2516 = vrcp.pop %v2514
    %v2517 = vmul.f32 %v2504, %v2515
    %v2518 = vmul.f32 %v2506, %v2516
    %v2519 = vmul.f32 %v2510, %v2515
    %v2520 = vmul.f32 %v2512, %v2516
    %v2522 = vsel %vm1291, %v2517, 0
    %v2525 = vsel %vm1291, %v2518, 0
    %v2528 = vsel %vm1291, %v2519, 0
    %v2531 = vsel %vm1291, %v2520, 0
    %2533 = vmatprep.subr.mxu0 0.0
    %2534 = vmatpush1.msra.mxu0 %v1306
    %2535 = vmatprep.subr.mxu0 0.0
    %2536 = vmatpush1.msra.mxu0 0.0
    %2537 = vmatprep.subr.mxu0 0.0
    %2538 = vmatpush1.msra.mxu0 0.0
    %2539 = vmatprep.subr.mxu0 0.0
    %2540 = vmatpush1.msra.mxu0 0.0
    %2541 = vmatprep.subr.mxu0 0.0
    %2542 = vmatpush1.msra.mxu0 0.0
    %2543 = vmatprep.subr.mxu0 0.0
    %2544 = vmatpush1.msra.mxu0 0.0
    %2545 = vmatprep.subr.mxu0 0.0
    %2546 = vmatpush1.msra.mxu0 0.0
    %2547 = vmatprep.subr.mxu0 0.0
    %2548 = vmatpush1.msra.mxu0 0.0
    %2549 = vmatprep.subr.mxu0 0.0
    %2550 = vmatpush1.msra.mxu0 0.0
    %2551 = vmatprep.subr.mxu0 0.0
    %2552 = vmatpush1.msra.mxu0 0.0
    %2553 = vmatprep.subr.mxu0 0.0
    %2554 = vmatpush1.msra.mxu0 0.0
    %2555 = vmatprep.subr.mxu0 0.0
    %2556 = vmatpush1.msra.mxu0 0.0
    %2557 = vmatprep.subr.mxu0 0.0
    %2558 = vmatpush1.msra.mxu0 0.0
    %2559 = vmatprep.subr.mxu0 0.0
    %2560 = vmatpush1.msra.mxu0 0.0
    %2561 = vmatprep.subr.mxu0 0.0
    %2562 = vmatpush1.msra.mxu0 0.0
    %2563 = vmatprep.subr.mxu0 0.0
    %2564 = vmatpush1.msra.mxu0 0.0
    %2565 = vmatprep.subr.mxu0 0.0
    %2566 = vmatpush1.msra.mxu0 0.0
    %2567 = vmatprep.subr.mxu0 0.0
    %2568 = vmatpush1.msra.mxu0 0.0
    %2569 = vmatprep.subr.mxu0 0.0
    %2570 = vmatpush1.msra.mxu0 0.0
    %2571 = vmatprep.subr.mxu0 0.0
    %2572 = vmatpush1.msra.mxu0 0.0
    %2573 = vmatprep.subr.mxu0 0.0
    %2574 = vmatpush1.msra.mxu0 0.0
    %2575 = vmatprep.subr.mxu0 0.0
    %2576 = vmatpush1.msra.mxu0 0.0
    %2577 = vmatprep.subr.mxu0 0.0
    %2578 = vmatpush1.msra.mxu0 0.0
    %2579 = vmatprep.subr.mxu0 0.0
    %2580 = vmatpush1.msra.mxu0 0.0
    %2581 = vmatprep.subr.mxu0 0.0
    %2582 = vmatpush1.msra.mxu0 0.0
    %2583 = vmatprep.subr.mxu0 0.0
    %2584 = vmatpush1.msra.mxu0 0.0
    %2585 = vmatprep.subr.mxu0 0.0
    %2586 = vmatpush1.msra.mxu0 0.0
    %2587 = vmatprep.subr.mxu0 0.0
    %2588 = vmatpush1.msra.mxu0 0.0
    %2589 = vmatprep.subr.mxu0 0.0
    %2590 = vmatpush1.msra.mxu0 0.0
    %2591 = vmatprep.subr.mxu0 0.0
    %2592 = vmatpush1.msra.mxu0 0.0
    %2593 = vmatprep.subr.mxu0 0.0
    %2594 = vmatpush1.msra.mxu0 0.0
    %2595 = vmatprep.subr.mxu0 0.0
    %2596 = vmatpush1.msra.mxu0 0.0
    %2597 = vmatprep.mubr.f32.mxu0 0.0
    %2598 = vmatmul.mubr.f32.gmra.mrb[0].mxu0 %v2522
    %v2599 = vpop.f32.mrb[0].mxu0
    %v2600 = vadd.f32 0.0, %v2599
    %v2601 = vpop.f32.mrb[0].mxu0
    %2602 = vmatprep.mubr.f32.mxu0 0.0
    %2603 = vmatmul.mubr.f32.gmra.mrb[0].mxu0 %v2525
    %v2604 = vpop.f32.mrb[0].mxu0
    %v2605 = vadd.f32 0.0, %v2604
    %v2606 = vpop.f32.mrb[0].mxu0
    %2607 = vmatprep.mubr.f32.mxu0 0.0
    %2608 = vmatmul.mubr.f32.gmra.mrb[0].mxu0 %v2528
    %v2609 = vpop.f32.mrb[0].mxu0
    %v2610 = vadd.f32 0.0, %v2609
    %v2611 = vpop.f32.mrb[0].mxu0
    %2612 = vmatprep.mubr.f32.mxu0 0.0
    %2613 = vmatmul.mubr.f32.gmra.mrb[0].mxu0 %v2531
    %v2614 = vpop.f32.mrb[0].mxu0
    %v2615 = vadd.f32 0.0, %v2614
    %v2616 = vpop.f32.mrb[0].mxu0
    %2617 = vdwg.mxu0
    %v2618 = vmul.f32 %v2600, %v2402
    %v2619 = vmul.f32 %v2605, %v2407
    %v2620 = vmul.f32 %v2610, %v2407
    %v2621 = vmul.f32 %v2615, %v2402
    %v2622 = vadd.f32 %v2618, %v2620
    %v2623 = vadd.f32 %v2619, %v2621
    %s2624 = scalar_lea.vmem %s27, 128
    %v2625 = vld [vmem:[%s2624] sm:$0xff]
    %v2626 = vld [vmem:[%s2624 + $0x8] sm:$0xff]
    %v2627 = vld [vmem:[%s2624 + $0x10] sm:$0xff]
    %v2628 = vld [vmem:[%s2624 + $0x18] sm:$0xff]
    %v2629 = vld [vmem:[%s2624 + $0x20] sm:$0xff]
    %v2630 = vld [vmem:[%s2624 + $0x28] sm:$0xff]
    %v2631 = vld [vmem:[%s2624 + $0x30] sm:$0xff]
    %v2632 = vld [vmem:[%s2624 + $0x38] sm:$0xff]
    %v2633 = vld [vmem:[%s2624 + $0x40] sm:$0xff]
    %v2634 = vld [vmem:[%s2624 + $0x48] sm:$0xff]
    %v2635 = vld [vmem:[%s2624 + $0x50] sm:$0xff]
    %v2636 = vld [vmem:[%s2624 + $0x58] sm:$0xff]
    %v2637 = vld [vmem:[%s2624 + $0x60] sm:$0xff]
    %v2638 = vld [vmem:[%s2624 + $0x68] sm:$0xff]
    %v2639 = vld [vmem:[%s2624 + $0x70] sm:$0xff]
    %v2640 = vld [vmem:[%s2624 + $0x78] sm:$0xff]
    %s2641 = scalar_lea.vmem [#allocation17], 1
    %v2642 = vld [vmem:[%s2641] sm:$0x1]
    %v2644 = vlaneseq
    %v2645 = vshrl.u32 %v2644, 7
    %v2646 = vsub.s32 0, %v2645
    %v2647 = vrot.slane %v2642, %v2646
    %2649 = vmatprep.subr.mxu0 0.0
    %2650 = vmatpush1.msra.mxu0 %v2625
    %2651 = vmatprep.subr.mxu0 0.0
    %2652 = vmatpush1.msra.mxu0 %v2626
    %2653 = vmatprep.subr.mxu0 0.0
    %2654 = vmatpush1.msra.mxu0 %v2627
    %2655 = vmatprep.subr.mxu0 0.0
    %2656 = vmatpush1.msra.mxu0 %v2628
    %2657 = vmatprep.subr.mxu0 0.0
    %2658 = vmatpush1.msra.mxu0 %v2629
    %2659 = vmatprep.subr.mxu0 0.0
    %2660 = vmatpush1.msra.mxu0 %v2630
    %2661 = vmatprep.subr.mxu0 0.0
    %2662 = vmatpush1.msra.mxu0 %v2631
    %2663 = vmatprep.subr.mxu0 0.0
    %2664 = vmatpush1.msra.mxu0 %v2632
    %2665 = vmatprep.subr.mxu0 0.0
    %2666 = vmatpush1.msra.mxu0 %v2633
    %2667 = vmatprep.subr.mxu0 0.0
    %2668 = vmatpush1.msra.mxu0 %v2634
    %2669 = vmatprep.subr.mxu0 0.0
    %2670 = vmatpush1.msra.mxu0 %v2635
    %2671 = vmatprep.subr.mxu0 0.0
    %2672 = vmatpush1.msra.mxu0 %v2636
    %2673 = vmatprep.subr.mxu0 0.0
    %2674 = vmatpush1.msra.mxu0 %v2637
    %2675 = vmatprep.subr.mxu0 0.0
    %2676 = vmatpush1.msra.mxu0 %v2638
    %2677 = vmatprep.subr.mxu0 0.0
    %2678 = vmatpush1.msra.mxu0 %v2639
    %2679 = vmatprep.subr.mxu0 0.0
    %2680 = vmatpush1.msra.mxu0 %v2640
    %2681 = vmatprep.subr.mxu0 0.0
    %2682 = vmatpush1.msra.mxu0 0.0
    %2683 = vmatprep.subr.mxu0 0.0
    %2684 = vmatpush1.msra.mxu0 0.0
    %2685 = vmatprep.subr.mxu0 0.0
    %2686 = vmatpush1.msra.mxu0 0.0
    %2687 = vmatprep.subr.mxu0 0.0
    %2688 = vmatpush1.msra.mxu0 0.0
    %2689 = vmatprep.subr.mxu0 0.0
    %2690 = vmatpush1.msra.mxu0 0.0
    %2691 = vmatprep.subr.mxu0 0.0
    %2692 = vmatpush1.msra.mxu0 0.0
    %2693 = vmatprep.subr.mxu0 0.0
    %2694 = vmatpush1.msra.mxu0 0.0
    %2695 = vmatprep.subr.mxu0 0.0
    %2696 = vmatpush1.msra.mxu0 0.0
    %2697 = vmatprep.subr.mxu0 0.0
    %2698 = vmatpush1.msra.mxu0 0.0
    %2699 = vmatprep.subr.mxu0 0.0
    %2700 = vmatpush1.msra.mxu0 0.0
    %2701 = vmatprep.subr.mxu0 0.0
    %2702 = vmatpush1.msra.mxu0 0.0
    %2703 = vmatprep.subr.mxu0 0.0
    %2704 = vmatpush1.msra.mxu0 0.0
    %2705 = vmatprep.subr.mxu0 0.0
    %2706 = vmatpush1.msra.mxu0 0.0
    %2707 = vmatprep.subr.mxu0 0.0
    %2708 = vmatpush1.msra.mxu0 0.0
    %2709 = vmatprep.subr.mxu0 0.0
    %2710 = vmatpush1.msra.mxu0 0.0
    %2711 = vmatprep.subr.mxu0 0.0
    %2712 = vmatpush1.msra.mxu0 0.0
    %2713 = vmatprep.mubr.f32.mxu0 0.0
    %2714 = vmatmul.mubr.f32.gmra.mrb[0].mxu0 %v2622
    %v2715 = vpop.f32.mrb[0].mxu0
    %v2716 = vadd.f32 %v2647, %v2715
    %v2717 = vpop.f32.mrb[0].mxu0
    %2718 = vmatprep.mubr.f32.mxu0 0.0
    %2719 = vmatmul.mubr.f32.gmra.mrb[0].mxu0 %v2623
    %v2720 = vpop.f32.mrb[0].mxu0
    %v2721 = vadd.f32 %v2647, %v2720
    %v2722 = vpop.f32.mrb[0].mxu0
    %2723 = vdwg.mxu0
    %v2724 = vadd.f32 %v2219, %v2716
    %v2725 = vadd.f32 %v2220, %v2721
    %s2726 = scalar_lea.vmem %s31, 1
    %v2727 = vld [vmem:[%s2726] sm:$0x1]
    %s2728 = scalar_lea.vmem %s33, 1
    %v2729 = vld [vmem:[%s2728] sm:$0x1]
    %v2730 = vsel %vm576, %v2724, 0.0
    %2731 = vadd.xlane.f32.xlu0 %v2730
    %v2732 = vpop.xlane.xlu0 %2731
    %v2733 = vsel %vm576, %v2725, 0.0
    %2734 = vadd.xlane.f32.xlu0 %v2733
    %v2735 = vpop.xlane.xlu0 %2734
    %v2736 = vmul.f32 %v2732, %v956
    %v2737 = vmul.f32 %v2735, %v956
    %v2738 = vsub.f32 %v2724, %v2736
    %v2739 = vsub.f32 %v2725, %v2737
    %v2740 = vmul.f32 %v2738, %v2738
    %v2741 = vmul.f32 %v2739, %v2739
    %v2742 = vsel %vm576, %v2740, 0.0
    %2743 = vadd.xlane.f32.xlu0 %v2742
    %v2744 = vpop.xlane.xlu0 %2743
    %v2745 = vsel %vm576, %v2741, 0.0
    %2746 = vadd.xlane.f32.xlu0 %v2745
    %v2747 = vpop.xlane.xlu0 %2746
    %v2748 = vmul.f32 %v2744, %v956
    %v2749 = vmul.f32 %v2747, %v956
    %v2750 = vadd.f32 %v2748, 1e-05
    %v2751 = vadd.f32 %v2749, 1e-05
    %v2752 = vrsqrt.pop %v2750
    %v2753 = vrsqrt.pop %v2751
    %v2754 = vmul.f32 %v2738, %v2752
    %v2755 = vmul.f32 %v2739, %v2753
    %v2757 = vlaneseq
    %v2758 = vshrl.u32 %v2757, 7
    %v2759 = vsub.s32 0, %v2758
    %v2760 = vrot.slane %v2727, %v2759
    %v2762 = vmul.f32 %v2754, %v2760
    %v2763 = vmul.f32 %v2755, %v2760
    %v2765 = vlaneseq
    %v2766 = vshrl.u32 %v2765, 7
    %v2767 = vsub.s32 0, %v2766
    %v2768 = vrot.slane %v2729, %v2767
    %v2770 = vadd.f32 %v2762, %v2768
    %v2771 = vadd.f32 %v2763, %v2768
    %s2772 = scalar_lea.vmem %s35, 32
    %v2773 = vld [vmem:[%s2772] sm:$0xff]
    %v2774 = vld [vmem:[%s2772 + $0x8] sm:$0xff]
    %v2775 = vld [vmem:[%s2772 + $0x10] sm:$0xff]
    %v2776 = vld [vmem:[%s2772 + $0x18] sm:$0xff]
    %s2777 = scalar_lea.vmem %s37, 1
    %v2778 = vld [vmem:[%s2777] sm:$0x1]
    %v2780 = vlaneseq
    %v2781 = vshrl.u32 %v2780, 7
    %v2782 = vsub.s32 0, %v2781
    %v2783 = vrot.slane %v2778, %v2782
    %v2786 = vsel %vm576, %v2770, 0
    %v2789 = vsel %vm576, %v2771, 0
    %2791 = vmatprep.subr.mxu0 0.0
    %2792 = vmatpush1.msra.mxu0 %v2773
    %2793 = vmatprep.subr.mxu0 0.0
    %2794 = vmatpush1.msra.mxu0 %v2774
    %2795 = vmatprep.subr.mxu0 0.0
    %2796 = vmatpush1.msra.mxu0 %v2775
    %2797 = vmatprep.subr.mxu0 0.0
    %2798 = vmatpush1.msra.mxu0 %v2776
    %2799 = vmatprep.subr.mxu0 0.0
    %2800 = vmatpush1.msra.mxu0 0.0
    %2801 = vmatprep.subr.mxu0 0.0
    %2802 = vmatpush1.msra.mxu0 0.0
    %2803 = vmatprep.subr.mxu0 0.0
    %2804 = vmatpush1.msra.mxu0 0.0
    %2805 = vmatprep.subr.mxu0 0.0
    %2806 = vmatpush1.msra.mxu0 0.0
    %2807 = vmatprep.subr.mxu0 0.0
    %2808 = vmatpush1.msra.mxu0 0.0
    %2809 = vmatprep.subr.mxu0 0.0
    %2810 = vmatpush1.msra.mxu0 0.0
    %2811 = vmatprep.subr.mxu0 0.0
    %2812 = vmatpush1.msra.mxu0 0.0
    %2813 = vmatprep.subr.mxu0 0.0
    %2814 = vmatpush1.msra.mxu0 0.0
    %2815 = vmatprep.subr.mxu0 0.0
    %2816 = vmatpush1.msra.mxu0 0.0
    %2817 = vmatprep.subr.mxu0 0.0
    %2818 = vmatpush1.msra.mxu0 0.0
    %2819 = vmatprep.subr.mxu0 0.0
    %2820 = vmatpush1.msra.mxu0 0.0
    %2821 = vmatprep.subr.mxu0 0.0
    %2822 = vmatpush1.msra.mxu0 0.0
    %2823 = vmatprep.subr.mxu0 0.0
    %2824 = vmatpush1.msra.mxu0 0.0
    %2825 = vmatprep.subr.mxu0 0.0
    %2826 = vmatpush1.msra.mxu0 0.0
    %2827 = vmatprep.subr.mxu0 0.0
    %2828 = vmatpush1.msra.mxu0 0.0
    %2829 = vmatprep.subr.mxu0 0.0
    %2830 = vmatpush1.msra.mxu0 0.0
    %2831 = vmatprep.subr.mxu0 0.0
    %2832 = vmatpush1.msra.mxu0 0.0
    %2833 = vmatprep.subr.mxu0 0.0
    %2834 = vmatpush1.msra.mxu0 0.0
    %2835 = vmatprep.subr.mxu0 0.0
    %2836 = vmatpush1.msra.mxu0 0.0
    %2837 = vmatprep.subr.mxu0 0.0
    %2838 = vmatpush1.msra.mxu0 0.0
    %2839 = vmatprep.subr.mxu0 0.0
    %2840 = vmatpush1.msra.mxu0 0.0
    %2841 = vmatprep.subr.mxu0 0.0
    %2842 = vmatpush1.msra.mxu0 0.0
    %2843 = vmatprep.subr.mxu0 0.0
    %2844 = vmatpush1.msra.mxu0 0.0
    %2845 = vmatprep.subr.mxu0 0.0
    %2846 = vmatpush1.msra.mxu0 0.0
    %2847 = vmatprep.subr.mxu0 0.0
    %2848 = vmatpush1.msra.mxu0 0.0
    %2849 = vmatprep.subr.mxu0 0.0
    %2850 = vmatpush1.msra.mxu0 0.0
    %2851 = vmatprep.subr.mxu0 0.0
    %2852 = vmatpush1.msra.mxu0 0.0
    %2853 = vmatprep.subr.mxu0 0.0
    %2854 = vmatpush1.msra.mxu0 0.0
    %2855 = vmatprep.mubr.f32.mxu0 0.0
    %2856 = vmatmul.mubr.f32.gmra.mrb[0].mxu0 %v2786
    %v2857 = vpop.f32.mrb[0].mxu0
    %v2858 = vadd.f32 %v2783, %v2857
    %v2859 = vpop.f32.mrb[0].mxu0
    %2860 = vmatprep.mubr.f32.mxu0 0.0
    %2861 = vmatmul.mubr.f32.gmra.mrb[0].mxu0 %v2789
    %v2862 = vpop.f32.mrb[0].mxu0
    %v2863 = vadd.f32 %v2783, %v2862
    %v2864 = vpop.f32.mrb[0].mxu0
    %2865 = vdwg.mxu0
    %v2866 = vmax.f32 %v2858, 0.0
    %v2867 = vmax.f32 %v2863, 0.0
    %s2868 = scalar_lea.vmem %s39, 64
    %v2869 = vld [vmem:[%s2868] sm:$0xff]
    %v2870 = vld [vmem:[%s2868 + $0x8] sm:$0xff]
    %v2871 = vld [vmem:[%s2868 + $0x10] sm:$0xff]
    %v2872 = vld [vmem:[%s2868 + $0x18] sm:$0xff]
    %v2873 = vld [vmem:[%s2868 + $0x20] sm:$0xff]
    %v2874 = vld [vmem:[%s2868 + $0x28] sm:$0xff]
    %v2875 = vld [vmem:[%s2868 + $0x30] sm:$0xff]
    %v2876 = vld [vmem:[%s2868 + $0x38] sm:$0xff]
    %s2877 = scalar_lea.vmem %s41, 1
    %v2878 = vld [vmem:[%s2877] sm:$0x1]
    %v2880 = vlaneseq
    %v2881 = vshrl.u32 %v2880, 7
    %v2882 = vsub.s32 0, %v2881
    %v2883 = vrot.slane %v2878, %v2882
    %v2886 = vsel %vm1652, %v2866, 0
    %v2889 = vsel %vm1652, %v2867, 0
    %2891 = vmatprep.subr.mxu0 0.0
    %2892 = vmatpush1.msra.mxu0 %v2869
    %2893 = vmatprep.subr.mxu0 0.0
    %2894 = vmatpush1.msra.mxu0 %v2870
    %2895 = vmatprep.subr.mxu0 0.0
    %2896 = vmatpush1.msra.mxu0 %v2871
    %2897 = vmatprep.subr.mxu0 0.0
    %2898 = vmatpush1.msra.mxu0 %v2872
    %2899 = vmatprep.subr.mxu0 0.0
    %2900 = vmatpush1.msra.mxu0 %v2873
    %2901 = vmatprep.subr.mxu0 0.0
    %2902 = vmatpush1.msra.mxu0 %v2874
    %2903 = vmatprep.subr.mxu0 0.0
    %2904 = vmatpush1.msra.mxu0 %v2875
    %2905 = vmatprep.subr.mxu0 0.0
    %2906 = vmatpush1.msra.mxu0 %v2876
    %2907 = vmatprep.subr.mxu0 0.0
    %2908 = vmatpush1.msra.mxu0 0.0
    %2909 = vmatprep.subr.mxu0 0.0
    %2910 = vmatpush1.msra.mxu0 0.0
    %2911 = vmatprep.subr.mxu0 0.0
    %2912 = vmatpush1.msra.mxu0 0.0
    %2913 = vmatprep.subr.mxu0 0.0
    %2914 = vmatpush1.msra.mxu0 0.0
    %2915 = vmatprep.subr.mxu0 0.0
    %2916 = vmatpush1.msra.mxu0 0.0
    %2917 = vmatprep.subr.mxu0 0.0
    %2918 = vmatpush1.msra.mxu0 0.0
    %2919 = vmatprep.subr.mxu0 0.0
    %2920 = vmatpush1.msra.mxu0 0.0
    %2921 = vmatprep.subr.mxu0 0.0
    %2922 = vmatpush1.msra.mxu0 0.0
    %2923 = vmatprep.subr.mxu0 0.0
    %2924 = vmatpush1.msra.mxu0 0.0
    %2925 = vmatprep.subr.mxu0 0.0
    %2926 = vmatpush1.msra.mxu0 0.0
    %2927 = vmatprep.subr.mxu0 0.0
    %2928 = vmatpush1.msra.mxu0 0.0
    %2929 = vmatprep.subr.mxu0 0.0
    %2930 = vmatpush1.msra.mxu0 0.0
    %2931 = vmatprep.subr.mxu0 0.0
    %2932 = vmatpush1.msra.mxu0 0.0
    %2933 = vmatprep.subr.mxu0 0.0
    %2934 = vmatpush1.msra.mxu0 0.0
    %2935 = vmatprep.subr.mxu0 0.0
    %2936 = vmatpush1.msra.mxu0 0.0
    %2937 = vmatprep.subr.mxu0 0.0
    %2938 = vmatpush1.msra.mxu0 0.0
    %2939 = vmatprep.subr.mxu0 0.0
    %2940 = vmatpush1.msra.mxu0 0.0
    %2941 = vmatprep.subr.mxu0 0.0
    %2942 = vmatpush1.msra.mxu0 0.0
    %2943 = vmatprep.subr.mxu0 0.0
    %2944 = vmatpush1.msra.mxu0 0.0
    %2945 = vmatprep.subr.mxu0 0.0
    %2946 = vmatpush1.msra.mxu0 0.0
    %2947 = vmatprep.subr.mxu0 0.0
    %2948 = vmatpush1.msra.mxu0 0.0
    %2949 = vmatprep.subr.mxu0 0.0
    %2950 = vmatpush1.msra.mxu0 0.0
    %2951 = vmatprep.subr.mxu0 0.0
    %2952 = vmatpush1.msra.mxu0 0.0
    %2953 = vmatprep.subr.mxu0 0.0
    %2954 = vmatpush1.msra.mxu0 0.0
    %2955 = vmatprep.mubr.f32.mxu0 0.0
    %2956 = vmatmul.mubr.f32.gmra.mrb[0].mxu0 %v2886
    %v2957 = vpop.f32.mrb[0].mxu0
    %v2958 = vadd.f32 %v2883, %v2957
    %v2959 = vpop.f32.mrb[0].mxu0
    %2960 = vmatprep.mubr.f32.mxu0 0.0
    %2961 = vmatmul.mubr.f32.gmra.mrb[0].mxu0 %v2889
    %v2962 = vpop.f32.mrb[0].mxu0
    %v2963 = vadd.f32 %v2883, %v2962
    %v2964 = vpop.f32.mrb[0].mxu0
    %2965 = vdwg.mxu0
    %v2966 = vadd.f32 %v2770, %v2958
    %v2967 = vadd.f32 %v2771, %v2963
    %s2968 = scalar_lea.vmem %s43, 1
    %v2969 = vld [vmem:[%s2968] sm:$0x1]
    %s2970 = scalar_lea.vmem %s45, 1
    %v2971 = vld [vmem:[%s2970] sm:$0x1]
    %v2972 = vsel %vm576, %v2966, 0.0
    %2973 = vadd.xlane.f32.xlu0 %v2972
    %v2974 = vpop.xlane.xlu0 %2973
    %v2975 = vsel %vm576, %v2967, 0.0
    %2976 = vadd.xlane.f32.xlu0 %v2975
    %v2977 = vpop.xlane.xlu0 %2976
    %v2978 = vmul.f32 %v2974, %v956
    %v2979 = vmul.f32 %v2977, %v956
    %v2980 = vsub.f32 %v2966, %v2978
    %v2981 = vsub.f32 %v2967, %v2979
    %v2982 = vmul.f32 %v2980, %v2980
    %v2983 = vmul.f32 %v2981, %v2981
    %v2984 = vsel %vm576, %v2982, 0.0
    %2985 = vadd.xlane.f32.xlu0 %v2984
    %v2986 = vpop.xlane.xlu0 %2985
    %v2987 = vsel %vm576, %v2983, 0.0
    %2988 = vadd.xlane.f32.xlu0 %v2987
    %v2989 = vpop.xlane.xlu0 %2988
    %v2990 = vmul.f32 %v2986, %v956
    %v2991 = vmul.f32 %v2989, %v956
    %v2992 = vadd.f32 %v2990, 1e-05
    %v2993 = vadd.f32 %v2991, 1e-05
    %v2994 = vrsqrt.pop %v2992
    %v2995 = vrsqrt.pop %v2993
    %v2996 = vmul.f32 %v2980, %v2994
    %v2997 = vmul.f32 %v2981, %v2995
    %v2999 = vlaneseq
    %v3000 = vshrl.u32 %v2999, 7
    %v3001 = vsub.s32 0, %v3000
    %v3002 = vrot.slane %v2969, %v3001
    %v3004 = vmul.f32 %v2996, %v3002
    %v3005 = vmul.f32 %v2997, %v3002
    %v3007 = vlaneseq
    %v3008 = vshrl.u32 %v3007, 7
    %v3009 = vsub.s32 0, %v3008
    %v3010 = vrot.slane %v2971, %v3009
    %v3012 = vadd.f32 %v3004, %v3010
    %v3013 = vadd.f32 %v3005, %v3010
    %v3014 = vld [vmem:[#allocation5] sm:$0xff]
    %v3015 = vld [vmem:[#allocation5 + $0x8] sm:$0xff]
    %v3017 = vsel %vm425, %v3014, 0
    %v3020 = vsel %vm425, %v3015, 0
    %3022 = vmatprep.subr.mxu0 0.0
    %3023 = vmatpush1.msra.mxu0 %v3012
    %3024 = vmatprep.subr.mxu0 0.0
    %3025 = vmatpush1.msra.mxu0 %v3013
    %3026 = vmatprep.subr.mxu0 0.0
    %3027 = vmatpush1.msra.mxu0 0.0
    %3028 = vmatprep.subr.mxu0 0.0
    %3029 = vmatpush1.msra.mxu0 0.0
    %3030 = vmatprep.subr.mxu0 0.0
    %3031 = vmatpush1.msra.mxu0 0.0
    %3032 = vmatprep.subr.mxu0 0.0
    %3033 = vmatpush1.msra.mxu0 0.0
    %3034 = vmatprep.subr.mxu0 0.0
    %3035 = vmatpush1.msra.mxu0 0.0
    %3036 = vmatprep.subr.mxu0 0.0
    %3037 = vmatpush1.msra.mxu0 0.0
    %3038 = vmatprep.subr.mxu0 0.0
    %3039 = vmatpush1.msra.mxu0 0.0
    %3040 = vmatprep.subr.mxu0 0.0
    %3041 = vmatpush1.msra.mxu0 0.0
    %3042 = vmatprep.subr.mxu0 0.0
    %3043 = vmatpush1.msra.mxu0 0.0
    %3044 = vmatprep.subr.mxu0 0.0
    %3045 = vmatpush1.msra.mxu0 0.0
    %3046 = vmatprep.subr.mxu0 0.0
    %3047 = vmatpush1.msra.mxu0 0.0
    %3048 = vmatprep.subr.mxu0 0.0
    %3049 = vmatpush1.msra.mxu0 0.0
    %3050 = vmatprep.subr.mxu0 0.0
    %3051 = vmatpush1.msra.mxu0 0.0
    %3052 = vmatprep.subr.mxu0 0.0
    %3053 = vmatpush1.msra.mxu0 0.0
    %3054 = vmatprep.subr.mxu0 0.0
    %3055 = vmatpush1.msra.mxu0 0.0
    %3056 = vmatprep.subr.mxu0 0.0
    %3057 = vmatpush1.msra.mxu0 0.0
    %3058 = vmatprep.subr.mxu0 0.0
    %3059 = vmatpush1.msra.mxu0 0.0
    %3060 = vmatprep.subr.mxu0 0.0
    %3061 = vmatpush1.msra.mxu0 0.0
    %3062 = vmatprep.subr.mxu0 0.0
    %3063 = vmatpush1.msra.mxu0 0.0
    %3064 = vmatprep.subr.mxu0 0.0
    %3065 = vmatpush1.msra.mxu0 0.0
    %3066 = vmatprep.subr.mxu0 0.0
    %3067 = vmatpush1.msra.mxu0 0.0
    %3068 = vmatprep.subr.mxu0 0.0
    %3069 = vmatpush1.msra.mxu0 0.0
    %3070 = vmatprep.subr.mxu0 0.0
    %3071 = vmatpush1.msra.mxu0 0.0
    %3072 = vmatprep.subr.mxu0 0.0
    %3073 = vmatpush1.msra.mxu0 0.0
    %3074 = vmatprep.subr.mxu0 0.0
    %3075 = vmatpush1.msra.mxu0 0.0
    %3076 = vmatprep.subr.mxu0 0.0
    %3077 = vmatpush1.msra.mxu0 0.0
    %3078 = vmatprep.subr.mxu0 0.0
    %3079 = vmatpush1.msra.mxu0 0.0
    %3080 = vmatprep.subr.mxu0 0.0
    %3081 = vmatpush1.msra.mxu0 0.0
    %3082 = vmatprep.subr.mxu0 0.0
    %3083 = vmatpush1.msra.mxu0 0.0
    %3084 = vmatprep.subr.mxu0 0.0
    %3085 = vmatpush1.msra.mxu0 0.0
    %3086 = vmatprep.mubr.f32.mxu0 0.0
    %3087 = vmatmul.mubr.f32.gmra.mrb[0].mxu0 %v3017
    %v3088 = vpop.f32.mrb[0].mxu0
    %v3089 = vadd.f32 0.0, %v3088
    %v3090 = vpop.f32.mrb[0].mxu0
    %3091 = vmatprep.mubr.f32.mxu0 0.0
    %3092 = vmatmul.mubr.f32.gmra.mrb[0].mxu0 %v3020
    %v3093 = vpop.f32.mrb[0].mxu0
    %v3094 = vadd.f32 0.0, %v3093
    %v3095 = vpop.f32.mrb[0].mxu0
    %3096 = vdwg.mxu0
    %v3097 = vld [vmem:[%s47] sm:$0xff]
    %v3098 = vld [vmem:[%s47 + $0x8] sm:$0xff]
    %v3099 = vld [vmem:[%s47 + $0x10] sm:$0xff]
    %v3100 = vld [vmem:[%s47 + $0x18] sm:$0xff]
    %v3101 = vld [vmem:[%s49] sm:$0x1]
    %v3103 = vlaneseq
    %v3104 = vshrl.u32 %v3103, 7
    %v3105 = vsub.s32 0, %v3104
    %v3106 = vrot.slane %v3101, %v3105
    %v3109 = vsel %vm576, %v3089, 0
    %v3112 = vsel %vm576, %v3094, 0
    %3114 = vmatprep.subr.mxu0 0.0
    %3115 = vmatpush1.msra.mxu0 %v3097
    %3116 = vmatprep.subr.mxu0 0.0
    %3117 = vmatpush1.msra.mxu0 %v3098
    %3118 = vmatprep.subr.mxu0 0.0
    %3119 = vmatpush1.msra.mxu0 %v3099
    %3120 = vmatprep.subr.mxu0 0.0
    %3121 = vmatpush1.msra.mxu0 %v3100
    %3122 = vmatprep.subr.mxu0 0.0
    %3123 = vmatpush1.msra.mxu0 0.0
    %3124 = vmatprep.subr.mxu0 0.0
    %3125 = vmatpush1.msra.mxu0 0.0
    %3126 = vmatprep.subr.mxu0 0.0
    %3127 = vmatpush1.msra.mxu0 0.0
    %3128 = vmatprep.subr.mxu0 0.0
    %3129 = vmatpush1.msra.mxu0 0.0
    %3130 = vmatprep.subr.mxu0 0.0
    %3131 = vmatpush1.msra.mxu0 0.0
    %3132 = vmatprep.subr.mxu0 0.0
    %3133 = vmatpush1.msra.mxu0 0.0
    %3134 = vmatprep.subr.mxu0 0.0
    %3135 = vmatpush1.msra.mxu0 0.0
    %3136 = vmatprep.subr.mxu0 0.0
    %3137 = vmatpush1.msra.mxu0 0.0
    %3138 = vmatprep.subr.mxu0 0.0
    %3139 = vmatpush1.msra.mxu0 0.0
    %3140 = vmatprep.subr.mxu0 0.0
    %3141 = vmatpush1.msra.mxu0 0.0
    %3142 = vmatprep.subr.mxu0 0.0
    %3143 = vmatpush1.msra.mxu0 0.0
    %3144 = vmatprep.subr.mxu0 0.0
    %3145 = vmatpush1.msra.mxu0 0.0
    %3146 = vmatprep.subr.mxu0 0.0
    %3147 = vmatpush1.msra.mxu0 0.0
    %3148 = vmatprep.subr.mxu0 0.0
    %3149 = vmatpush1.msra.mxu0 0.0
    %3150 = vmatprep.subr.mxu0 0.0
    %3151 = vmatpush1.msra.mxu0 0.0
    %3152 = vmatprep.subr.mxu0 0.0
    %3153 = vmatpush1.msra.mxu0 0.0
    %3154 = vmatprep.subr.mxu0 0.0
    %3155 = vmatpush1.msra.mxu0 0.0
    %3156 = vmatprep.subr.mxu0 0.0
    %3157 = vmatpush1.msra.mxu0 0.0
    %3158 = vmatprep.subr.mxu0 0.0
    %3159 = vmatpush1.msra.mxu0 0.0
    %3160 = vmatprep.subr.mxu0 0.0
    %3161 = vmatpush1.msra.mxu0 0.0
    %3162 = vmatprep.subr.mxu0 0.0
    %3163 = vmatpush1.msra.mxu0 0.0
    %3164 = vmatprep.subr.mxu0 0.0
    %3165 = vmatpush1.msra.mxu0 0.0
    %3166 = vmatprep.subr.mxu0 0.0
    %3167 = vmatpush1.msra.mxu0 0.0
    %3168 = vmatprep.subr.mxu0 0.0
    %3169 = vmatpush1.msra.mxu0 0.0
    %3170 = vmatprep.subr.mxu0 0.0
    %3171 = vmatpush1.msra.mxu0 0.0
    %3172 = vmatprep.subr.mxu0 0.0
    %3173 = vmatpush1.msra.mxu0 0.0
    %3174 = vmatprep.subr.mxu0 0.0
    %3175 = vmatpush1.msra.mxu0 0.0
    %3176 = vmatprep.subr.mxu0 0.0
    %3177 = vmatpush1.msra.mxu0 0.0
    %3178 = vmatprep.mubr.f32.mxu0 0.0
    %3179 = vmatmul.mubr.f32.gmra.mrb[0].mxu0 %v3109
    %v3180 = vpop.f32.mrb[0].mxu0
    %v3181 = vadd.f32 %v3106, %v3180
    %v3182 = vpop.f32.mrb[0].mxu0
    %3183 = vmatprep.mubr.f32.mxu0 0.0
    %3184 = vmatmul.mubr.f32.gmra.mrb[0].mxu0 %v3112
    %v3185 = vpop.f32.mrb[0].mxu0
    %v3186 = vadd.f32 %v3106, %v3185
    %v3187 = vpop.f32.mrb[0].mxu0
    %3188 = vdwg.mxu0
    %3189 = vst.msk [vmem:[#allocation19] sm:$0xff] %vm260, %v3181
    %3190 = vst.msk [vmem:[#allocation19 + $0x8] sm:$0xff] %vm260, %v3186
    // Predicated region
    $region158: #{model_forward.1} parent=1 // pred_check
      _
    $region159: #{model_forward.1} parent=1 // pred_check_branch
      %3192 = sbr.rel (0) target = $region161
    $region160: #{model_forward.1} parent=1 // pred_region
      %s3194 = ssub.s32 256, 256
      %3195 = vsyncadd [#allocation4], %s3194
      %s3196 = sshll.u32 [#allocation19], 4
      %s3197 = int_to_ptr.vmem [resolvable:$true] %s3196
      %3202 = dma.vmem_to_hbm [thread:$0]  %s3197, 256, %s59, [#allocation4], 128, 128, 8
    $region161: #{model_forward.1} parent=1 // pred_fallthru
      _
    // Predicated region
    $region162: #{model_forward.1} parent=1 // pred_check
      _
    $region163: #{model_forward.1} parent=1 // pred_check_branch
      %3204 = sbr.rel (0) target = $region165
    $region164: #{model_forward.1} parent=1 // pred_region
      %3205 = dma.done [#allocation4], 256
    $region165: #{model_forward.1} parent=1 // pred_fallthru
      _
    %3206 = vsyncpa [#allocation3], 1
    %3207 = vsyncpa [#allocation6], 1
    %3208 = vsyncpa [#allocation9], 1
    %3209 = vsyncpa [#allocation12], 1
    %3210 = vsyncpa [#allocation15], 1
    %3211 = vsyncpa [#allocation18], 1
    %3212 = vsyncpa [#allocation4], 1

</llo_original>
